<compile_context>
chip_gen: v6e
topology: v6e:2x2x1
jax: 0.10.0
libtpu: 0.0.40
codegen_flags: <defaults>
</compile_context>

<pallas_src>
import jax
import jax.numpy as jnp
from jax.experimental import pallas as pl
from jax.experimental.pallas import tpu as pltpu


# ----------------------------------------------------------------------------
# Kernels.  Layout inside the kernels is channel-last (H, W, C) so that the
# channel contraction of the convolution maps onto the MXU lane dimension.
# Output blocks are phase-major: o_ref[0, 2*a + b] holds the output pixels at
# parity (row%2==a, col%2==b), i.e. out[2i+a, 2j+b, :].
# ----------------------------------------------------------------------------


def _upsample2x_conv3x3_fused_kernel(x_ref, weff_ref, bias_ref, o_ref, xp_ref):
    # x_ref:    (1, H, W, Cin)
    # weff_ref: (4, 4, Cin, Cout)   effective 2x2 kernels, [phase, tap, ci, co]
    # bias_ref: (1, Cout)
    # o_ref:    (1, 4, H, W, Cout)
    # xp_ref:   (H+2, W+2, Cin)     VMEM scratch, zero-padded input
    _, H, W, Cin = x_ref.shape
    Cout = o_ref.shape[-1]

    @pl.when(pl.program_id(0) == 0)
    def _():
        # Border stays zero for every grid step; only zero it once.
        xp_ref[...] = jnp.zeros(xp_ref.shape, xp_ref.dtype)

    xp_ref[1:H + 1, 1:W + 1, :] = x_ref[0]
    bias = bias_ref[...].astype(jnp.float32)                       # (1, Cout)

    # conv3x3(nearest_up2x(x))[2i+a, 2j+b] == 2x2 conv of x with weff[a, b].
    for a in range(2):
        for b in range(2):
            acc = jnp.zeros((H * W, Cout), jnp.float32)
            for di in range(2):
                for dj in range(2):
                    xs = xp_ref[a + di:a + di + H, b + dj:b + dj + W, :]
                    acc = acc + jnp.dot(
                        xs.reshape(H * W, Cin),
                        weff_ref[2 * a + b, 2 * di + dj],
                        preferred_element_type=jnp.float32)
            acc = acc + bias
            o_ref[0, 2 * a + b, :, :, :] = (
                acc.reshape(H, W, Cout).astype(o_ref.dtype))


def _conv3x3_then_upsample2x_kernel(x_ref, w_ref, bias_ref, o_ref, xp_ref):
    # efficient=True path: conv at low resolution, then nearest 2x upsample.
    # x_ref: (1, H, W, Cin); w_ref: (3, 3, Cin, Cout); bias_ref: (1, Cout)
    # o_ref: (1, 4, H, W, Cout); xp_ref: (H+2, W+2, Cin)
    _, H, W, Cin = x_ref.shape
    Cout = o_ref.shape[-1]

    @pl.when(pl.program_id(0) == 0)
    def _():
        xp_ref[...] = jnp.zeros(xp_ref.shape, xp_ref.dtype)

    xp_ref[1:H + 1, 1:W + 1, :] = x_ref[0]

    acc = jnp.zeros((H * W, Cout), jnp.float32)
    for ky in range(3):
        for kx in range(3):
            xs = xp_ref[ky:ky + H, kx:kx + W, :]
            acc = acc + jnp.dot(xs.reshape(H * W, Cin), w_ref[ky, kx],
                                preferred_element_type=jnp.float32)
    acc = acc + bias_ref[...].astype(jnp.float32)
    y = acc.reshape(H, W, Cout).astype(o_ref.dtype)

    for p in range(4):                       # nearest upsample = copy per phase
        o_ref[0, p, :, :, :] = y


def _upsample2x_kernel(x_ref, o_ref):
    # use_conv=False path: pure nearest 2x upsample.
    x = x_ref[0]                             # (H, W, C)
    for p in range(4):
        o_ref[0, p, :, :, :] = x


# ----------------------------------------------------------------------------
# Wrapper.
# ----------------------------------------------------------------------------


def _make_fused_weights(w_hwio):
    """Effective 2x2 kernels of conv3x3(nearest_up2x(.)) per output parity.

    w_hwio: (3, 3, Cin, Cout).  Returns (4, 4, Cin, Cout) indexed by
    [phase = 2a+b, tap = 2di+dj, ci, co].
    """
    w0, w1, w2 = w_hwio[0], w_hwio[1], w_hwio[2]          # (3, Cin, Cout)
    rows = {0: (w0, w1 + w2), 1: (w0 + w1, w2)}           # row groups per a

    def cols(t, b, dj):                                    # t: (3, Cin, Cout)
        groups = {0: (t[0], t[1] + t[2]), 1: (t[0] + t[1], t[2])}
        return groups[b][dj]                               # (Cin, Cout)

    weff = jnp.stack([
        jnp.stack([
            jnp.stack([
                jnp.stack([cols(rows[a][di], b, dj) for dj in (0, 1)])
                for di in (0, 1)])
            for b in (0, 1)])
        for a in (0, 1)])                                  # (2,2,2,2,Cin,Cout)
    Cin, Cout = w_hwio.shape[2], w_hwio.shape[3]
    return weff.reshape(4, 4, Cin, Cout)


def upsample_forward(x, weight=None, bias=None, *, use_conv, efficient=False,
                     freq_space=False):
    """Pallas implementation of Upsample.forward (freq_space=False path).

    x:      (N, Cin, H, W)  NCHW, like the PyTorch module.
    weight: (Cout, Cin, 3, 3) conv weight (PyTorch OIHW layout), if use_conv.
    bias:   (Cout,) conv bias, if use_conv.
    Returns (N, Cout, 2H, 2W).
    """
    # TODO(synk): freq_space=True needs the Haar transforms from freq_utils.
    assert not freq_space, "freq_space path not implemented"

    N, Cin, H, W = x.shape
    x_nhwc = jnp.transpose(x, (0, 2, 3, 1))   # single pass over the small input

    if use_conv:
        Cout = weight.shape[0]
        assert weight.shape == (Cout, Cin, 3, 3)
        w_hwio = jnp.transpose(weight, (2, 3, 1, 0)).astype(x.dtype)
        bias2d = bias.reshape(1, Cout).astype(x.dtype)
    else:
        Cout = Cin

    out_shape = jax.ShapeDtypeStruct((N, 4, H, W, Cout), x.dtype)
    out_spec = pl.BlockSpec((1, 4, H, W, Cout), lambda n: (n, 0, 0, 0, 0))
    x_spec = pl.BlockSpec((1, H, W, Cin), lambda n: (n, 0, 0, 0))
    cparams = pltpu.CompilerParams(dimension_semantics=("parallel",))

    if not use_conv:
        ph = pl.pallas_call(
            _upsample2x_kernel,
            out_shape=out_shape,
            grid_spec=pltpu.PrefetchScalarGridSpec(
                num_scalar_prefetch=0, grid=(N,),
                in_specs=[x_spec], out_specs=out_spec),
            compiler_params=cparams,
        )(x_nhwc)
    else:
        scratch = [pltpu.VMEM((H + 2, W + 2, Cin), x.dtype)]
        bias_spec = pl.BlockSpec((1, Cout), lambda n: (0, 0))
        if efficient:
            w_spec = pl.BlockSpec((3, 3, Cin, Cout), lambda n: (0, 0, 0, 0))
            ph = pl.pallas_call(
                _conv3x3_then_upsample2x_kernel,
                out_shape=out_shape,
                grid_spec=pltpu.PrefetchScalarGridSpec(
                    num_scalar_prefetch=0, grid=(N,),
                    in_specs=[x_spec, w_spec, bias_spec],
                    out_specs=out_spec, scratch_shapes=scratch),
                compiler_params=cparams,
            )(x_nhwc, w_hwio, bias2d)
        else:
            weff = _make_fused_weights(w_hwio)               # (4, 4, Cin, Cout)
            weff_spec = pl.BlockSpec((4, 4, Cin, Cout),
                                     lambda n: (0, 0, 0, 0))
            ph = pl.pallas_call(
                _upsample2x_conv3x3_fused_kernel,
                out_shape=out_shape,
                grid_spec=pltpu.PrefetchScalarGridSpec(
                    num_scalar_prefetch=0, grid=(N,),
                    in_specs=[x_spec, weff_spec, bias_spec],
                    out_specs=out_spec, scratch_shapes=scratch),
                compiler_params=cparams,
            )(x_nhwc, weff, bias2d)

    # (N,4,H,W,Co) -> (N,2,2,H,W,Co) [free split] -> transpose -> (N,Co,H,2,W,2)
    # -> (N,Co,2H,2W) [free contiguous collapse].  Exactly one HBM transpose
    # pass, which an NHWC->NCHW conversion would have required anyway.
    ph6 = ph.reshape(N, 2, 2, H, W, Cout)
    out = jnp.transpose(ph6, (0, 5, 3, 1, 4, 2)).reshape(N, Cout, 2 * H, 2 * W)
    return out


# ----------------------------------------------------------------------------
# Pure-JAX reference mirroring the PyTorch forward, for validation.
# ----------------------------------------------------------------------------


def _reference_upsample(x, weight, bias, use_conv, efficient):
    def up(t):
        return jnp.repeat(jnp.repeat(t, 2, axis=2), 2, axis=3)

    def conv(t):
        y = jax.lax.conv_general_dilated(
            t, weight, window_strides=(1, 1), padding=((1, 1), (1, 1)),
            dimension_numbers=("NCHW", "OIHW", "NCHW"),
            precision=jax.lax.Precision.HIGHEST)
        return y + bias[None, :, None, None]

    if not efficient:
        x = up(x)
    if use_conv:
        x = conv(x)
    if efficient:
        x = up(x)
    return x


if __name__ == "__main__":
    # Small shapes consistent with the module: N=2, C=4, H=W=16, out_channel=4.
    N, C, H, W = 2, 4, 16, 16
    Cout = C

    key = jax.random.PRNGKey(0)
    kx, kw, kb = jax.random.split(key, 3)
    x = jax.random.normal(kx, (N, C, H, W), dtype=jnp.float32)
    w = 0.1 * jax.random.normal(kw, (Cout, C, 3, 3), dtype=jnp.float32)
    b = 0.1 * jax.random.normal(kb, (Cout,), dtype=jnp.float32)

    configs = [
        dict(use_conv=True, efficient=False),   # default Upsample path
        dict(use_conv=True, efficient=True),    # "efficient" ordering
        dict(use_conv=False, efficient=False),  # plain nearest upsample
    ]
    for cfg in configs:
        out = upsample_forward(x, w if cfg["use_conv"] else None,
                               b if cfg["use_conv"] else None, **cfg)
        out = jax.block_until_ready(out)
        ref = _reference_upsample(x, w, b, cfg["use_conv"], cfg["efficient"])
        assert out.shape == (N, Cout, 2 * H, 2 * W), (out.shape, cfg)
        assert jnp.allclose(out, ref, atol=1e-4, rtol=1e-4), cfg

    print("KERNEL_OK")
</pallas_src>

<mosaic_0001>
module attributes {stable_mosaic.version = 11 : i64} {
  func.func @_upsample2x_conv3x3_fused_kernel(%arg0: i32, %arg1: memref<1x16x16x4xf32, #tpu.memory_space<vmem>>, %arg2: memref<4x4x4x4xf32, #tpu.memory_space<vmem>>, %arg3: memref<1x4xf32, #tpu.memory_space<vmem>>, %arg4: memref<1x4x16x16x4xf32, #tpu.memory_space<vmem>>, %arg5: memref<18x18x4xf32, #tpu.memory_space<vmem>>) attributes {dimension_semantics = [#tpu.dimension_semantics<parallel>], iteration_bounds = array<i64: 2>, scalar_prefetch = 0 : i64, scratch_operands = 1 : i64, tpu.core_type = #tpu.core_type<tc>, window_params = [{transform_indices = @transform_0, window_bounds = array<i64: 1, 16, 16, 4>}, {pipeline_mode = #tpu.pipeline_mode<synchronous>, transform_indices = @transform_1, window_bounds = array<i64: 4, 4, 4, 4>}, {pipeline_mode = #tpu.pipeline_mode<synchronous>, transform_indices = @transform_2, window_bounds = array<i64: 1, 4>}, {transform_indices = @transform_3, window_bounds = array<i64: 1, 4, 16, 16, 4>}]} {
    %c0_i32 = arith.constant 0 : i32
    %0 = arith.cmpi eq, %arg0, %c0_i32 : i32
    %1 = arith.extui %0 : i1 to i32
    %c0_i32_0 = arith.constant 0 : i32
    %2 = arith.cmpi ne, %1, %c0_i32_0 : i32
    scf.if %2 {
      %cst_157 = arith.constant 0.000000e+00 : f32
      %131 = vector.broadcast %cst_157 : f32 to vector<18x18x4xf32>
      %c0_158 = arith.constant 0 : index
      %c0_159 = arith.constant 0 : index
      %c0_160 = arith.constant 0 : index
      %132 = vector.load %arg5[%c0_158, %c0_159, %c0_160] : memref<18x18x4xf32, #tpu.memory_space<vmem>>, vector<18x18x4xf32>
      tpu.vector_store %arg5[%c0_158, %c0_159, %c0_160], %131 {strides = array<i32>} : memref<18x18x4xf32, #tpu.memory_space<vmem>>, vector<18x18x4xf32>,
    } else {
    }
    %c0 = arith.constant 0 : index
    %c0_1 = arith.constant 0 : index
    %c0_2 = arith.constant 0 : index
    %c0_3 = arith.constant 0 : index
    %3 = vector.load %arg1[%c0, %c0_1, %c0_2, %c0_3] : memref<1x16x16x4xf32, #tpu.memory_space<vmem>>, vector<1x16x16x4xf32>
    %4 = vector.shape_cast %3 : vector<1x16x16x4xf32> to vector<16x16x4xf32>
    %c1 = arith.constant 1 : index
    %c1_4 = arith.constant 1 : index
    %c0_5 = arith.constant 0 : index
    %5 = vector.load %arg5[%c1, %c1_4, %c0_5] : memref<18x18x4xf32, #tpu.memory_space<vmem>>, vector<16x16x4xf32>
    tpu.vector_store %arg5[%c1, %c1_4, %c0_5], %4 {strides = array<i32>} : memref<18x18x4xf32, #tpu.memory_space<vmem>>, vector<16x16x4xf32>,
    %c0_6 = arith.constant 0 : index
    %c0_7 = arith.constant 0 : index
    %6 = vector.load %arg3[%c0_6, %c0_7] : memref<1x4xf32, #tpu.memory_space<vmem>>, vector<1x4xf32>
    %cst = arith.constant 0.000000e+00 : f32
    %7 = vector.broadcast %cst : f32 to vector<256x4xf32>
    %c0_8 = arith.constant 0 : index
    %c0_9 = arith.constant 0 : index
    %c0_10 = arith.constant 0 : index
    %8 = vector.load %arg5[%c0_8, %c0_9, %c0_10] : memref<18x18x4xf32, #tpu.memory_space<vmem>>, vector<16x16x4xf32>
    %9 = vector.shape_cast %8 : vector<16x16x4xf32> to vector<256x4xf32>
    %c0_11 = arith.constant 0 : index
    %c0_12 = arith.constant 0 : index
    %c0_13 = arith.constant 0 : index
    %c0_14 = arith.constant 0 : index
    %10 = vector.load %arg2[%c0_11, %c0_12, %c0_13, %c0_14] : memref<4x4x4x4xf32, #tpu.memory_space<vmem>>, vector<1x1x4x4xf32>
    %11 = vector.shape_cast %10 : vector<1x1x4x4xf32> to vector<4x4xf32>
    %cst_15 = arith.constant dense<0.000000e+00> : vector<256x4xf32>
    %12 = tpu.matmul %9, %11, %cst_15 {dimension_numbers = #tpu.dot_dimension_numbers<[1], [0], [0], [1], [0, 0, 1, 1], [], []>} : vector<256x4xf32>, vector<4x4xf32>, vector<256x4xf32> -> vector<256x4xf32>
    %13 = arith.addf %7, %12 : vector<256x4xf32>
    %c0_16 = arith.constant 0 : index
    %c1_17 = arith.constant 1 : index
    %c0_18 = arith.constant 0 : index
    %14 = vector.load %arg5[%c0_16, %c1_17, %c0_18] : memref<18x18x4xf32, #tpu.memory_space<vmem>>, vector<16x16x4xf32>
    %15 = vector.shape_cast %14 : vector<16x16x4xf32> to vector<256x4xf32>
    %c0_19 = arith.constant 0 : index
    %c1_20 = arith.constant 1 : index
    %c0_21 = arith.constant 0 : index
    %c0_22 = arith.constant 0 : index
    %16 = vector.load %arg2[%c0_19, %c1_20, %c0_21, %c0_22] : memref<4x4x4x4xf32, #tpu.memory_space<vmem>>, vector<1x1x4x4xf32>
    %17 = vector.shape_cast %16 : vector<1x1x4x4xf32> to vector<4x4xf32>
    %cst_23 = arith.constant dense<0.000000e+00> : vector<256x4xf32>
    %18 = tpu.matmul %15, %17, %cst_23 {dimension_numbers = #tpu.dot_dimension_numbers<[1], [0], [0], [1], [0, 0, 1, 1], [], []>} : vector<256x4xf32>, vector<4x4xf32>, vector<256x4xf32> -> vector<256x4xf32>
    %19 = arith.addf %13, %18 : vector<256x4xf32>
    %c1_24 = arith.constant 1 : index
    %c0_25 = arith.constant 0 : index
    %c0_26 = arith.constant 0 : index
    %20 = vector.load %arg5[%c1_24, %c0_25, %c0_26] : memref<18x18x4xf32, #tpu.memory_space<vmem>>, vector<16x16x4xf32>
    %21 = vector.shape_cast %20 : vector<16x16x4xf32> to vector<256x4xf32>
    %c0_27 = arith.constant 0 : index
    %c2 = arith.constant 2 : index
    %c0_28 = arith.constant 0 : index
    %c0_29 = arith.constant 0 : index
    %22 = vector.load %arg2[%c0_27, %c2, %c0_28, %c0_29] : memref<4x4x4x4xf32, #tpu.memory_space<vmem>>, vector<1x1x4x4xf32>
    %23 = vector.shape_cast %22 : vector<1x1x4x4xf32> to vector<4x4xf32>
    %cst_30 = arith.constant dense<0.000000e+00> : vector<256x4xf32>
    %24 = tpu.matmul %21, %23, %cst_30 {dimension_numbers = #tpu.dot_dimension_numbers<[1], [0], [0], [1], [0, 0, 1, 1], [], []>} : vector<256x4xf32>, vector<4x4xf32>, vector<256x4xf32> -> vector<256x4xf32>
    %25 = arith.addf %19, %24 : vector<256x4xf32>
    %c1_31 = arith.constant 1 : index
    %c1_32 = arith.constant 1 : index
    %c0_33 = arith.constant 0 : index
    %26 = vector.load %arg5[%c1_31, %c1_32, %c0_33] : memref<18x18x4xf32, #tpu.memory_space<vmem>>, vector<16x16x4xf32>
    %27 = vector.shape_cast %26 : vector<16x16x4xf32> to vector<256x4xf32>
    %c0_34 = arith.constant 0 : index
    %c3 = arith.constant 3 : index
    %c0_35 = arith.constant 0 : index
    %c0_36 = arith.constant 0 : index
    %28 = vector.load %arg2[%c0_34, %c3, %c0_35, %c0_36] : memref<4x4x4x4xf32, #tpu.memory_space<vmem>>, vector<1x1x4x4xf32>
    %29 = vector.shape_cast %28 : vector<1x1x4x4xf32> to vector<4x4xf32>
    %cst_37 = arith.constant dense<0.000000e+00> : vector<256x4xf32>
    %30 = tpu.matmul %27, %29, %cst_37 {dimension_numbers = #tpu.dot_dimension_numbers<[1], [0], [0], [1], [0, 0, 1, 1], [], []>} : vector<256x4xf32>, vector<4x4xf32>, vector<256x4xf32> -> vector<256x4xf32>
    %31 = arith.addf %25, %30 : vector<256x4xf32>
    %32 = vector.broadcast %6 : vector<1x4xf32> to vector<256x4xf32>
    %33 = arith.addf %31, %32 : vector<256x4xf32>
    %34 = vector.shape_cast %33 : vector<256x4xf32> to vector<16x16x4xf32>
    %c0_38 = arith.constant 0 : index
    %c0_39 = arith.constant 0 : index
    %c0_40 = arith.constant 0 : index
    %c0_41 = arith.constant 0 : index
    %c0_42 = arith.constant 0 : index
    %35 = vector.load %arg4[%c0_38, %c0_39, %c0_40, %c0_41, %c0_42] : memref<1x4x16x16x4xf32, #tpu.memory_space<vmem>>, vector<1x1x16x16x4xf32>
    %36 = vector.shape_cast %35 : vector<1x1x16x16x4xf32> to vector<16x16x4xf32>
    %37 = vector.shape_cast %34 : vector<16x16x4xf32> to vector<1x1x16x16x4xf32>
    tpu.vector_store %arg4[%c0_38, %c0_39, %c0_40, %c0_41, %c0_42], %37 {strides = array<i32>} : memref<1x4x16x16x4xf32, #tpu.memory_space<vmem>>, vector<1x1x16x16x4xf32>,
    %cst_43 = arith.constant 0.000000e+00 : f32
    %38 = vector.broadcast %cst_43 : f32 to vector<256x4xf32>
    %c0_44 = arith.constant 0 : index
    %c1_45 = arith.constant 1 : index
    %c0_46 = arith.constant 0 : index
    %39 = vector.load %arg5[%c0_44, %c1_45, %c0_46] : memref<18x18x4xf32, #tpu.memory_space<vmem>>, vector<16x16x4xf32>
    %40 = vector.shape_cast %39 : vector<16x16x4xf32> to vector<256x4xf32>
    %c1_47 = arith.constant 1 : index
    %c0_48 = arith.constant 0 : index
    %c0_49 = arith.constant 0 : index
    %c0_50 = arith.constant 0 : index
    %41 = vector.load %arg2[%c1_47, %c0_48, %c0_49, %c0_50] : memref<4x4x4x4xf32, #tpu.memory_space<vmem>>, vector<1x1x4x4xf32>
    %42 = vector.shape_cast %41 : vector<1x1x4x4xf32> to vector<4x4xf32>
    %cst_51 = arith.constant dense<0.000000e+00> : vector<256x4xf32>
    %43 = tpu.matmul %40, %42, %cst_51 {dimension_numbers = #tpu.dot_dimension_numbers<[1], [0], [0], [1], [0, 0, 1, 1], [], []>} : vector<256x4xf32>, vector<4x4xf32>, vector<256x4xf32> -> vector<256x4xf32>
    %44 = arith.addf %38, %43 : vector<256x4xf32>
    %c0_52 = arith.constant 0 : index
    %c2_53 = arith.constant 2 : index
    %c0_54 = arith.constant 0 : index
    %45 = vector.load %arg5[%c0_52, %c2_53, %c0_54] : memref<18x18x4xf32, #tpu.memory_space<vmem>>, vector<16x16x4xf32>
    %46 = vector.shape_cast %45 : vector<16x16x4xf32> to vector<256x4xf32>
    %c1_55 = arith.constant 1 : index
    %c1_56 = arith.constant 1 : index
    %c0_57 = arith.constant 0 : index
    %c0_58 = arith.constant 0 : index
    %47 = vector.load %arg2[%c1_55, %c1_56, %c0_57, %c0_58] : memref<4x4x4x4xf32, #tpu.memory_space<vmem>>, vector<1x1x4x4xf32>
    %48 = vector.shape_cast %47 : vector<1x1x4x4xf32> to vector<4x4xf32>
    %cst_59 = arith.constant dense<0.000000e+00> : vector<256x4xf32>
    %49 = tpu.matmul %46, %48, %cst_59 {dimension_numbers = #tpu.dot_dimension_numbers<[1], [0], [0], [1], [0, 0, 1, 1], [], []>} : vector<256x4xf32>, vector<4x4xf32>, vector<256x4xf32> -> vector<256x4xf32>
    %50 = arith.addf %44, %49 : vector<256x4xf32>
    %c1_60 = arith.constant 1 : index
    %c1_61 = arith.constant 1 : index
    %c0_62 = arith.constant 0 : index
    %51 = vector.load %arg5[%c1_60, %c1_61, %c0_62] : memref<18x18x4xf32, #tpu.memory_space<vmem>>, vector<16x16x4xf32>
    %52 = vector.shape_cast %51 : vector<16x16x4xf32> to vector<256x4xf32>
    %c1_63 = arith.constant 1 : index
    %c2_64 = arith.constant 2 : index
    %c0_65 = arith.constant 0 : index
    %c0_66 = arith.constant 0 : index
    %53 = vector.load %arg2[%c1_63, %c2_64, %c0_65, %c0_66] : memref<4x4x4x4xf32, #tpu.memory_space<vmem>>, vector<1x1x4x4xf32>
    %54 = vector.shape_cast %53 : vector<1x1x4x4xf32> to vector<4x4xf32>
    %cst_67 = arith.constant dense<0.000000e+00> : vector<256x4xf32>
    %55 = tpu.matmul %52, %54, %cst_67 {dimension_numbers = #tpu.dot_dimension_numbers<[1], [0], [0], [1], [0, 0, 1, 1], [], []>} : vector<256x4xf32>, vector<4x4xf32>, vector<256x4xf32> -> vector<256x4xf32>
    %56 = arith.addf %50, %55 : vector<256x4xf32>
    %c1_68 = arith.constant 1 : index
    %c2_69 = arith.constant 2 : index
    %c0_70 = arith.constant 0 : index
    %57 = vector.load %arg5[%c1_68, %c2_69, %c0_70] : memref<18x18x4xf32, #tpu.memory_space<vmem>>, vector<16x16x4xf32>
    %58 = vector.shape_cast %57 : vector<16x16x4xf32> to vector<256x4xf32>
    %c1_71 = arith.constant 1 : index
    %c3_72 = arith.constant 3 : index
    %c0_73 = arith.constant 0 : index
    %c0_74 = arith.constant 0 : index
    %59 = vector.load %arg2[%c1_71, %c3_72, %c0_73, %c0_74] : memref<4x4x4x4xf32, #tpu.memory_space<vmem>>, vector<1x1x4x4xf32>
    %60 = vector.shape_cast %59 : vector<1x1x4x4xf32> to vector<4x4xf32>
    %cst_75 = arith.constant dense<0.000000e+00> : vector<256x4xf32>
    %61 = tpu.matmul %58, %60, %cst_75 {dimension_numbers = #tpu.dot_dimension_numbers<[1], [0], [0], [1], [0, 0, 1, 1], [], []>} : vector<256x4xf32>, vector<4x4xf32>, vector<256x4xf32> -> vector<256x4xf32>
    %62 = arith.addf %56, %61 : vector<256x4xf32>
    %63 = vector.broadcast %6 : vector<1x4xf32> to vector<256x4xf32>
    %64 = arith.addf %62, %63 : vector<256x4xf32>
    %65 = vector.shape_cast %64 : vector<256x4xf32> to vector<16x16x4xf32>
    %c0_76 = arith.constant 0 : index
    %c1_77 = arith.constant 1 : index
    %c0_78 = arith.constant 0 : index
    %c0_79 = arith.constant 0 : index
    %c0_80 = arith.constant 0 : index
    %66 = vector.load %arg4[%c0_76, %c1_77, %c0_78, %c0_79, %c0_80] : memref<1x4x16x16x4xf32, #tpu.memory_space<vmem>>, vector<1x1x16x16x4xf32>
    %67 = vector.shape_cast %66 : vector<1x1x16x16x4xf32> to vector<16x16x4xf32>
    %68 = vector.shape_cast %65 : vector<16x16x4xf32> to vector<1x1x16x16x4xf32>
    tpu.vector_store %arg4[%c0_76, %c1_77, %c0_78, %c0_79, %c0_80], %68 {strides = array<i32>} : memref<1x4x16x16x4xf32, #tpu.memory_space<vmem>>, vector<1x1x16x16x4xf32>,
    %cst_81 = arith.constant 0.000000e+00 : f32
    %69 = vector.broadcast %cst_81 : f32 to vector<256x4xf32>
    %c1_82 = arith.constant 1 : index
    %c0_83 = arith.constant 0 : index
    %c0_84 = arith.constant 0 : index
    %70 = vector.load %arg5[%c1_82, %c0_83, %c0_84] : memref<18x18x4xf32, #tpu.memory_space<vmem>>, vector<16x16x4xf32>
    %71 = vector.shape_cast %70 : vector<16x16x4xf32> to vector<256x4xf32>
    %c2_85 = arith.constant 2 : index
    %c0_86 = arith.constant 0 : index
    %c0_87 = arith.constant 0 : index
    %c0_88 = arith.constant 0 : index
    %72 = vector.load %arg2[%c2_85, %c0_86, %c0_87, %c0_88] : memref<4x4x4x4xf32, #tpu.memory_space<vmem>>, vector<1x1x4x4xf32>
    %73 = vector.shape_cast %72 : vector<1x1x4x4xf32> to vector<4x4xf32>
    %cst_89 = arith.constant dense<0.000000e+00> : vector<256x4xf32>
    %74 = tpu.matmul %71, %73, %cst_89 {dimension_numbers = #tpu.dot_dimension_numbers<[1], [0], [0], [1], [0, 0, 1, 1], [], []>} : vector<256x4xf32>, vector<4x4xf32>, vector<256x4xf32> -> vector<256x4xf32>
    %75 = arith.addf %69, %74 : vector<256x4xf32>
    %c1_90 = arith.constant 1 : index
    %c1_91 = arith.constant 1 : index
    %c0_92 = arith.constant 0 : index
    %76 = vector.load %arg5[%c1_90, %c1_91, %c0_92] : memref<18x18x4xf32, #tpu.memory_space<vmem>>, vector<16x16x4xf32>
    %77 = vector.shape_cast %76 : vector<16x16x4xf32> to vector<256x4xf32>
    %c2_93 = arith.constant 2 : index
    %c1_94 = arith.constant 1 : index
    %c0_95 = arith.constant 0 : index
    %c0_96 = arith.constant 0 : index
    %78 = vector.load %arg2[%c2_93, %c1_94, %c0_95, %c0_96] : memref<4x4x4x4xf32, #tpu.memory_space<vmem>>, vector<1x1x4x4xf32>
    %79 = vector.shape_cast %78 : vector<1x1x4x4xf32> to vector<4x4xf32>
    %cst_97 = arith.constant dense<0.000000e+00> : vector<256x4xf32>
    %80 = tpu.matmul %77, %79, %cst_97 {dimension_numbers = #tpu.dot_dimension_numbers<[1], [0], [0], [1], [0, 0, 1, 1], [], []>} : vector<256x4xf32>, vector<4x4xf32>, vector<256x4xf32> -> vector<256x4xf32>
    %81 = arith.addf %75, %80 : vector<256x4xf32>
    %c2_98 = arith.constant 2 : index
    %c0_99 = arith.constant 0 : index
    %c0_100 = arith.constant 0 : index
    %82 = vector.load %arg5[%c2_98, %c0_99, %c0_100] : memref<18x18x4xf32, #tpu.memory_space<vmem>>, vector<16x16x4xf32>
    %83 = vector.shape_cast %82 : vector<16x16x4xf32> to vector<256x4xf32>
    %c2_101 = arith.constant 2 : index
    %c2_102 = arith.constant 2 : index
    %c0_103 = arith.constant 0 : index
    %c0_104 = arith.constant 0 : index
    %84 = vector.load %arg2[%c2_101, %c2_102, %c0_103, %c0_104] : memref<4x4x4x4xf32, #tpu.memory_space<vmem>>, vector<1x1x4x4xf32>
    %85 = vector.shape_cast %84 : vector<1x1x4x4xf32> to vector<4x4xf32>
    %cst_105 = arith.constant dense<0.000000e+00> : vector<256x4xf32>
    %86 = tpu.matmul %83, %85, %cst_105 {dimension_numbers = #tpu.dot_dimension_numbers<[1], [0], [0], [1], [0, 0, 1, 1], [], []>} : vector<256x4xf32>, vector<4x4xf32>, vector<256x4xf32> -> vector<256x4xf32>
    %87 = arith.addf %81, %86 : vector<256x4xf32>
    %c2_106 = arith.constant 2 : index
    %c1_107 = arith.constant 1 : index
    %c0_108 = arith.constant 0 : index
    %88 = vector.load %arg5[%c2_106, %c1_107, %c0_108] : memref<18x18x4xf32, #tpu.memory_space<vmem>>, vector<16x16x4xf32>
    %89 = vector.shape_cast %88 : vector<16x16x4xf32> to vector<256x4xf32>
    %c2_109 = arith.constant 2 : index
    %c3_110 = arith.constant 3 : index
    %c0_111 = arith.constant 0 : index
    %c0_112 = arith.constant 0 : index
    %90 = vector.load %arg2[%c2_109, %c3_110, %c0_111, %c0_112] : memref<4x4x4x4xf32, #tpu.memory_space<vmem>>, vector<1x1x4x4xf32>
    %91 = vector.shape_cast %90 : vector<1x1x4x4xf32> to vector<4x4xf32>
    %cst_113 = arith.constant dense<0.000000e+00> : vector<256x4xf32>
    %92 = tpu.matmul %89, %91, %cst_113 {dimension_numbers = #tpu.dot_dimension_numbers<[1], [0], [0], [1], [0, 0, 1, 1], [], []>} : vector<256x4xf32>, vector<4x4xf32>, vector<256x4xf32> -> vector<256x4xf32>
    %93 = arith.addf %87, %92 : vector<256x4xf32>
    %94 = vector.broadcast %6 : vector<1x4xf32> to vector<256x4xf32>
    %95 = arith.addf %93, %94 : vector<256x4xf32>
    %96 = vector.shape_cast %95 : vector<256x4xf32> to vector<16x16x4xf32>
    %c0_114 = arith.constant 0 : index
    %c2_115 = arith.constant 2 : index
    %c0_116 = arith.constant 0 : index
    %c0_117 = arith.constant 0 : index
    %c0_118 = arith.constant 0 : index
    %97 = vector.load %arg4[%c0_114, %c2_115, %c0_116, %c0_117, %c0_118] : memref<1x4x16x16x4xf32, #tpu.memory_space<vmem>>, vector<1x1x16x16x4xf32>
    %98 = vector.shape_cast %97 : vector<1x1x16x16x4xf32> to vector<16x16x4xf32>
    %99 = vector.shape_cast %96 : vector<16x16x4xf32> to vector<1x1x16x16x4xf32>
    tpu.vector_store %arg4[%c0_114, %c2_115, %c0_116, %c0_117, %c0_118], %99 {strides = array<i32>} : memref<1x4x16x16x4xf32, #tpu.memory_space<vmem>>, vector<1x1x16x16x4xf32>,
    %cst_119 = arith.constant 0.000000e+00 : f32
    %100 = vector.broadcast %cst_119 : f32 to vector<256x4xf32>
    %c1_120 = arith.constant 1 : index
    %c1_121 = arith.constant 1 : index
    %c0_122 = arith.constant 0 : index
    %101 = vector.load %arg5[%c1_120, %c1_121, %c0_122] : memref<18x18x4xf32, #tpu.memory_space<vmem>>, vector<16x16x4xf32>
    %102 = vector.shape_cast %101 : vector<16x16x4xf32> to vector<256x4xf32>
    %c3_123 = arith.constant 3 : index
    %c0_124 = arith.constant 0 : index
    %c0_125 = arith.constant 0 : index
    %c0_126 = arith.constant 0 : index
    %103 = vector.load %arg2[%c3_123, %c0_124, %c0_125, %c0_126] : memref<4x4x4x4xf32, #tpu.memory_space<vmem>>, vector<1x1x4x4xf32>
    %104 = vector.shape_cast %103 : vector<1x1x4x4xf32> to vector<4x4xf32>
    %cst_127 = arith.constant dense<0.000000e+00> : vector<256x4xf32>
    %105 = tpu.matmul %102, %104, %cst_127 {dimension_numbers = #tpu.dot_dimension_numbers<[1], [0], [0], [1], [0, 0, 1, 1], [], []>} : vector<256x4xf32>, vector<4x4xf32>, vector<256x4xf32> -> vector<256x4xf32>
    %106 = arith.addf %100, %105 : vector<256x4xf32>
    %c1_128 = arith.constant 1 : index
    %c2_129 = arith.constant 2 : index
    %c0_130 = arith.constant 0 : index
    %107 = vector.load %arg5[%c1_128, %c2_129, %c0_130] : memref<18x18x4xf32, #tpu.memory_space<vmem>>, vector<16x16x4xf32>
    %108 = vector.shape_cast %107 : vector<16x16x4xf32> to vector<256x4xf32>
    %c3_131 = arith.constant 3 : index
    %c1_132 = arith.constant 1 : index
    %c0_133 = arith.constant 0 : index
    %c0_134 = arith.constant 0 : index
    %109 = vector.load %arg2[%c3_131, %c1_132, %c0_133, %c0_134] : memref<4x4x4x4xf32, #tpu.memory_space<vmem>>, vector<1x1x4x4xf32>
    %110 = vector.shape_cast %109 : vector<1x1x4x4xf32> to vector<4x4xf32>
    %cst_135 = arith.constant dense<0.000000e+00> : vector<256x4xf32>
    %111 = tpu.matmul %108, %110, %cst_135 {dimension_numbers = #tpu.dot_dimension_numbers<[1], [0], [0], [1], [0, 0, 1, 1], [], []>} : vector<256x4xf32>, vector<4x4xf32>, vector<256x4xf32> -> vector<256x4xf32>
    %112 = arith.addf %106, %111 : vector<256x4xf32>
    %c2_136 = arith.constant 2 : index
    %c1_137 = arith.constant 1 : index
    %c0_138 = arith.constant 0 : index
    %113 = vector.load %arg5[%c2_136, %c1_137, %c0_138] : memref<18x18x4xf32, #tpu.memory_space<vmem>>, vector<16x16x4xf32>
    %114 = vector.shape_cast %113 : vector<16x16x4xf32> to vector<256x4xf32>
    %c3_139 = arith.constant 3 : index
    %c2_140 = arith.constant 2 : index
    %c0_141 = arith.constant 0 : index
    %c0_142 = arith.constant 0 : index
    %115 = vector.load %arg2[%c3_139, %c2_140, %c0_141, %c0_142] : memref<4x4x4x4xf32, #tpu.memory_space<vmem>>, vector<1x1x4x4xf32>
    %116 = vector.shape_cast %115 : vector<1x1x4x4xf32> to vector<4x4xf32>
    %cst_143 = arith.constant dense<0.000000e+00> : vector<256x4xf32>
    %117 = tpu.matmul %114, %116, %cst_143 {dimension_numbers = #tpu.dot_dimension_numbers<[1], [0], [0], [1], [0, 0, 1, 1], [], []>} : vector<256x4xf32>, vector<4x4xf32>, vector<256x4xf32> -> vector<256x4xf32>
    %118 = arith.addf %112, %117 : vector<256x4xf32>
    %c2_144 = arith.constant 2 : index
    %c2_145 = arith.constant 2 : index
    %c0_146 = arith.constant 0 : index
    %119 = vector.load %arg5[%c2_144, %c2_145, %c0_146] : memref<18x18x4xf32, #tpu.memory_space<vmem>>, vector<16x16x4xf32>
    %120 = vector.shape_cast %119 : vector<16x16x4xf32> to vector<256x4xf32>
    %c3_147 = arith.constant 3 : index
    %c3_148 = arith.constant 3 : index
    %c0_149 = arith.constant 0 : index
    %c0_150 = arith.constant 0 : index
    %121 = vector.load %arg2[%c3_147, %c3_148, %c0_149, %c0_150] : memref<4x4x4x4xf32, #tpu.memory_space<vmem>>, vector<1x1x4x4xf32>
    %122 = vector.shape_cast %121 : vector<1x1x4x4xf32> to vector<4x4xf32>
    %cst_151 = arith.constant dense<0.000000e+00> : vector<256x4xf32>
    %123 = tpu.matmul %120, %122, %cst_151 {dimension_numbers = #tpu.dot_dimension_numbers<[1], [0], [0], [1], [0, 0, 1, 1], [], []>} : vector<256x4xf32>, vector<4x4xf32>, vector<256x4xf32> -> vector<256x4xf32>
    %124 = arith.addf %118, %123 : vector<256x4xf32>
    %125 = vector.broadcast %6 : vector<1x4xf32> to vector<256x4xf32>
    %126 = arith.addf %124, %125 : vector<256x4xf32>
    %127 = vector.shape_cast %126 : vector<256x4xf32> to vector<16x16x4xf32>
    %c0_152 = arith.constant 0 : index
    %c3_153 = arith.constant 3 : index
    %c0_154 = arith.constant 0 : index
    %c0_155 = arith.constant 0 : index
    %c0_156 = arith.constant 0 : index
    %128 = vector.load %arg4[%c0_152, %c3_153, %c0_154, %c0_155, %c0_156] : memref<1x4x16x16x4xf32, #tpu.memory_space<vmem>>, vector<1x1x16x16x4xf32>
    %129 = vector.shape_cast %128 : vector<1x1x16x16x4xf32> to vector<16x16x4xf32>
    %130 = vector.shape_cast %127 : vector<16x16x4xf32> to vector<1x1x16x16x4xf32>
    tpu.vector_store %arg4[%c0_152, %c3_153, %c0_154, %c0_155, %c0_156], %130 {strides = array<i32>} : memref<1x4x16x16x4xf32, #tpu.memory_space<vmem>>, vector<1x1x16x16x4xf32>,
    return
  }
  func.func @transform_0(%arg0: i32) -> (i32, i32, i32, i32) {
    %c0_i32 = arith.constant 0 : i32
    %c0_i32_0 = arith.constant 0 : i32
    %c0_i32_1 = arith.constant 0 : i32
    %c0_i32_2 = arith.constant 0 : i32
    return %arg0, %c0_i32, %c0_i32_0, %c0_i32_1 : i32, i32, i32, i32
  }
  func.func @transform_1(%arg0: i32) -> (i32, i32, i32, i32) {
    %c0_i32 = arith.constant 0 : i32
    %c0_i32_0 = arith.constant 0 : i32
    %c0_i32_1 = arith.constant 0 : i32
    %c0_i32_2 = arith.constant 0 : i32
    %c0_i32_3 = arith.constant 0 : i32
    return %c0_i32, %c0_i32_0, %c0_i32_1, %c0_i32_2 : i32, i32, i32, i32
  }
  func.func @transform_2(%arg0: i32) -> (i32, i32) {
    %c0_i32 = arith.constant 0 : i32
    %c0_i32_0 = arith.constant 0 : i32
    %c0_i32_1 = arith.constant 0 : i32
    return %c0_i32, %c0_i32_0 : i32, i32
  }
  func.func @transform_3(%arg0: i32) -> (i32, i32, i32, i32, i32) {
    %c0_i32 = arith.constant 0 : i32
    %c0_i32_0 = arith.constant 0 : i32
    %c0_i32_1 = arith.constant 0 : i32
    %c0_i32_2 = arith.constant 0 : i32
    %c0_i32_3 = arith.constant 0 : i32
    return %arg0, %c0_i32, %c0_i32_0, %c0_i32_1, %c0_i32_2 : i32, i32, i32, i32, i32
  }
}

</mosaic_0001>

<llo_original>
// kernel: tpu_custom_call.1
$region0: #{tpu_custom_call.1}
  #allocation0 [shape = 'u32[]', space=smem, size = 0x4, offset = 0x4, fixed_abs, tag = 'smem constant byte address 0x4 - core index']
  #allocation1 [shape = 'u32[144,128]{1,0:T(1,128)}', space=vmem, size = 0x12000, scoped, tag = 'internal scratch']
  #allocation2 [shape = 'f32[18,18,4]{2,1,0:T(8,128)}', space=vmem, size = 0x36000, scoped, tag = 'scratch operand']
  %s0 = inlined_call_operand.vmem [shape: f32[2,16,16,4], index: 0, kind: input, shape index: {}]
  %s1 = inlined_call_operand.vmem [shape: f32[4,4,4,4], index: 1, kind: input, shape index: {}]
  %s2 = inlined_call_operand.vmem [shape: f32[1,4], index: 2, kind: input, shape index: {}]
  %s3 = inlined_call_operand.vmem [shape: f32[2,4,16,16,4], index: 3, kind: output, shape index: {}]
  %s4 = sld [smem:[#allocation0]]
  $region49: #{tpu_custom_call.1} parent=0
    _
  %s6 = ssub.s32 1, %s4
  %s7 = scalar_select 0, %s6, %s4
  loop: start=0, step=1, limit=4
  $region2: #{tpu_custom_call.1} parent=0 // loop_pre_header
    _
  $region3: #{tpu_custom_call.1} parent=0 // loop_header
    %s9 = sphi 0, %s13
    %p10 = scmp.ge.s32.totalorder %s9, 4
    %s19 = sphi 0, %s21
    %s22 = sphi 0, %s19
    %s23 = sphi 0, %s22
    %s39 = sphi 0, %s23
    %s43 = sphi 0, %s43
    %s45 = sphi 0, %s43
    %s46 = sphi 0, %s45
    %s60 = sphi 0, %s46
    %s64 = sphi 0, %s64
    %s66 = sphi 0, %s64
    %s67 = sphi 0, %s66
    %s81 = sphi 0, %s67
    %s87 = sphi 0, %s89
    %s90 = sphi 0, %s87
    %s91 = sphi 0, %s90
    %s107 = sphi 0, %s91
  $region4: #{tpu_custom_call.1} parent=0 // loop_header_branch
    %12 = sbr.rel (%p10) target = $region8
  $region5: #{tpu_custom_call.1} parent=0 // loop_body
    %s14 = ssub.s32 %s9, 1
    %s15 = ssub.s32 %s9, 2
    %s16 = sadd.s32 %s9, 1
    %s17 = ssub.s32 %s9, %s16
    %p18 = scmp.eq.s32.totalorder %s17, 0
    %s20 = sadd.s32 %s19, 1
    %s21 = scalar_select %p18, %s19, %s20
    %p24 = pneg %p18
    %p25 = scmp.eq.s32.totalorder %s9, 1
    %p26 = por %p24, %p25
    %p27 = scmp.ne.s32.totalorder %s19, %s22
    %p28 = scmp.eq.s32.totalorder %s9, 0
    %p29 = por %p27, %p28
    %p30 = scmp.ne.s32.totalorder %s19, %s22
    %p31 = scmp.eq.s32.totalorder %s14, 1
    %p32 = por %p30, %p31
    %p33 = scmp.ne.s32.totalorder %s22, %s23
    %p34 = scmp.eq.s32.totalorder %s14, 0
    %p35 = por %p33, %p34
    %p36 = scmp.ne.s32.totalorder %s22, %s23
    %p37 = scmp.eq.s32.totalorder %s15, 1
    %p38 = por %p36, %p37
    %p40 = scmp.ne.s32.totalorder %s23, %s39
    %p41 = scmp.eq.s32.totalorder %s15, 0
    %p42 = por %p40, %p41
    %s44 = sadd.s32 %s43, 1
    %p47 = scmp.eq.s32.totalorder %s9, 1
    %p48 = scmp.ne.s32.totalorder %s43, %s45
    %p49 = scmp.eq.s32.totalorder %s9, 0
    %p50 = por %p48, %p49
    %p51 = scmp.ne.s32.totalorder %s43, %s45
    %p52 = scmp.eq.s32.totalorder %s14, 1
    %p53 = por %p51, %p52
    %p54 = scmp.ne.s32.totalorder %s45, %s46
    %p55 = scmp.eq.s32.totalorder %s14, 0
    %p56 = por %p54, %p55
    %p57 = scmp.ne.s32.totalorder %s45, %s46
    %p58 = scmp.eq.s32.totalorder %s15, 1
    %p59 = por %p57, %p58
    %p61 = scmp.ne.s32.totalorder %s46, %s60
    %p62 = scmp.eq.s32.totalorder %s15, 0
    %p63 = por %p61, %p62
    %s65 = sadd.s32 %s64, 1
    %p68 = scmp.eq.s32.totalorder %s9, 1
    %p69 = scmp.ne.s32.totalorder %s64, %s66
    %p70 = scmp.eq.s32.totalorder %s9, 0
    %p71 = por %p69, %p70
    %p72 = scmp.ne.s32.totalorder %s64, %s66
    %p73 = scmp.eq.s32.totalorder %s14, 1
    %p74 = por %p72, %p73
    %p75 = scmp.ne.s32.totalorder %s66, %s67
    %p76 = scmp.eq.s32.totalorder %s14, 0
    %p77 = por %p75, %p76
    %p78 = scmp.ne.s32.totalorder %s66, %s67
    %p79 = scmp.eq.s32.totalorder %s15, 1
    %p80 = por %p78, %p79
    %p82 = scmp.ne.s32.totalorder %s67, %s81
    %p83 = scmp.eq.s32.totalorder %s15, 0
    %p84 = por %p82, %p83
    %s85 = ssub.s32 %s9, %s16
    %p86 = scmp.eq.s32.totalorder %s85, 0
    %s88 = sadd.s32 %s87, 1
    %s89 = scalar_select %p86, %s87, %s88
    %p92 = pneg %p86
    %p93 = scmp.eq.s32.totalorder %s9, 1
    %p94 = por %p92, %p93
    %p95 = scmp.ne.s32.totalorder %s87, %s90
    %p96 = scmp.eq.s32.totalorder %s9, 0
    %p97 = por %p95, %p96
    %p98 = scmp.ne.s32.totalorder %s87, %s90
    %p99 = scmp.eq.s32.totalorder %s14, 1
    %p100 = por %p98, %p99
    %p101 = scmp.ne.s32.totalorder %s90, %s91
    %p102 = scmp.eq.s32.totalorder %s14, 0
    %p103 = por %p101, %p102
    %p104 = scmp.ne.s32.totalorder %s90, %s91
    %p105 = scmp.eq.s32.totalorder %s15, 1
    %p106 = por %p104, %p105
    %p108 = scmp.ne.s32.totalorder %s91, %s107
    %p109 = scmp.eq.s32.totalorder %s15, 0
    %p110 = por %p108, %p109
    %p111 = scmp.le.s32.totalorder 1, %s9
    %p112 = scmp.lt.s32.totalorder %s9, 3
    %p113 = pnand %p111, %p112
    %p114 = pneg %p113
    // Predicated region
    $region9: #{tpu_custom_call.1} parent=5 // pred_check
      _
    $region10: #{tpu_custom_call.1} parent=5 // pred_check_branch
      %116 = sbr.rel (%p113) target = $region12
    $region11: #{tpu_custom_call.1} parent=5 // pred_region
      %s117 = ssub.s32 %s9, 1
      // Predicated region
      $region13: #{tpu_custom_call.1} parent=11 // pred_check
        %p118 = pneg %p56
      $region14: #{tpu_custom_call.1} parent=11 // pred_check_branch
        %120 = sbr.rel (%p118) target = $region16
      $region15: #{tpu_custom_call.1} parent=11 // pred_region
        _
      $region16: #{tpu_custom_call.1} parent=11 // pred_fallthru
        _
      // Predicated region
      $region17: #{tpu_custom_call.1} parent=11 // pred_check
        %p121 = pneg %p77
      $region18: #{tpu_custom_call.1} parent=11 // pred_check_branch
        %123 = sbr.rel (%p121) target = $region20
      $region19: #{tpu_custom_call.1} parent=11 // pred_region
        _
      $region20: #{tpu_custom_call.1} parent=11 // pred_fallthru
        _
    $region12: #{tpu_custom_call.1} parent=5 // pred_fallthru
      _
    %p124 = scmp.lt.s32.totalorder %s9, 2
    // Predicated region
    $region21: #{tpu_custom_call.1} parent=5 // pred_check
      %p125 = pneg %p124
    $region22: #{tpu_custom_call.1} parent=5 // pred_check_branch
      %127 = sbr.rel (%p125) target = $region24
    $region23: #{tpu_custom_call.1} parent=5 // pred_region
      // Predicated region
      $region25: #{tpu_custom_call.1} parent=23 // pred_check
        %p128 = pneg %p29
      $region26: #{tpu_custom_call.1} parent=23 // pred_check_branch
        %130 = sbr.rel (%p128) target = $region28
      $region27: #{tpu_custom_call.1} parent=23 // pred_region
        %p131 = scmp.lt.s32.totalorder %s9, 1
        %s132 = scalar_select %p131, %s9, 1
        %s133 = smul.addr %s132, 32
        %s134 = smul.addr %s133, 8
        %s135 = scalar_lea.vmem %s0, %s134
      $region28: #{tpu_custom_call.1} parent=23 // pred_fallthru
        _
    $region24: #{tpu_custom_call.1} parent=5 // pred_fallthru
      _
    %p136 = scmp.le.s32.totalorder 1, %s9
    %p137 = scmp.lt.s32.totalorder %s9, 3
    %p138 = pnand %p136, %p137
    %p139 = pneg %p138
    // Predicated region
    $region29: #{tpu_custom_call.1} parent=5 // pred_check
      _
    $region30: #{tpu_custom_call.1} parent=5 // pred_check_branch
      %141 = sbr.rel (%p138) target = $region32
    $region31: #{tpu_custom_call.1} parent=5 // pred_region
      %s142 = ssub.s32 %s9, 1
      %p143 = scmp.lt.s32.totalorder %s14, 1
      %s144 = scalar_select %p143, %s14, 1
      %s145 = smul.addr %s144, 32
      %s146 = smul.addr %s145, 8
      %s147 = scalar_lea.vmem %s0, %s146
      %p148 = pneg %p35
      %p149 = pneg %p32
      %p150 = pneg %p56
      %p151 = pneg %p53
      %p152 = pneg %p77
      %p153 = pneg %p74
      %p154 = pneg %p103
      %p155 = pneg %p100
      %p156 = scmp.lt.s32.totalorder %s14, 1
      %s157 = scalar_select %p156, %s14, 1
      %s158 = smul.addr %s157, 128
      %s159 = smul.addr %s158, 8
      %s160 = scalar_lea.vmem %s3, %s159
      %p161 = scmp.lt.s32.totalorder %s14, 1
      %s162 = scalar_select %p161, %s14, 1
      %s163 = smul.addr %s162, 32
      %s164 = smul.addr %s163, 8
      %s165 = scalar_lea.vmem %s0, %s164
      %p166 = scmp.lt.s32.totalorder %s14, 1
      %s167 = scalar_select %p166, %s14, 1
      %s168 = smul.addr %s167, 128
      %s169 = smul.addr %s168, 8
      %s170 = scalar_lea.vmem %s3, %s169
      %p171 = scmp.eq.s32.totalorder %s14, 0
      // Predicated region
      $region33: #{tpu_custom_call.1} parent=31 // pred_check
        %p172 = pneg %p171
      $region34: #{tpu_custom_call.1} parent=31 // pred_check_branch
        %174 = sbr.rel (%p172) target = $region36
      $region35: #{tpu_custom_call.1} parent=31 // pred_region
        %vm175 = vcmask 31744
        %176 = vst.msk [vmem:[#allocation2] sm:$0xff] %vm175, 0.0
        %177 = vst.msk [vmem:[#allocation2 + $0x8] sm:$0xff] %vm175, 0.0
        %vm178 = vcmask 25600
        %179 = vst.msk [vmem:[#allocation2 + $0x10] sm:$0x3] %vm178, 0.0
        %180 = vst.msk [vmem:[#allocation2 + $0x18] sm:$0xff] %vm175, 0.0
        %181 = vst.msk [vmem:[#allocation2 + $0x20] sm:$0xff] %vm175, 0.0
        %182 = vst.msk [vmem:[#allocation2 + $0x28] sm:$0x3] %vm178, 0.0
        %183 = vst.msk [vmem:[#allocation2 + $0x30] sm:$0xff] %vm175, 0.0
        %184 = vst.msk [vmem:[#allocation2 + $0x38] sm:$0xff] %vm175, 0.0
        %185 = vst.msk [vmem:[#allocation2 + $0x40] sm:$0x3] %vm178, 0.0
        %186 = vst.msk [vmem:[#allocation2 + $0x48] sm:$0xff] %vm175, 0.0
        %187 = vst.msk [vmem:[#allocation2 + $0x50] sm:$0xff] %vm175, 0.0
        %188 = vst.msk [vmem:[#allocation2 + $0x58] sm:$0x3] %vm178, 0.0
        %189 = vst.msk [vmem:[#allocation2 + $0x60] sm:$0xff] %vm175, 0.0
        %190 = vst.msk [vmem:[#allocation2 + $0x68] sm:$0xff] %vm175, 0.0
        %191 = vst.msk [vmem:[#allocation2 + $0x70] sm:$0x3] %vm178, 0.0
        %192 = vst.msk [vmem:[#allocation2 + $0x78] sm:$0xff] %vm175, 0.0
        %193 = vst.msk [vmem:[#allocation2 + $0x80] sm:$0xff] %vm175, 0.0
        %194 = vst.msk [vmem:[#allocation2 + $0x88] sm:$0x3] %vm178, 0.0
        %195 = vst.msk [vmem:[#allocation2 + $0x90] sm:$0xff] %vm175, 0.0
        %196 = vst.msk [vmem:[#allocation2 + $0x98] sm:$0xff] %vm175, 0.0
        %197 = vst.msk [vmem:[#allocation2 + $0xa0] sm:$0x3] %vm178, 0.0
        %198 = vst.msk [vmem:[#allocation2 + $0xa8] sm:$0xff] %vm175, 0.0
        %199 = vst.msk [vmem:[#allocation2 + $0xb0] sm:$0xff] %vm175, 0.0
        %200 = vst.msk [vmem:[#allocation2 + $0xb8] sm:$0x3] %vm178, 0.0
        %201 = vst.msk [vmem:[#allocation2 + $0xc0] sm:$0xff] %vm175, 0.0
        %202 = vst.msk [vmem:[#allocation2 + $0xc8] sm:$0xff] %vm175, 0.0
        %203 = vst.msk [vmem:[#allocation2 + $0xd0] sm:$0x3] %vm178, 0.0
        %204 = vst.msk [vmem:[#allocation2 + $0xd8] sm:$0xff] %vm175, 0.0
        %205 = vst.msk [vmem:[#allocation2 + $0xe0] sm:$0xff] %vm175, 0.0
        %206 = vst.msk [vmem:[#allocation2 + $0xe8] sm:$0x3] %vm178, 0.0
        %207 = vst.msk [vmem:[#allocation2 + $0xf0] sm:$0xff] %vm175, 0.0
        %208 = vst.msk [vmem:[#allocation2 + $0xf8] sm:$0xff] %vm175, 0.0
        %209 = vst.msk [vmem:[#allocation2 + $0x100] sm:$0x3] %vm178, 0.0
        %210 = vst.msk [vmem:[#allocation2 + $0x108] sm:$0xff] %vm175, 0.0
        %211 = vst.msk [vmem:[#allocation2 + $0x110] sm:$0xff] %vm175, 0.0
        %212 = vst.msk [vmem:[#allocation2 + $0x118] sm:$0x3] %vm178, 0.0
        %213 = vst.msk [vmem:[#allocation2 + $0x120] sm:$0xff] %vm175, 0.0
        %214 = vst.msk [vmem:[#allocation2 + $0x128] sm:$0xff] %vm175, 0.0
        %215 = vst.msk [vmem:[#allocation2 + $0x130] sm:$0x3] %vm178, 0.0
        %216 = vst.msk [vmem:[#allocation2 + $0x138] sm:$0xff] %vm175, 0.0
        %217 = vst.msk [vmem:[#allocation2 + $0x140] sm:$0xff] %vm175, 0.0
        %218 = vst.msk [vmem:[#allocation2 + $0x148] sm:$0x3] %vm178, 0.0
        %219 = vst.msk [vmem:[#allocation2 + $0x150] sm:$0xff] %vm175, 0.0
        %220 = vst.msk [vmem:[#allocation2 + $0x158] sm:$0xff] %vm175, 0.0
        %221 = vst.msk [vmem:[#allocation2 + $0x160] sm:$0x3] %vm178, 0.0
        %222 = vst.msk [vmem:[#allocation2 + $0x168] sm:$0xff] %vm175, 0.0
        %223 = vst.msk [vmem:[#allocation2 + $0x170] sm:$0xff] %vm175, 0.0
        %224 = vst.msk [vmem:[#allocation2 + $0x178] sm:$0x3] %vm178, 0.0
        %225 = vst.msk [vmem:[#allocation2 + $0x180] sm:$0xff] %vm175, 0.0
        %226 = vst.msk [vmem:[#allocation2 + $0x188] sm:$0xff] %vm175, 0.0
        %227 = vst.msk [vmem:[#allocation2 + $0x190] sm:$0x3] %vm178, 0.0
        %228 = vst.msk [vmem:[#allocation2 + $0x198] sm:$0xff] %vm175, 0.0
        %229 = vst.msk [vmem:[#allocation2 + $0x1a0] sm:$0xff] %vm175, 0.0
        %230 = vst.msk [vmem:[#allocation2 + $0x1a8] sm:$0x3] %vm178, 0.0
      $region36: #{tpu_custom_call.1} parent=31 // pred_fallthru
        _
      %v231 = vld [vmem:[%s165] sm:$0xff]
      %v232 = vld [vmem:[%s165 + $0x8] sm:$0xff]
      %v233 = vld [vmem:[%s165 + $0x10] sm:$0xff]
      %v234 = vld [vmem:[%s165 + $0x18] sm:$0xff]
      %v235 = vld [vmem:[%s165 + $0x20] sm:$0xff]
      %v236 = vld [vmem:[%s165 + $0x28] sm:$0xff]
      %v237 = vld [vmem:[%s165 + $0x30] sm:$0xff]
      %v238 = vld [vmem:[%s165 + $0x38] sm:$0xff]
      %v239 = vld [vmem:[%s165 + $0x40] sm:$0xff]
      %v240 = vld [vmem:[%s165 + $0x48] sm:$0xff]
      %v241 = vld [vmem:[%s165 + $0x50] sm:$0xff]
      %v242 = vld [vmem:[%s165 + $0x58] sm:$0xff]
      %v243 = vld [vmem:[%s165 + $0x60] sm:$0xff]
      %v244 = vld [vmem:[%s165 + $0x68] sm:$0xff]
      %v245 = vld [vmem:[%s165 + $0x70] sm:$0xff]
      %v246 = vld [vmem:[%s165 + $0x78] sm:$0xff]
      %v247 = vld [vmem:[%s165 + $0x80] sm:$0xff]
      %v248 = vld [vmem:[%s165 + $0x88] sm:$0xff]
      %v249 = vld [vmem:[%s165 + $0x90] sm:$0xff]
      %v250 = vld [vmem:[%s165 + $0x98] sm:$0xff]
      %v251 = vld [vmem:[%s165 + $0xa0] sm:$0xff]
      %v252 = vld [vmem:[%s165 + $0xa8] sm:$0xff]
      %v253 = vld [vmem:[%s165 + $0xb0] sm:$0xff]
      %v254 = vld [vmem:[%s165 + $0xb8] sm:$0xff]
      %v255 = vld [vmem:[%s165 + $0xc0] sm:$0xff]
      %v256 = vld [vmem:[%s165 + $0xc8] sm:$0xff]
      %v257 = vld [vmem:[%s165 + $0xd0] sm:$0xff]
      %v258 = vld [vmem:[%s165 + $0xd8] sm:$0xff]
      %v259 = vld [vmem:[%s165 + $0xe0] sm:$0xff]
      %v260 = vld [vmem:[%s165 + $0xe8] sm:$0xff]
      %v261 = vld [vmem:[%s165 + $0xf0] sm:$0xff]
      %v262 = vld [vmem:[%s165 + $0xf8] sm:$0xff]
      %s263 = scalar_lea.vmem [#allocation2], 24
      %vm264 = vcmask 31744
      %265 = vst.msk [vmem:[%s263 + $0x1] sm:$0xff] %vm264, %v231
      %266 = vst.msk [vmem:[%s263 + $0x9] sm:$0xff] %vm264, %v232
      %267 = vst.msk [vmem:[%s263 + $0x19] sm:$0xff] %vm264, %v233
      %268 = vst.msk [vmem:[%s263 + $0x21] sm:$0xff] %vm264, %v234
      %269 = vst.msk [vmem:[%s263 + $0x31] sm:$0xff] %vm264, %v235
      %270 = vst.msk [vmem:[%s263 + $0x39] sm:$0xff] %vm264, %v236
      %271 = vst.msk [vmem:[%s263 + $0x49] sm:$0xff] %vm264, %v237
      %272 = vst.msk [vmem:[%s263 + $0x51] sm:$0xff] %vm264, %v238
      %273 = vst.msk [vmem:[%s263 + $0x61] sm:$0xff] %vm264, %v239
      %274 = vst.msk [vmem:[%s263 + $0x69] sm:$0xff] %vm264, %v240
      %275 = vst.msk [vmem:[%s263 + $0x79] sm:$0xff] %vm264, %v241
      %276 = vst.msk [vmem:[%s263 + $0x81] sm:$0xff] %vm264, %v242
      %277 = vst.msk [vmem:[%s263 + $0x91] sm:$0xff] %vm264, %v243
      %278 = vst.msk [vmem:[%s263 + $0x99] sm:$0xff] %vm264, %v244
      %279 = vst.msk [vmem:[%s263 + $0xa9] sm:$0xff] %vm264, %v245
      %280 = vst.msk [vmem:[%s263 + $0xb1] sm:$0xff] %vm264, %v246
      %281 = vst.msk [vmem:[%s263 + $0xc1] sm:$0xff] %vm264, %v247
      %282 = vst.msk [vmem:[%s263 + $0xc9] sm:$0xff] %vm264, %v248
      %283 = vst.msk [vmem:[%s263 + $0xd9] sm:$0xff] %vm264, %v249
      %284 = vst.msk [vmem:[%s263 + $0xe1] sm:$0xff] %vm264, %v250
      %285 = vst.msk [vmem:[%s263 + $0xf1] sm:$0xff] %vm264, %v251
      %286 = vst.msk [vmem:[%s263 + $0xf9] sm:$0xff] %vm264, %v252
      %287 = vst.msk [vmem:[%s263 + $0x109] sm:$0xff] %vm264, %v253
      %288 = vst.msk [vmem:[%s263 + $0x111] sm:$0xff] %vm264, %v254
      %289 = vst.msk [vmem:[%s263 + $0x121] sm:$0xff] %vm264, %v255
      %290 = vst.msk [vmem:[%s263 + $0x129] sm:$0xff] %vm264, %v256
      %291 = vst.msk [vmem:[%s263 + $0x139] sm:$0xff] %vm264, %v257
      %292 = vst.msk [vmem:[%s263 + $0x141] sm:$0xff] %vm264, %v258
      %293 = vst.msk [vmem:[%s263 + $0x151] sm:$0xff] %vm264, %v259
      %294 = vst.msk [vmem:[%s263 + $0x159] sm:$0xff] %vm264, %v260
      %295 = vst.msk [vmem:[%s263 + $0x169] sm:$0xff] %vm264, %v261
      %296 = vst.msk [vmem:[%s263 + $0x171] sm:$0xff] %vm264, %v262
      %v297 = vld [vmem:[%s2] sm:$0x1]
      %v298 = vld [vmem:[#allocation2] sm:$0xff]
      %v299 = vld [vmem:[#allocation2 + $0x8] sm:$0xff]
      %v300 = vld [vmem:[#allocation2 + $0x18] sm:$0xff]
      %v301 = vld [vmem:[#allocation2 + $0x20] sm:$0xff]
      %v302 = vld [vmem:[#allocation2 + $0x30] sm:$0xff]
      %v303 = vld [vmem:[#allocation2 + $0x38] sm:$0xff]
      %v304 = vld [vmem:[#allocation2 + $0x48] sm:$0xff]
      %v305 = vld [vmem:[#allocation2 + $0x50] sm:$0xff]
      %v306 = vld [vmem:[#allocation2 + $0x60] sm:$0xff]
      %v307 = vld [vmem:[#allocation2 + $0x68] sm:$0xff]
      %v308 = vld [vmem:[#allocation2 + $0x78] sm:$0xff]
      %v309 = vld [vmem:[#allocation2 + $0x80] sm:$0xff]
      %v310 = vld [vmem:[#allocation2 + $0x90] sm:$0xff]
      %v311 = vld [vmem:[#allocation2 + $0x98] sm:$0xff]
      %v312 = vld [vmem:[#allocation2 + $0xa8] sm:$0xff]
      %v313 = vld [vmem:[#allocation2 + $0xb0] sm:$0xff]
      %v314 = vld [vmem:[#allocation2 + $0xc0] sm:$0xff]
      %v315 = vld [vmem:[#allocation2 + $0xc8] sm:$0xff]
      %v316 = vld [vmem:[#allocation2 + $0xd8] sm:$0xff]
      %v317 = vld [vmem:[#allocation2 + $0xe0] sm:$0xff]
      %v318 = vld [vmem:[#allocation2 + $0xf0] sm:$0xff]
      %v319 = vld [vmem:[#allocation2 + $0xf8] sm:$0xff]
      %v320 = vld [vmem:[#allocation2 + $0x108] sm:$0xff]
      %v321 = vld [vmem:[#allocation2 + $0x110] sm:$0xff]
      %v322 = vld [vmem:[#allocation2 + $0x120] sm:$0xff]
      %v323 = vld [vmem:[#allocation2 + $0x128] sm:$0xff]
      %v324 = vld [vmem:[#allocation2 + $0x138] sm:$0xff]
      %v325 = vld [vmem:[#allocation2 + $0x140] sm:$0xff]
      %v326 = vld [vmem:[#allocation2 + $0x150] sm:$0xff]
      %v327 = vld [vmem:[#allocation2 + $0x158] sm:$0xff]
      %v328 = vld [vmem:[#allocation2 + $0x168] sm:$0xff]
      %v329 = vld [vmem:[#allocation2 + $0x170] sm:$0xff]
      %v330 = vld [vmem:[%s1] sm:$0xf]
      %v331 = vld [vmem:[#allocation2 + $0x1] sm:$0xff]
      %v332 = vld [vmem:[#allocation2 + $0x9] sm:$0xff]
      %v333 = vld [vmem:[#allocation2 + $0x19] sm:$0xff]
      %v334 = vld [vmem:[#allocation2 + $0x21] sm:$0xff]
      %v335 = vld [vmem:[#allocation2 + $0x31] sm:$0xff]
      %v336 = vld [vmem:[#allocation2 + $0x39] sm:$0xff]
      %v337 = vld [vmem:[#allocation2 + $0x49] sm:$0xff]
      %v338 = vld [vmem:[#allocation2 + $0x51] sm:$0xff]
      %v339 = vld [vmem:[#allocation2 + $0x61] sm:$0xff]
      %v340 = vld [vmem:[#allocation2 + $0x69] sm:$0xff]
      %v341 = vld [vmem:[#allocation2 + $0x79] sm:$0xff]
      %v342 = vld [vmem:[#allocation2 + $0x81] sm:$0xff]
      %v343 = vld [vmem:[#allocation2 + $0x91] sm:$0xff]
      %v344 = vld [vmem:[#allocation2 + $0x99] sm:$0xff]
      %v345 = vld [vmem:[#allocation2 + $0xa9] sm:$0xff]
      %v346 = vld [vmem:[#allocation2 + $0xb1] sm:$0xff]
      %v347 = vld [vmem:[#allocation2 + $0xc1] sm:$0xff]
      %v348 = vld [vmem:[#allocation2 + $0xc9] sm:$0xff]
      %v349 = vld [vmem:[#allocation2 + $0xd9] sm:$0xff]
      %v350 = vld [vmem:[#allocation2 + $0xe1] sm:$0xff]
      %v351 = vld [vmem:[#allocation2 + $0xf1] sm:$0xff]
      %v352 = vld [vmem:[#allocation2 + $0xf9] sm:$0xff]
      %v353 = vld [vmem:[#allocation2 + $0x109] sm:$0xff]
      %v354 = vld [vmem:[#allocation2 + $0x111] sm:$0xff]
      %v355 = vld [vmem:[#allocation2 + $0x121] sm:$0xff]
      %v356 = vld [vmem:[#allocation2 + $0x129] sm:$0xff]
      %v357 = vld [vmem:[#allocation2 + $0x139] sm:$0xff]
      %v358 = vld [vmem:[#allocation2 + $0x141] sm:$0xff]
      %v359 = vld [vmem:[#allocation2 + $0x151] sm:$0xff]
      %v360 = vld [vmem:[#allocation2 + $0x159] sm:$0xff]
      %v361 = vld [vmem:[#allocation2 + $0x169] sm:$0xff]
      %v362 = vld [vmem:[#allocation2 + $0x171] sm:$0xff]
      %s363 = scalar_lea.vmem %s1, 4
      %v364 = vld [vmem:[%s363] sm:$0xf]
      %v366 = vsel %vm264, %v331, 0
      %v369 = vsel %vm264, %v332, 0
      %v372 = vsel %vm264, %v333, 0
      %v375 = vsel %vm264, %v334, 0
      %v378 = vsel %vm264, %v335, 0
      %v381 = vsel %vm264, %v336, 0
      %v384 = vsel %vm264, %v337, 0
      %v387 = vsel %vm264, %v338, 0
      %v390 = vsel %vm264, %v339, 0
      %v393 = vsel %vm264, %v340, 0
      %v396 = vsel %vm264, %v341, 0
      %v399 = vsel %vm264, %v342, 0
      %v402 = vsel %vm264, %v343, 0
      %v405 = vsel %vm264, %v344, 0
      %v408 = vsel %vm264, %v345, 0
      %v411 = vsel %vm264, %v346, 0
      %v414 = vsel %vm264, %v347, 0
      %v417 = vsel %vm264, %v348, 0
      %v420 = vsel %vm264, %v349, 0
      %v423 = vsel %vm264, %v350, 0
      %v426 = vsel %vm264, %v351, 0
      %v429 = vsel %vm264, %v352, 0
      %v432 = vsel %vm264, %v353, 0
      %v435 = vsel %vm264, %v354, 0
      %v438 = vsel %vm264, %v355, 0
      %v441 = vsel %vm264, %v356, 0
      %v444 = vsel %vm264, %v357, 0
      %v447 = vsel %vm264, %v358, 0
      %v450 = vsel %vm264, %v359, 0
      %v453 = vsel %vm264, %v360, 0
      %v456 = vsel %vm264, %v361, 0
      %v459 = vsel %vm264, %v362, 0
      %vm461 = vcmask 1043456
      %v463 = vsel %vm461, %v364, 0
      %465 = vmatprep.subr.mxu0 0.0
      %466 = vmatpush1.msra.mxu0 0.0
      %467 = vmatprep.subr.mxu0 0.0
      %468 = vmatpush1.msra.mxu0 0.0
      %469 = vmatprep.subr.mxu0 0.0
      %470 = vmatpush1.msra.mxu0 0.0
      %471 = vmatprep.subr.mxu0 0.0
      %472 = vmatpush1.msra.mxu0 0.0
      %473 = vmatprep.subr.mxu0 0.0
      %474 = vmatpush1.msra.mxu0 0.0
      %475 = vmatprep.subr.mxu0 0.0
      %476 = vmatpush1.msra.mxu0 0.0
      %477 = vmatprep.subr.mxu0 0.0
      %478 = vmatpush1.msra.mxu0 0.0
      %479 = vmatprep.subr.mxu0 0.0
      %480 = vmatpush1.msra.mxu0 0.0
      %481 = vmatprep.subr.mxu0 0.0
      %482 = vmatpush1.msra.mxu0 0.0
      %483 = vmatprep.subr.mxu0 0.0
      %484 = vmatpush1.msra.mxu0 0.0
      %485 = vmatprep.subr.mxu0 0.0
      %486 = vmatpush1.msra.mxu0 0.0
      %487 = vmatprep.subr.mxu0 0.0
      %488 = vmatpush1.msra.mxu0 0.0
      %489 = vmatprep.subr.mxu0 0.0
      %490 = vmatpush1.msra.mxu0 0.0
      %491 = vmatprep.subr.mxu0 0.0
      %492 = vmatpush1.msra.mxu0 0.0
      %493 = vmatprep.subr.mxu0 0.0
      %494 = vmatpush1.msra.mxu0 0.0
      %495 = vmatprep.subr.mxu0 0.0
      %496 = vmatpush1.msra.mxu0 %v463
      %497 = vmatprep.subr.mxu0 0.0
      %498 = vmatpush2.msra.mxu0 0.0
      %499 = vmatprep.subr.mxu0 0.0
      %500 = vmatpush2.msra.mxu0 0.0
      %501 = vmatprep.subr.mxu0 0.0
      %502 = vmatpush2.msra.mxu0 0.0
      %503 = vmatprep.subr.mxu0 0.0
      %504 = vmatpush2.msra.mxu0 0.0
      %505 = vmatprep.subr.mxu0 0.0
      %506 = vmatpush2.msra.mxu0 0.0
      %507 = vmatprep.subr.mxu0 0.0
      %508 = vmatpush2.msra.mxu0 0.0
      %509 = vmatprep.subr.mxu0 0.0
      %510 = vmatpush2.msra.mxu0 0.0
      %511 = vmatprep.subr.mxu0 0.0
      %512 = vmatpush2.msra.mxu0 0.0
      %513 = vmatprep.subr.mxu0 0.0
      %514 = vmatpush2.msra.mxu0 0.0
      %515 = vmatprep.subr.mxu0 0.0
      %516 = vmatpush2.msra.mxu0 0.0
      %517 = vmatprep.subr.mxu0 0.0
      %518 = vmatpush2.msra.mxu0 0.0
      %519 = vmatprep.subr.mxu0 0.0
      %520 = vmatpush2.msra.mxu0 0.0
      %521 = vmatprep.subr.mxu0 0.0
      %522 = vmatpush2.msra.mxu0 0.0
      %523 = vmatprep.subr.mxu0 0.0
      %524 = vmatpush2.msra.mxu0 0.0
      %525 = vmatprep.subr.mxu0 0.0
      %526 = vmatpush2.msra.mxu0 0.0
      %527 = vmatprep.subr.mxu0 0.0
      %528 = vmatpush2.msra.mxu0 0.0
      %529 = vmatprep.mubr.f32.mxu0 0.0
      %530 = vmatmul.mubr.f32.gmra.mxu0 %v366
      %v531 = vpop.f32.mrf.mxu0
      %v532 = vadd.f32 0.0, %v531
      %v533 = vpop.f32.mrf.mxu0
      %534 = vmatprep.mubr.f32.mxu0 0.0
      %535 = vmatmul.mubr.f32.gmra.mxu0 %v369
      %v536 = vpop.f32.mrf.mxu0
      %v537 = vadd.f32 0.0, %v536
      %v538 = vpop.f32.mrf.mxu0
      %539 = vmatprep.mubr.f32.mxu0 0.0
      %540 = vmatmul.mubr.f32.gmra.mxu0 %v372
      %v541 = vpop.f32.mrf.mxu0
      %v542 = vadd.f32 0.0, %v541
      %v543 = vpop.f32.mrf.mxu0
      %544 = vmatprep.mubr.f32.mxu0 0.0
      %545 = vmatmul.mubr.f32.gmra.mxu0 %v375
      %v546 = vpop.f32.mrf.mxu0
      %v547 = vadd.f32 0.0, %v546
      %v548 = vpop.f32.mrf.mxu0
      %549 = vmatprep.mubr.f32.mxu0 0.0
      %550 = vmatmul.mubr.f32.gmra.mxu0 %v378
      %v551 = vpop.f32.mrf.mxu0
      %v552 = vadd.f32 0.0, %v551
      %v553 = vpop.f32.mrf.mxu0
      %554 = vmatprep.mubr.f32.mxu0 0.0
      %555 = vmatmul.mubr.f32.gmra.mxu0 %v381
      %v556 = vpop.f32.mrf.mxu0
      %v557 = vadd.f32 0.0, %v556
      %v558 = vpop.f32.mrf.mxu0
      %559 = vmatprep.mubr.f32.mxu0 0.0
      %560 = vmatmul.mubr.f32.gmra.mxu0 %v384
      %v561 = vpop.f32.mrf.mxu0
      %v562 = vadd.f32 0.0, %v561
      %v563 = vpop.f32.mrf.mxu0
      %564 = vmatprep.mubr.f32.mxu0 0.0
      %565 = vmatmul.mubr.f32.gmra.mxu0 %v387
      %v566 = vpop.f32.mrf.mxu0
      %v567 = vadd.f32 0.0, %v566
      %v568 = vpop.f32.mrf.mxu0
      %569 = vmatprep.mubr.f32.mxu0 0.0
      %570 = vmatmul.mubr.f32.gmra.mxu0 %v390
      %v571 = vpop.f32.mrf.mxu0
      %v572 = vadd.f32 0.0, %v571
      %v573 = vpop.f32.mrf.mxu0
      %574 = vmatprep.mubr.f32.mxu0 0.0
      %575 = vmatmul.mubr.f32.gmra.mxu0 %v393
      %v576 = vpop.f32.mrf.mxu0
      %v577 = vadd.f32 0.0, %v576
      %v578 = vpop.f32.mrf.mxu0
      %579 = vmatprep.mubr.f32.mxu0 0.0
      %580 = vmatmul.mubr.f32.gmra.mxu0 %v396
      %v581 = vpop.f32.mrf.mxu0
      %v582 = vadd.f32 0.0, %v581
      %v583 = vpop.f32.mrf.mxu0
      %584 = vmatprep.mubr.f32.mxu0 0.0
      %585 = vmatmul.mubr.f32.gmra.mxu0 %v399
      %v586 = vpop.f32.mrf.mxu0
      %v587 = vadd.f32 0.0, %v586
      %v588 = vpop.f32.mrf.mxu0
      %589 = vmatprep.mubr.f32.mxu0 0.0
      %590 = vmatmul.mubr.f32.gmra.mxu0 %v402
      %v591 = vpop.f32.mrf.mxu0
      %v592 = vadd.f32 0.0, %v591
      %v593 = vpop.f32.mrf.mxu0
      %594 = vmatprep.mubr.f32.mxu0 0.0
      %595 = vmatmul.mubr.f32.gmra.mxu0 %v405
      %v596 = vpop.f32.mrf.mxu0
      %v597 = vadd.f32 0.0, %v596
      %v598 = vpop.f32.mrf.mxu0
      %599 = vmatprep.mubr.f32.mxu0 0.0
      %600 = vmatmul.mubr.f32.gmra.mxu0 %v408
      %v601 = vpop.f32.mrf.mxu0
      %v602 = vadd.f32 0.0, %v601
      %v603 = vpop.f32.mrf.mxu0
      %604 = vmatprep.mubr.f32.mxu0 0.0
      %605 = vmatmul.mubr.f32.gmra.mxu0 %v411
      %v606 = vpop.f32.mrf.mxu0
      %v607 = vadd.f32 0.0, %v606
      %v608 = vpop.f32.mrf.mxu0
      %609 = vmatprep.mubr.f32.mxu0 0.0
      %610 = vmatmul.mubr.f32.gmra.mxu0 %v414
      %v611 = vpop.f32.mrf.mxu0
      %v612 = vadd.f32 0.0, %v611
      %v613 = vpop.f32.mrf.mxu0
      %614 = vmatprep.mubr.f32.mxu0 0.0
      %615 = vmatmul.mubr.f32.gmra.mxu0 %v417
      %v616 = vpop.f32.mrf.mxu0
      %v617 = vadd.f32 0.0, %v616
      %v618 = vpop.f32.mrf.mxu0
      %619 = vmatprep.mubr.f32.mxu0 0.0
      %620 = vmatmul.mubr.f32.gmra.mxu0 %v420
      %v621 = vpop.f32.mrf.mxu0
      %v622 = vadd.f32 0.0, %v621
      %v623 = vpop.f32.mrf.mxu0
      %624 = vmatprep.mubr.f32.mxu0 0.0
      %625 = vmatmul.mubr.f32.gmra.mxu0 %v423
      %v626 = vpop.f32.mrf.mxu0
      %v627 = vadd.f32 0.0, %v626
      %v628 = vpop.f32.mrf.mxu0
      %629 = vmatprep.mubr.f32.mxu0 0.0
      %630 = vmatmul.mubr.f32.gmra.mxu0 %v426
      %v631 = vpop.f32.mrf.mxu0
      %v632 = vadd.f32 0.0, %v631
      %v633 = vpop.f32.mrf.mxu0
      %634 = vmatprep.mubr.f32.mxu0 0.0
      %635 = vmatmul.mubr.f32.gmra.mxu0 %v429
      %v636 = vpop.f32.mrf.mxu0
      %v637 = vadd.f32 0.0, %v636
      %v638 = vpop.f32.mrf.mxu0
      %639 = vmatprep.mubr.f32.mxu0 0.0
      %640 = vmatmul.mubr.f32.gmra.mxu0 %v432
      %v641 = vpop.f32.mrf.mxu0
      %v642 = vadd.f32 0.0, %v641
      %v643 = vpop.f32.mrf.mxu0
      %644 = vmatprep.mubr.f32.mxu0 0.0
      %645 = vmatmul.mubr.f32.gmra.mxu0 %v435
      %v646 = vpop.f32.mrf.mxu0
      %v647 = vadd.f32 0.0, %v646
      %v648 = vpop.f32.mrf.mxu0
      %649 = vmatprep.mubr.f32.mxu0 0.0
      %650 = vmatmul.mubr.f32.gmra.mxu0 %v438
      %v651 = vpop.f32.mrf.mxu0
      %v652 = vadd.f32 0.0, %v651
      %v653 = vpop.f32.mrf.mxu0
      %654 = vmatprep.mubr.f32.mxu0 0.0
      %655 = vmatmul.mubr.f32.gmra.mxu0 %v441
      %v656 = vpop.f32.mrf.mxu0
      %v657 = vadd.f32 0.0, %v656
      %v658 = vpop.f32.mrf.mxu0
      %659 = vmatprep.mubr.f32.mxu0 0.0
      %660 = vmatmul.mubr.f32.gmra.mxu0 %v444
      %v661 = vpop.f32.mrf.mxu0
      %v662 = vadd.f32 0.0, %v661
      %v663 = vpop.f32.mrf.mxu0
      %664 = vmatprep.mubr.f32.mxu0 0.0
      %665 = vmatmul.mubr.f32.gmra.mxu0 %v447
      %v666 = vpop.f32.mrf.mxu0
      %v667 = vadd.f32 0.0, %v666
      %v668 = vpop.f32.mrf.mxu0
      %669 = vmatprep.mubr.f32.mxu0 0.0
      %670 = vmatmul.mubr.f32.gmra.mxu0 %v450
      %v671 = vpop.f32.mrf.mxu0
      %v672 = vadd.f32 0.0, %v671
      %v673 = vpop.f32.mrf.mxu0
      %674 = vmatprep.mubr.f32.mxu0 0.0
      %675 = vmatmul.mubr.f32.gmra.mxu0 %v453
      %v676 = vpop.f32.mrf.mxu0
      %v677 = vadd.f32 0.0, %v676
      %v678 = vpop.f32.mrf.mxu0
      %679 = vmatprep.mubr.f32.mxu0 0.0
      %680 = vmatmul.mubr.f32.gmra.mxu0 %v456
      %v681 = vpop.f32.mrf.mxu0
      %v682 = vadd.f32 0.0, %v681
      %v683 = vpop.f32.mrf.mxu0
      %684 = vmatprep.mubr.f32.mxu0 0.0
      %685 = vmatmul.mubr.f32.gmra.mxu0 %v459
      %v686 = vpop.f32.mrf.mxu0
      %v687 = vadd.f32 0.0, %v686
      %v688 = vpop.f32.mrf.mxu0
      %689 = vdwg.mxu0
      %v691 = vsel %vm264, %v298, 0
      %v694 = vsel %vm264, %v299, 0
      %v697 = vsel %vm264, %v300, 0
      %v700 = vsel %vm264, %v301, 0
      %v703 = vsel %vm264, %v302, 0
      %v706 = vsel %vm264, %v303, 0
      %v709 = vsel %vm264, %v304, 0
      %v712 = vsel %vm264, %v305, 0
      %v715 = vsel %vm264, %v306, 0
      %v718 = vsel %vm264, %v307, 0
      %v721 = vsel %vm264, %v308, 0
      %v724 = vsel %vm264, %v309, 0
      %v727 = vsel %vm264, %v310, 0
      %v730 = vsel %vm264, %v311, 0
      %v733 = vsel %vm264, %v312, 0
      %v736 = vsel %vm264, %v313, 0
      %v739 = vsel %vm264, %v314, 0
      %v742 = vsel %vm264, %v315, 0
      %v745 = vsel %vm264, %v316, 0
      %v748 = vsel %vm264, %v317, 0
      %v751 = vsel %vm264, %v318, 0
      %v754 = vsel %vm264, %v319, 0
      %v757 = vsel %vm264, %v320, 0
      %v760 = vsel %vm264, %v321, 0
      %v763 = vsel %vm264, %v322, 0
      %v766 = vsel %vm264, %v323, 0
      %v769 = vsel %vm264, %v324, 0
      %v772 = vsel %vm264, %v325, 0
      %v775 = vsel %vm264, %v326, 0
      %v778 = vsel %vm264, %v327, 0
      %v781 = vsel %vm264, %v328, 0
      %v784 = vsel %vm264, %v329, 0
      %v787 = vsel %vm461, %v330, 0
      %789 = vmatprep.subr.mxu0 0.0
      %790 = vmatpush1.msra.mxu0 0.0
      %791 = vmatprep.subr.mxu0 0.0
      %792 = vmatpush1.msra.mxu0 0.0
      %793 = vmatprep.subr.mxu0 0.0
      %794 = vmatpush1.msra.mxu0 0.0
      %795 = vmatprep.subr.mxu0 0.0
      %796 = vmatpush1.msra.mxu0 0.0
      %797 = vmatprep.subr.mxu0 0.0
      %798 = vmatpush1.msra.mxu0 0.0
      %799 = vmatprep.subr.mxu0 0.0
      %800 = vmatpush1.msra.mxu0 0.0
      %801 = vmatprep.subr.mxu0 0.0
      %802 = vmatpush1.msra.mxu0 0.0
      %803 = vmatprep.subr.mxu0 0.0
      %804 = vmatpush1.msra.mxu0 0.0
      %805 = vmatprep.subr.mxu0 0.0
      %806 = vmatpush1.msra.mxu0 0.0
      %807 = vmatprep.subr.mxu0 0.0
      %808 = vmatpush1.msra.mxu0 0.0
      %809 = vmatprep.subr.mxu0 0.0
      %810 = vmatpush1.msra.mxu0 0.0
      %811 = vmatprep.subr.mxu0 0.0
      %812 = vmatpush1.msra.mxu0 0.0
      %813 = vmatprep.subr.mxu0 0.0
      %814 = vmatpush1.msra.mxu0 0.0
      %815 = vmatprep.subr.mxu0 0.0
      %816 = vmatpush1.msra.mxu0 0.0
      %817 = vmatprep.subr.mxu0 0.0
      %818 = vmatpush1.msra.mxu0 0.0
      %819 = vmatprep.subr.mxu0 0.0
      %820 = vmatpush1.msra.mxu0 %v787
      %821 = vmatprep.subr.mxu0 0.0
      %822 = vmatpush2.msra.mxu0 0.0
      %823 = vmatprep.subr.mxu0 0.0
      %824 = vmatpush2.msra.mxu0 0.0
      %825 = vmatprep.subr.mxu0 0.0
      %826 = vmatpush2.msra.mxu0 0.0
      %827 = vmatprep.subr.mxu0 0.0
      %828 = vmatpush2.msra.mxu0 0.0
      %829 = vmatprep.subr.mxu0 0.0
      %830 = vmatpush2.msra.mxu0 0.0
      %831 = vmatprep.subr.mxu0 0.0
      %832 = vmatpush2.msra.mxu0 0.0
      %833 = vmatprep.subr.mxu0 0.0
      %834 = vmatpush2.msra.mxu0 0.0
      %835 = vmatprep.subr.mxu0 0.0
      %836 = vmatpush2.msra.mxu0 0.0
      %837 = vmatprep.subr.mxu0 0.0
      %838 = vmatpush2.msra.mxu0 0.0
      %839 = vmatprep.subr.mxu0 0.0
      %840 = vmatpush2.msra.mxu0 0.0
      %841 = vmatprep.subr.mxu0 0.0
      %842 = vmatpush2.msra.mxu0 0.0
      %843 = vmatprep.subr.mxu0 0.0
      %844 = vmatpush2.msra.mxu0 0.0
      %845 = vmatprep.subr.mxu0 0.0
      %846 = vmatpush2.msra.mxu0 0.0
      %847 = vmatprep.subr.mxu0 0.0
      %848 = vmatpush2.msra.mxu0 0.0
      %849 = vmatprep.subr.mxu0 0.0
      %850 = vmatpush2.msra.mxu0 0.0
      %851 = vmatprep.subr.mxu0 0.0
      %852 = vmatpush2.msra.mxu0 0.0
      %853 = vmatprep.mubr.f32.mxu0 0.0
      %854 = vmatmul.mubr.f32.gmra.mxu0 %v691
      %v855 = vpop.f32.mrf.mxu0
      %v856 = vadd.f32 %v532, %v855
      %v857 = vpop.f32.mrf.mxu0
      %858 = vmatprep.mubr.f32.mxu0 0.0
      %859 = vmatmul.mubr.f32.gmra.mxu0 %v694
      %v860 = vpop.f32.mrf.mxu0
      %v861 = vadd.f32 %v537, %v860
      %v862 = vpop.f32.mrf.mxu0
      %863 = vmatprep.mubr.f32.mxu0 0.0
      %864 = vmatmul.mubr.f32.gmra.mxu0 %v697
      %v865 = vpop.f32.mrf.mxu0
      %v866 = vadd.f32 %v542, %v865
      %v867 = vpop.f32.mrf.mxu0
      %868 = vmatprep.mubr.f32.mxu0 0.0
      %869 = vmatmul.mubr.f32.gmra.mxu0 %v700
      %v870 = vpop.f32.mrf.mxu0
      %v871 = vadd.f32 %v547, %v870
      %v872 = vpop.f32.mrf.mxu0
      %873 = vmatprep.mubr.f32.mxu0 0.0
      %874 = vmatmul.mubr.f32.gmra.mxu0 %v703
      %v875 = vpop.f32.mrf.mxu0
      %v876 = vadd.f32 %v552, %v875
      %v877 = vpop.f32.mrf.mxu0
      %878 = vmatprep.mubr.f32.mxu0 0.0
      %879 = vmatmul.mubr.f32.gmra.mxu0 %v706
      %v880 = vpop.f32.mrf.mxu0
      %v881 = vadd.f32 %v557, %v880
      %v882 = vpop.f32.mrf.mxu0
      %883 = vmatprep.mubr.f32.mxu0 0.0
      %884 = vmatmul.mubr.f32.gmra.mxu0 %v709
      %v885 = vpop.f32.mrf.mxu0
      %v886 = vadd.f32 %v562, %v885
      %v887 = vpop.f32.mrf.mxu0
      %888 = vmatprep.mubr.f32.mxu0 0.0
      %889 = vmatmul.mubr.f32.gmra.mxu0 %v712
      %v890 = vpop.f32.mrf.mxu0
      %v891 = vadd.f32 %v567, %v890
      %v892 = vpop.f32.mrf.mxu0
      %893 = vmatprep.mubr.f32.mxu0 0.0
      %894 = vmatmul.mubr.f32.gmra.mxu0 %v715
      %v895 = vpop.f32.mrf.mxu0
      %v896 = vadd.f32 %v572, %v895
      %v897 = vpop.f32.mrf.mxu0
      %898 = vmatprep.mubr.f32.mxu0 0.0
      %899 = vmatmul.mubr.f32.gmra.mxu0 %v718
      %v900 = vpop.f32.mrf.mxu0
      %v901 = vadd.f32 %v577, %v900
      %v902 = vpop.f32.mrf.mxu0
      %903 = vmatprep.mubr.f32.mxu0 0.0
      %904 = vmatmul.mubr.f32.gmra.mxu0 %v721
      %v905 = vpop.f32.mrf.mxu0
      %v906 = vadd.f32 %v582, %v905
      %v907 = vpop.f32.mrf.mxu0
      %908 = vmatprep.mubr.f32.mxu0 0.0
      %909 = vmatmul.mubr.f32.gmra.mxu0 %v724
      %v910 = vpop.f32.mrf.mxu0
      %v911 = vadd.f32 %v587, %v910
      %v912 = vpop.f32.mrf.mxu0
      %913 = vmatprep.mubr.f32.mxu0 0.0
      %914 = vmatmul.mubr.f32.gmra.mxu0 %v727
      %v915 = vpop.f32.mrf.mxu0
      %v916 = vadd.f32 %v592, %v915
      %v917 = vpop.f32.mrf.mxu0
      %918 = vmatprep.mubr.f32.mxu0 0.0
      %919 = vmatmul.mubr.f32.gmra.mxu0 %v730
      %v920 = vpop.f32.mrf.mxu0
      %v921 = vadd.f32 %v597, %v920
      %v922 = vpop.f32.mrf.mxu0
      %923 = vmatprep.mubr.f32.mxu0 0.0
      %924 = vmatmul.mubr.f32.gmra.mxu0 %v733
      %v925 = vpop.f32.mrf.mxu0
      %v926 = vadd.f32 %v602, %v925
      %v927 = vpop.f32.mrf.mxu0
      %928 = vmatprep.mubr.f32.mxu0 0.0
      %929 = vmatmul.mubr.f32.gmra.mxu0 %v736
      %v930 = vpop.f32.mrf.mxu0
      %v931 = vadd.f32 %v607, %v930
      %v932 = vpop.f32.mrf.mxu0
      %933 = vmatprep.mubr.f32.mxu0 0.0
      %934 = vmatmul.mubr.f32.gmra.mxu0 %v739
      %v935 = vpop.f32.mrf.mxu0
      %v936 = vadd.f32 %v612, %v935
      %v937 = vpop.f32.mrf.mxu0
      %938 = vmatprep.mubr.f32.mxu0 0.0
      %939 = vmatmul.mubr.f32.gmra.mxu0 %v742
      %v940 = vpop.f32.mrf.mxu0
      %v941 = vadd.f32 %v617, %v940
      %v942 = vpop.f32.mrf.mxu0
      %943 = vmatprep.mubr.f32.mxu0 0.0
      %944 = vmatmul.mubr.f32.gmra.mxu0 %v745
      %v945 = vpop.f32.mrf.mxu0
      %v946 = vadd.f32 %v622, %v945
      %v947 = vpop.f32.mrf.mxu0
      %948 = vmatprep.mubr.f32.mxu0 0.0
      %949 = vmatmul.mubr.f32.gmra.mxu0 %v748
      %v950 = vpop.f32.mrf.mxu0
      %v951 = vadd.f32 %v627, %v950
      %v952 = vpop.f32.mrf.mxu0
      %953 = vmatprep.mubr.f32.mxu0 0.0
      %954 = vmatmul.mubr.f32.gmra.mxu0 %v751
      %v955 = vpop.f32.mrf.mxu0
      %v956 = vadd.f32 %v632, %v955
      %v957 = vpop.f32.mrf.mxu0
      %958 = vmatprep.mubr.f32.mxu0 0.0
      %959 = vmatmul.mubr.f32.gmra.mxu0 %v754
      %v960 = vpop.f32.mrf.mxu0
      %v961 = vadd.f32 %v637, %v960
      %v962 = vpop.f32.mrf.mxu0
      %963 = vmatprep.mubr.f32.mxu0 0.0
      %964 = vmatmul.mubr.f32.gmra.mxu0 %v757
      %v965 = vpop.f32.mrf.mxu0
      %v966 = vadd.f32 %v642, %v965
      %v967 = vpop.f32.mrf.mxu0
      %968 = vmatprep.mubr.f32.mxu0 0.0
      %969 = vmatmul.mubr.f32.gmra.mxu0 %v760
      %v970 = vpop.f32.mrf.mxu0
      %v971 = vadd.f32 %v647, %v970
      %v972 = vpop.f32.mrf.mxu0
      %973 = vmatprep.mubr.f32.mxu0 0.0
      %974 = vmatmul.mubr.f32.gmra.mxu0 %v763
      %v975 = vpop.f32.mrf.mxu0
      %v976 = vadd.f32 %v652, %v975
      %v977 = vpop.f32.mrf.mxu0
      %978 = vmatprep.mubr.f32.mxu0 0.0
      %979 = vmatmul.mubr.f32.gmra.mxu0 %v766
      %v980 = vpop.f32.mrf.mxu0
      %v981 = vadd.f32 %v657, %v980
      %v982 = vpop.f32.mrf.mxu0
      %983 = vmatprep.mubr.f32.mxu0 0.0
      %984 = vmatmul.mubr.f32.gmra.mxu0 %v769
      %v985 = vpop.f32.mrf.mxu0
      %v986 = vadd.f32 %v662, %v985
      %v987 = vpop.f32.mrf.mxu0
      %988 = vmatprep.mubr.f32.mxu0 0.0
      %989 = vmatmul.mubr.f32.gmra.mxu0 %v772
      %v990 = vpop.f32.mrf.mxu0
      %v991 = vadd.f32 %v667, %v990
      %v992 = vpop.f32.mrf.mxu0
      %993 = vmatprep.mubr.f32.mxu0 0.0
      %994 = vmatmul.mubr.f32.gmra.mxu0 %v775
      %v995 = vpop.f32.mrf.mxu0
      %v996 = vadd.f32 %v672, %v995
      %v997 = vpop.f32.mrf.mxu0
      %998 = vmatprep.mubr.f32.mxu0 0.0
      %999 = vmatmul.mubr.f32.gmra.mxu0 %v778
      %v1000 = vpop.f32.mrf.mxu0
      %v1001 = vadd.f32 %v677, %v1000
      %v1002 = vpop.f32.mrf.mxu0
      %1003 = vmatprep.mubr.f32.mxu0 0.0
      %1004 = vmatmul.mubr.f32.gmra.mxu0 %v781
      %v1005 = vpop.f32.mrf.mxu0
      %v1006 = vadd.f32 %v682, %v1005
      %v1007 = vpop.f32.mrf.mxu0
      %1008 = vmatprep.mubr.f32.mxu0 0.0
      %1009 = vmatmul.mubr.f32.gmra.mxu0 %v784
      %v1010 = vpop.f32.mrf.mxu0
      %v1011 = vadd.f32 %v687, %v1010
      %v1012 = vpop.f32.mrf.mxu0
      %1013 = vdwg.mxu0
      %v1014 = vld [vmem:[%s263] sm:$0xff]
      %v1015 = vld [vmem:[%s263 + $0x8] sm:$0xff]
      %v1016 = vld [vmem:[%s263 + $0x18] sm:$0xff]
      %v1017 = vld [vmem:[%s263 + $0x20] sm:$0xff]
      %v1018 = vld [vmem:[%s263 + $0x30] sm:$0xff]
      %v1019 = vld [vmem:[%s263 + $0x38] sm:$0xff]
      %v1020 = vld [vmem:[%s263 + $0x48] sm:$0xff]
      %v1021 = vld [vmem:[%s263 + $0x50] sm:$0xff]
      %v1022 = vld [vmem:[%s263 + $0x60] sm:$0xff]
      %v1023 = vld [vmem:[%s263 + $0x68] sm:$0xff]
      %v1024 = vld [vmem:[%s263 + $0x78] sm:$0xff]
      %v1025 = vld [vmem:[%s263 + $0x80] sm:$0xff]
      %v1026 = vld [vmem:[%s263 + $0x90] sm:$0xff]
      %v1027 = vld [vmem:[%s263 + $0x98] sm:$0xff]
      %v1028 = vld [vmem:[%s263 + $0xa8] sm:$0xff]
      %v1029 = vld [vmem:[%s263 + $0xb0] sm:$0xff]
      %v1030 = vld [vmem:[%s263 + $0xc0] sm:$0xff]
      %v1031 = vld [vmem:[%s263 + $0xc8] sm:$0xff]
      %v1032 = vld [vmem:[%s263 + $0xd8] sm:$0xff]
      %v1033 = vld [vmem:[%s263 + $0xe0] sm:$0xff]
      %v1034 = vld [vmem:[%s263 + $0xf0] sm:$0xff]
      %v1035 = vld [vmem:[%s263 + $0xf8] sm:$0xff]
      %v1036 = vld [vmem:[%s263 + $0x108] sm:$0xff]
      %v1037 = vld [vmem:[%s263 + $0x110] sm:$0xff]
      %v1038 = vld [vmem:[%s263 + $0x120] sm:$0xff]
      %v1039 = vld [vmem:[%s263 + $0x128] sm:$0xff]
      %v1040 = vld [vmem:[%s263 + $0x138] sm:$0xff]
      %v1041 = vld [vmem:[%s263 + $0x140] sm:$0xff]
      %v1042 = vld [vmem:[%s263 + $0x150] sm:$0xff]
      %v1043 = vld [vmem:[%s263 + $0x158] sm:$0xff]
      %v1044 = vld [vmem:[%s263 + $0x168] sm:$0xff]
      %v1045 = vld [vmem:[%s263 + $0x170] sm:$0xff]
      %s1046 = scalar_lea.vmem %s1, 8
      %v1047 = vld [vmem:[%s1046] sm:$0xf]
      %v1049 = vsel %vm264, %v1014, 0
      %v1052 = vsel %vm264, %v1015, 0
      %v1055 = vsel %vm264, %v1016, 0
      %v1058 = vsel %vm264, %v1017, 0
      %v1061 = vsel %vm264, %v1018, 0
      %v1064 = vsel %vm264, %v1019, 0
      %v1067 = vsel %vm264, %v1020, 0
      %v1070 = vsel %vm264, %v1021, 0
      %v1073 = vsel %vm264, %v1022, 0
      %v1076 = vsel %vm264, %v1023, 0
      %v1079 = vsel %vm264, %v1024, 0
      %v1082 = vsel %vm264, %v1025, 0
      %v1085 = vsel %vm264, %v1026, 0
      %v1088 = vsel %vm264, %v1027, 0
      %v1091 = vsel %vm264, %v1028, 0
      %v1094 = vsel %vm264, %v1029, 0
      %v1097 = vsel %vm264, %v1030, 0
      %v1100 = vsel %vm264, %v1031, 0
      %v1103 = vsel %vm264, %v1032, 0
      %v1106 = vsel %vm264, %v1033, 0
      %v1109 = vsel %vm264, %v1034, 0
      %v1112 = vsel %vm264, %v1035, 0
      %v1115 = vsel %vm264, %v1036, 0
      %v1118 = vsel %vm264, %v1037, 0
      %v1121 = vsel %vm264, %v1038, 0
      %v1124 = vsel %vm264, %v1039, 0
      %v1127 = vsel %vm264, %v1040, 0
      %v1130 = vsel %vm264, %v1041, 0
      %v1133 = vsel %vm264, %v1042, 0
      %v1136 = vsel %vm264, %v1043, 0
      %v1139 = vsel %vm264, %v1044, 0
      %v1142 = vsel %vm264, %v1045, 0
      %v1145 = vsel %vm461, %v1047, 0
      %1147 = vmatprep.subr.mxu0 0.0
      %1148 = vmatpush1.msra.mxu0 0.0
      %1149 = vmatprep.subr.mxu0 0.0
      %1150 = vmatpush1.msra.mxu0 0.0
      %1151 = vmatprep.subr.mxu0 0.0
      %1152 = vmatpush1.msra.mxu0 0.0
      %1153 = vmatprep.subr.mxu0 0.0
      %1154 = vmatpush1.msra.mxu0 0.0
      %1155 = vmatprep.subr.mxu0 0.0
      %1156 = vmatpush1.msra.mxu0 0.0
      %1157 = vmatprep.subr.mxu0 0.0
      %1158 = vmatpush1.msra.mxu0 0.0
      %1159 = vmatprep.subr.mxu0 0.0
      %1160 = vmatpush1.msra.mxu0 0.0
      %1161 = vmatprep.subr.mxu0 0.0
      %1162 = vmatpush1.msra.mxu0 0.0
      %1163 = vmatprep.subr.mxu0 0.0
      %1164 = vmatpush1.msra.mxu0 0.0
      %1165 = vmatprep.subr.mxu0 0.0
      %1166 = vmatpush1.msra.mxu0 0.0
      %1167 = vmatprep.subr.mxu0 0.0
      %1168 = vmatpush1.msra.mxu0 0.0
      %1169 = vmatprep.subr.mxu0 0.0
      %1170 = vmatpush1.msra.mxu0 0.0
      %1171 = vmatprep.subr.mxu0 0.0
      %1172 = vmatpush1.msra.mxu0 0.0
      %1173 = vmatprep.subr.mxu0 0.0
      %1174 = vmatpush1.msra.mxu0 0.0
      %1175 = vmatprep.subr.mxu0 0.0
      %1176 = vmatpush1.msra.mxu0 0.0
      %1177 = vmatprep.subr.mxu0 0.0
      %1178 = vmatpush1.msra.mxu0 %v1145
      %1179 = vmatprep.subr.mxu0 0.0
      %1180 = vmatpush2.msra.mxu0 0.0
      %1181 = vmatprep.subr.mxu0 0.0
      %1182 = vmatpush2.msra.mxu0 0.0
      %1183 = vmatprep.subr.mxu0 0.0
      %1184 = vmatpush2.msra.mxu0 0.0
      %1185 = vmatprep.subr.mxu0 0.0
      %1186 = vmatpush2.msra.mxu0 0.0
      %1187 = vmatprep.subr.mxu0 0.0
      %1188 = vmatpush2.msra.mxu0 0.0
      %1189 = vmatprep.subr.mxu0 0.0
      %1190 = vmatpush2.msra.mxu0 0.0
      %1191 = vmatprep.subr.mxu0 0.0
      %1192 = vmatpush2.msra.mxu0 0.0
      %1193 = vmatprep.subr.mxu0 0.0
      %1194 = vmatpush2.msra.mxu0 0.0
      %1195 = vmatprep.subr.mxu0 0.0
      %1196 = vmatpush2.msra.mxu0 0.0
      %1197 = vmatprep.subr.mxu0 0.0
      %1198 = vmatpush2.msra.mxu0 0.0
      %1199 = vmatprep.subr.mxu0 0.0
      %1200 = vmatpush2.msra.mxu0 0.0
      %1201 = vmatprep.subr.mxu0 0.0
      %1202 = vmatpush2.msra.mxu0 0.0
      %1203 = vmatprep.subr.mxu0 0.0
      %1204 = vmatpush2.msra.mxu0 0.0
      %1205 = vmatprep.subr.mxu0 0.0
      %1206 = vmatpush2.msra.mxu0 0.0
      %1207 = vmatprep.subr.mxu0 0.0
      %1208 = vmatpush2.msra.mxu0 0.0
      %1209 = vmatprep.subr.mxu0 0.0
      %1210 = vmatpush2.msra.mxu0 0.0
      %1211 = vmatprep.mubr.f32.mxu0 0.0
      %1212 = vmatmul.mubr.f32.gmra.mxu0 %v1049
      %v1213 = vpop.f32.mrf.mxu0
      %v1214 = vadd.f32 0.0, %v1213
      %v1215 = vpop.f32.mrf.mxu0
      %1216 = vmatprep.mubr.f32.mxu0 0.0
      %1217 = vmatmul.mubr.f32.gmra.mxu0 %v1052
      %v1218 = vpop.f32.mrf.mxu0
      %v1219 = vadd.f32 0.0, %v1218
      %v1220 = vpop.f32.mrf.mxu0
      %1221 = vmatprep.mubr.f32.mxu0 0.0
      %1222 = vmatmul.mubr.f32.gmra.mxu0 %v1055
      %v1223 = vpop.f32.mrf.mxu0
      %v1224 = vadd.f32 0.0, %v1223
      %v1225 = vpop.f32.mrf.mxu0
      %1226 = vmatprep.mubr.f32.mxu0 0.0
      %1227 = vmatmul.mubr.f32.gmra.mxu0 %v1058
      %v1228 = vpop.f32.mrf.mxu0
      %v1229 = vadd.f32 0.0, %v1228
      %v1230 = vpop.f32.mrf.mxu0
      %1231 = vmatprep.mubr.f32.mxu0 0.0
      %1232 = vmatmul.mubr.f32.gmra.mxu0 %v1061
      %v1233 = vpop.f32.mrf.mxu0
      %v1234 = vadd.f32 0.0, %v1233
      %v1235 = vpop.f32.mrf.mxu0
      %1236 = vmatprep.mubr.f32.mxu0 0.0
      %1237 = vmatmul.mubr.f32.gmra.mxu0 %v1064
      %v1238 = vpop.f32.mrf.mxu0
      %v1239 = vadd.f32 0.0, %v1238
      %v1240 = vpop.f32.mrf.mxu0
      %1241 = vmatprep.mubr.f32.mxu0 0.0
      %1242 = vmatmul.mubr.f32.gmra.mxu0 %v1067
      %v1243 = vpop.f32.mrf.mxu0
      %v1244 = vadd.f32 0.0, %v1243
      %v1245 = vpop.f32.mrf.mxu0
      %1246 = vmatprep.mubr.f32.mxu0 0.0
      %1247 = vmatmul.mubr.f32.gmra.mxu0 %v1070
      %v1248 = vpop.f32.mrf.mxu0
      %v1249 = vadd.f32 0.0, %v1248
      %v1250 = vpop.f32.mrf.mxu0
      %1251 = vmatprep.mubr.f32.mxu0 0.0
      %1252 = vmatmul.mubr.f32.gmra.mxu0 %v1073
      %v1253 = vpop.f32.mrf.mxu0
      %v1254 = vadd.f32 0.0, %v1253
      %v1255 = vpop.f32.mrf.mxu0
      %1256 = vmatprep.mubr.f32.mxu0 0.0
      %1257 = vmatmul.mubr.f32.gmra.mxu0 %v1076
      %v1258 = vpop.f32.mrf.mxu0
      %v1259 = vadd.f32 0.0, %v1258
      %v1260 = vpop.f32.mrf.mxu0
      %1261 = vmatprep.mubr.f32.mxu0 0.0
      %1262 = vmatmul.mubr.f32.gmra.mxu0 %v1079
      %v1263 = vpop.f32.mrf.mxu0
      %v1264 = vadd.f32 0.0, %v1263
      %v1265 = vpop.f32.mrf.mxu0
      %1266 = vmatprep.mubr.f32.mxu0 0.0
      %1267 = vmatmul.mubr.f32.gmra.mxu0 %v1082
      %v1268 = vpop.f32.mrf.mxu0
      %v1269 = vadd.f32 0.0, %v1268
      %v1270 = vpop.f32.mrf.mxu0
      %1271 = vmatprep.mubr.f32.mxu0 0.0
      %1272 = vmatmul.mubr.f32.gmra.mxu0 %v1085
      %v1273 = vpop.f32.mrf.mxu0
      %v1274 = vadd.f32 0.0, %v1273
      %v1275 = vpop.f32.mrf.mxu0
      %1276 = vmatprep.mubr.f32.mxu0 0.0
      %1277 = vmatmul.mubr.f32.gmra.mxu0 %v1088
      %v1278 = vpop.f32.mrf.mxu0
      %v1279 = vadd.f32 0.0, %v1278
      %v1280 = vpop.f32.mrf.mxu0
      %1281 = vmatprep.mubr.f32.mxu0 0.0
      %1282 = vmatmul.mubr.f32.gmra.mxu0 %v1091
      %v1283 = vpop.f32.mrf.mxu0
      %v1284 = vadd.f32 0.0, %v1283
      %v1285 = vpop.f32.mrf.mxu0
      %1286 = vmatprep.mubr.f32.mxu0 0.0
      %1287 = vmatmul.mubr.f32.gmra.mxu0 %v1094
      %v1288 = vpop.f32.mrf.mxu0
      %v1289 = vadd.f32 0.0, %v1288
      %v1290 = vpop.f32.mrf.mxu0
      %1291 = vmatprep.mubr.f32.mxu0 0.0
      %1292 = vmatmul.mubr.f32.gmra.mxu0 %v1097
      %v1293 = vpop.f32.mrf.mxu0
      %v1294 = vadd.f32 0.0, %v1293
      %v1295 = vpop.f32.mrf.mxu0
      %1296 = vmatprep.mubr.f32.mxu0 0.0
      %1297 = vmatmul.mubr.f32.gmra.mxu0 %v1100
      %v1298 = vpop.f32.mrf.mxu0
      %v1299 = vadd.f32 0.0, %v1298
      %v1300 = vpop.f32.mrf.mxu0
      %1301 = vmatprep.mubr.f32.mxu0 0.0
      %1302 = vmatmul.mubr.f32.gmra.mxu0 %v1103
      %v1303 = vpop.f32.mrf.mxu0
      %v1304 = vadd.f32 0.0, %v1303
      %v1305 = vpop.f32.mrf.mxu0
      %1306 = vmatprep.mubr.f32.mxu0 0.0
      %1307 = vmatmul.mubr.f32.gmra.mxu0 %v1106
      %v1308 = vpop.f32.mrf.mxu0
      %v1309 = vadd.f32 0.0, %v1308
      %v1310 = vpop.f32.mrf.mxu0
      %1311 = vmatprep.mubr.f32.mxu0 0.0
      %1312 = vmatmul.mubr.f32.gmra.mxu0 %v1109
      %v1313 = vpop.f32.mrf.mxu0
      %v1314 = vadd.f32 0.0, %v1313
      %v1315 = vpop.f32.mrf.mxu0
      %1316 = vmatprep.mubr.f32.mxu0 0.0
      %1317 = vmatmul.mubr.f32.gmra.mxu0 %v1112
      %v1318 = vpop.f32.mrf.mxu0
      %v1319 = vadd.f32 0.0, %v1318
      %v1320 = vpop.f32.mrf.mxu0
      %1321 = vmatprep.mubr.f32.mxu0 0.0
      %1322 = vmatmul.mubr.f32.gmra.mxu0 %v1115
      %v1323 = vpop.f32.mrf.mxu0
      %v1324 = vadd.f32 0.0, %v1323
      %v1325 = vpop.f32.mrf.mxu0
      %1326 = vmatprep.mubr.f32.mxu0 0.0
      %1327 = vmatmul.mubr.f32.gmra.mxu0 %v1118
      %v1328 = vpop.f32.mrf.mxu0
      %v1329 = vadd.f32 0.0, %v1328
      %v1330 = vpop.f32.mrf.mxu0
      %1331 = vmatprep.mubr.f32.mxu0 0.0
      %1332 = vmatmul.mubr.f32.gmra.mxu0 %v1121
      %v1333 = vpop.f32.mrf.mxu0
      %v1334 = vadd.f32 0.0, %v1333
      %v1335 = vpop.f32.mrf.mxu0
      %1336 = vmatprep.mubr.f32.mxu0 0.0
      %1337 = vmatmul.mubr.f32.gmra.mxu0 %v1124
      %v1338 = vpop.f32.mrf.mxu0
      %v1339 = vadd.f32 0.0, %v1338
      %v1340 = vpop.f32.mrf.mxu0
      %1341 = vmatprep.mubr.f32.mxu0 0.0
      %1342 = vmatmul.mubr.f32.gmra.mxu0 %v1127
      %v1343 = vpop.f32.mrf.mxu0
      %v1344 = vadd.f32 0.0, %v1343
      %v1345 = vpop.f32.mrf.mxu0
      %1346 = vmatprep.mubr.f32.mxu0 0.0
      %1347 = vmatmul.mubr.f32.gmra.mxu0 %v1130
      %v1348 = vpop.f32.mrf.mxu0
      %v1349 = vadd.f32 0.0, %v1348
      %v1350 = vpop.f32.mrf.mxu0
      %1351 = vmatprep.mubr.f32.mxu0 0.0
      %1352 = vmatmul.mubr.f32.gmra.mxu0 %v1133
      %v1353 = vpop.f32.mrf.mxu0
      %v1354 = vadd.f32 0.0, %v1353
      %v1355 = vpop.f32.mrf.mxu0
      %1356 = vmatprep.mubr.f32.mxu0 0.0
      %1357 = vmatmul.mubr.f32.gmra.mxu0 %v1136
      %v1358 = vpop.f32.mrf.mxu0
      %v1359 = vadd.f32 0.0, %v1358
      %v1360 = vpop.f32.mrf.mxu0
      %1361 = vmatprep.mubr.f32.mxu0 0.0
      %1362 = vmatmul.mubr.f32.gmra.mxu0 %v1139
      %v1363 = vpop.f32.mrf.mxu0
      %v1364 = vadd.f32 0.0, %v1363
      %v1365 = vpop.f32.mrf.mxu0
      %1366 = vmatprep.mubr.f32.mxu0 0.0
      %1367 = vmatmul.mubr.f32.gmra.mxu0 %v1142
      %v1368 = vpop.f32.mrf.mxu0
      %v1369 = vadd.f32 0.0, %v1368
      %v1370 = vpop.f32.mrf.mxu0
      %1371 = vdwg.mxu0
      %v1372 = vadd.f32 %v856, %v1214
      %v1373 = vadd.f32 %v861, %v1219
      %v1374 = vadd.f32 %v866, %v1224
      %v1375 = vadd.f32 %v871, %v1229
      %v1376 = vadd.f32 %v876, %v1234
      %v1377 = vadd.f32 %v881, %v1239
      %v1378 = vadd.f32 %v886, %v1244
      %v1379 = vadd.f32 %v891, %v1249
      %v1380 = vadd.f32 %v896, %v1254
      %v1381 = vadd.f32 %v901, %v1259
      %v1382 = vadd.f32 %v906, %v1264
      %v1383 = vadd.f32 %v911, %v1269
      %v1384 = vadd.f32 %v916, %v1274
      %v1385 = vadd.f32 %v921, %v1279
      %v1386 = vadd.f32 %v926, %v1284
      %v1387 = vadd.f32 %v931, %v1289
      %v1388 = vadd.f32 %v936, %v1294
      %v1389 = vadd.f32 %v941, %v1299
      %v1390 = vadd.f32 %v946, %v1304
      %v1391 = vadd.f32 %v951, %v1309
      %v1392 = vadd.f32 %v956, %v1314
      %v1393 = vadd.f32 %v961, %v1319
      %v1394 = vadd.f32 %v966, %v1324
      %v1395 = vadd.f32 %v971, %v1329
      %v1396 = vadd.f32 %v976, %v1334
      %v1397 = vadd.f32 %v981, %v1339
      %v1398 = vadd.f32 %v986, %v1344
      %v1399 = vadd.f32 %v991, %v1349
      %v1400 = vadd.f32 %v996, %v1354
      %v1401 = vadd.f32 %v1001, %v1359
      %v1402 = vadd.f32 %v1006, %v1364
      %v1403 = vadd.f32 %v1011, %v1369
      %v1404 = vld [vmem:[%s263 + $0x1] sm:$0xff]
      %v1405 = vld [vmem:[%s263 + $0x9] sm:$0xff]
      %v1406 = vld [vmem:[%s263 + $0x19] sm:$0xff]
      %v1407 = vld [vmem:[%s263 + $0x21] sm:$0xff]
      %v1408 = vld [vmem:[%s263 + $0x31] sm:$0xff]
      %v1409 = vld [vmem:[%s263 + $0x39] sm:$0xff]
      %v1410 = vld [vmem:[%s263 + $0x49] sm:$0xff]
      %v1411 = vld [vmem:[%s263 + $0x51] sm:$0xff]
      %v1412 = vld [vmem:[%s263 + $0x61] sm:$0xff]
      %v1413 = vld [vmem:[%s263 + $0x69] sm:$0xff]
      %v1414 = vld [vmem:[%s263 + $0x79] sm:$0xff]
      %v1415 = vld [vmem:[%s263 + $0x81] sm:$0xff]
      %v1416 = vld [vmem:[%s263 + $0x91] sm:$0xff]
      %v1417 = vld [vmem:[%s263 + $0x99] sm:$0xff]
      %v1418 = vld [vmem:[%s263 + $0xa9] sm:$0xff]
      %v1419 = vld [vmem:[%s263 + $0xb1] sm:$0xff]
      %v1420 = vld [vmem:[%s263 + $0xc1] sm:$0xff]
      %v1421 = vld [vmem:[%s263 + $0xc9] sm:$0xff]
      %v1422 = vld [vmem:[%s263 + $0xd9] sm:$0xff]
      %v1423 = vld [vmem:[%s263 + $0xe1] sm:$0xff]
      %v1424 = vld [vmem:[%s263 + $0xf1] sm:$0xff]
      %v1425 = vld [vmem:[%s263 + $0xf9] sm:$0xff]
      %v1426 = vld [vmem:[%s263 + $0x109] sm:$0xff]
      %v1427 = vld [vmem:[%s263 + $0x111] sm:$0xff]
      %v1428 = vld [vmem:[%s263 + $0x121] sm:$0xff]
      %v1429 = vld [vmem:[%s263 + $0x129] sm:$0xff]
      %v1430 = vld [vmem:[%s263 + $0x139] sm:$0xff]
      %v1431 = vld [vmem:[%s263 + $0x141] sm:$0xff]
      %v1432 = vld [vmem:[%s263 + $0x151] sm:$0xff]
      %v1433 = vld [vmem:[%s263 + $0x159] sm:$0xff]
      %v1434 = vld [vmem:[%s263 + $0x169] sm:$0xff]
      %v1435 = vld [vmem:[%s263 + $0x171] sm:$0xff]
      %s1436 = scalar_lea.vmem %s1, 12
      %v1437 = vld [vmem:[%s1436] sm:$0xf]
      %v1439 = vsel %vm264, %v1404, 0
      %v1442 = vsel %vm264, %v1405, 0
      %v1445 = vsel %vm264, %v1406, 0
      %v1448 = vsel %vm264, %v1407, 0
      %v1451 = vsel %vm264, %v1408, 0
      %v1454 = vsel %vm264, %v1409, 0
      %v1457 = vsel %vm264, %v1410, 0
      %v1460 = vsel %vm264, %v1411, 0
      %v1463 = vsel %vm264, %v1412, 0
      %v1466 = vsel %vm264, %v1413, 0
      %v1469 = vsel %vm264, %v1414, 0
      %v1472 = vsel %vm264, %v1415, 0
      %v1475 = vsel %vm264, %v1416, 0
      %v1478 = vsel %vm264, %v1417, 0
      %v1481 = vsel %vm264, %v1418, 0
      %v1484 = vsel %vm264, %v1419, 0
      %v1487 = vsel %vm264, %v1420, 0
      %v1490 = vsel %vm264, %v1421, 0
      %v1493 = vsel %vm264, %v1422, 0
      %v1496 = vsel %vm264, %v1423, 0
      %v1499 = vsel %vm264, %v1424, 0
      %v1502 = vsel %vm264, %v1425, 0
      %v1505 = vsel %vm264, %v1426, 0
      %v1508 = vsel %vm264, %v1427, 0
      %v1511 = vsel %vm264, %v1428, 0
      %v1514 = vsel %vm264, %v1429, 0
      %v1517 = vsel %vm264, %v1430, 0
      %v1520 = vsel %vm264, %v1431, 0
      %v1523 = vsel %vm264, %v1432, 0
      %v1526 = vsel %vm264, %v1433, 0
      %v1529 = vsel %vm264, %v1434, 0
      %v1532 = vsel %vm264, %v1435, 0
      %v1535 = vsel %vm461, %v1437, 0
      %1537 = vmatprep.subr.mxu0 0.0
      %1538 = vmatpush1.msra.mxu0 0.0
      %1539 = vmatprep.subr.mxu0 0.0
      %1540 = vmatpush1.msra.mxu0 0.0
      %1541 = vmatprep.subr.mxu0 0.0
      %1542 = vmatpush1.msra.mxu0 0.0
      %1543 = vmatprep.subr.mxu0 0.0
      %1544 = vmatpush1.msra.mxu0 0.0
      %1545 = vmatprep.subr.mxu0 0.0
      %1546 = vmatpush1.msra.mxu0 0.0
      %1547 = vmatprep.subr.mxu0 0.0
      %1548 = vmatpush1.msra.mxu0 0.0
      %1549 = vmatprep.subr.mxu0 0.0
      %1550 = vmatpush1.msra.mxu0 0.0
      %1551 = vmatprep.subr.mxu0 0.0
      %1552 = vmatpush1.msra.mxu0 0.0
      %1553 = vmatprep.subr.mxu0 0.0
      %1554 = vmatpush1.msra.mxu0 0.0
      %1555 = vmatprep.subr.mxu0 0.0
      %1556 = vmatpush1.msra.mxu0 0.0
      %1557 = vmatprep.subr.mxu0 0.0
      %1558 = vmatpush1.msra.mxu0 0.0
      %1559 = vmatprep.subr.mxu0 0.0
      %1560 = vmatpush1.msra.mxu0 0.0
      %1561 = vmatprep.subr.mxu0 0.0
      %1562 = vmatpush1.msra.mxu0 0.0
      %1563 = vmatprep.subr.mxu0 0.0
      %1564 = vmatpush1.msra.mxu0 0.0
      %1565 = vmatprep.subr.mxu0 0.0
      %1566 = vmatpush1.msra.mxu0 0.0
      %1567 = vmatprep.subr.mxu0 0.0
      %1568 = vmatpush1.msra.mxu0 %v1535
      %1569 = vmatprep.subr.mxu0 0.0
      %1570 = vmatpush2.msra.mxu0 0.0
      %1571 = vmatprep.subr.mxu0 0.0
      %1572 = vmatpush2.msra.mxu0 0.0
      %1573 = vmatprep.subr.mxu0 0.0
      %1574 = vmatpush2.msra.mxu0 0.0
      %1575 = vmatprep.subr.mxu0 0.0
      %1576 = vmatpush2.msra.mxu0 0.0
      %1577 = vmatprep.subr.mxu0 0.0
      %1578 = vmatpush2.msra.mxu0 0.0
      %1579 = vmatprep.subr.mxu0 0.0
      %1580 = vmatpush2.msra.mxu0 0.0
      %1581 = vmatprep.subr.mxu0 0.0
      %1582 = vmatpush2.msra.mxu0 0.0
      %1583 = vmatprep.subr.mxu0 0.0
      %1584 = vmatpush2.msra.mxu0 0.0
      %1585 = vmatprep.subr.mxu0 0.0
      %1586 = vmatpush2.msra.mxu0 0.0
      %1587 = vmatprep.subr.mxu0 0.0
      %1588 = vmatpush2.msra.mxu0 0.0
      %1589 = vmatprep.subr.mxu0 0.0
      %1590 = vmatpush2.msra.mxu0 0.0
      %1591 = vmatprep.subr.mxu0 0.0
      %1592 = vmatpush2.msra.mxu0 0.0
      %1593 = vmatprep.subr.mxu0 0.0
      %1594 = vmatpush2.msra.mxu0 0.0
      %1595 = vmatprep.subr.mxu0 0.0
      %1596 = vmatpush2.msra.mxu0 0.0
      %1597 = vmatprep.subr.mxu0 0.0
      %1598 = vmatpush2.msra.mxu0 0.0
      %1599 = vmatprep.subr.mxu0 0.0
      %1600 = vmatpush2.msra.mxu0 0.0
      %1601 = vmatprep.mubr.f32.mxu0 0.0
      %1602 = vmatmul.mubr.f32.gmra.mxu0 %v1439
      %v1603 = vpop.f32.mrf.mxu0
      %v1604 = vadd.f32 0.0, %v1603
      %v1605 = vpop.f32.mrf.mxu0
      %1606 = vmatprep.mubr.f32.mxu0 0.0
      %1607 = vmatmul.mubr.f32.gmra.mxu0 %v1442
      %v1608 = vpop.f32.mrf.mxu0
      %v1609 = vadd.f32 0.0, %v1608
      %v1610 = vpop.f32.mrf.mxu0
      %1611 = vmatprep.mubr.f32.mxu0 0.0
      %1612 = vmatmul.mubr.f32.gmra.mxu0 %v1445
      %v1613 = vpop.f32.mrf.mxu0
      %v1614 = vadd.f32 0.0, %v1613
      %v1615 = vpop.f32.mrf.mxu0
      %1616 = vmatprep.mubr.f32.mxu0 0.0
      %1617 = vmatmul.mubr.f32.gmra.mxu0 %v1448
      %v1618 = vpop.f32.mrf.mxu0
      %v1619 = vadd.f32 0.0, %v1618
      %v1620 = vpop.f32.mrf.mxu0
      %1621 = vmatprep.mubr.f32.mxu0 0.0
      %1622 = vmatmul.mubr.f32.gmra.mxu0 %v1451
      %v1623 = vpop.f32.mrf.mxu0
      %v1624 = vadd.f32 0.0, %v1623
      %v1625 = vpop.f32.mrf.mxu0
      %1626 = vmatprep.mubr.f32.mxu0 0.0
      %1627 = vmatmul.mubr.f32.gmra.mxu0 %v1454
      %v1628 = vpop.f32.mrf.mxu0
      %v1629 = vadd.f32 0.0, %v1628
      %v1630 = vpop.f32.mrf.mxu0
      %1631 = vmatprep.mubr.f32.mxu0 0.0
      %1632 = vmatmul.mubr.f32.gmra.mxu0 %v1457
      %v1633 = vpop.f32.mrf.mxu0
      %v1634 = vadd.f32 0.0, %v1633
      %v1635 = vpop.f32.mrf.mxu0
      %1636 = vmatprep.mubr.f32.mxu0 0.0
      %1637 = vmatmul.mubr.f32.gmra.mxu0 %v1460
      %v1638 = vpop.f32.mrf.mxu0
      %v1639 = vadd.f32 0.0, %v1638
      %v1640 = vpop.f32.mrf.mxu0
      %1641 = vmatprep.mubr.f32.mxu0 0.0
      %1642 = vmatmul.mubr.f32.gmra.mxu0 %v1463
      %v1643 = vpop.f32.mrf.mxu0
      %v1644 = vadd.f32 0.0, %v1643
      %v1645 = vpop.f32.mrf.mxu0
      %1646 = vmatprep.mubr.f32.mxu0 0.0
      %1647 = vmatmul.mubr.f32.gmra.mxu0 %v1466
      %v1648 = vpop.f32.mrf.mxu0
      %v1649 = vadd.f32 0.0, %v1648
      %v1650 = vpop.f32.mrf.mxu0
      %1651 = vmatprep.mubr.f32.mxu0 0.0
      %1652 = vmatmul.mubr.f32.gmra.mxu0 %v1469
      %v1653 = vpop.f32.mrf.mxu0
      %v1654 = vadd.f32 0.0, %v1653
      %v1655 = vpop.f32.mrf.mxu0
      %1656 = vmatprep.mubr.f32.mxu0 0.0
      %1657 = vmatmul.mubr.f32.gmra.mxu0 %v1472
      %v1658 = vpop.f32.mrf.mxu0
      %v1659 = vadd.f32 0.0, %v1658
      %v1660 = vpop.f32.mrf.mxu0
      %1661 = vmatprep.mubr.f32.mxu0 0.0
      %1662 = vmatmul.mubr.f32.gmra.mxu0 %v1475
      %v1663 = vpop.f32.mrf.mxu0
      %v1664 = vadd.f32 0.0, %v1663
      %v1665 = vpop.f32.mrf.mxu0
      %1666 = vmatprep.mubr.f32.mxu0 0.0
      %1667 = vmatmul.mubr.f32.gmra.mxu0 %v1478
      %v1668 = vpop.f32.mrf.mxu0
      %v1669 = vadd.f32 0.0, %v1668
      %v1670 = vpop.f32.mrf.mxu0
      %1671 = vmatprep.mubr.f32.mxu0 0.0
      %1672 = vmatmul.mubr.f32.gmra.mxu0 %v1481
      %v1673 = vpop.f32.mrf.mxu0
      %v1674 = vadd.f32 0.0, %v1673
      %v1675 = vpop.f32.mrf.mxu0
      %1676 = vmatprep.mubr.f32.mxu0 0.0
      %1677 = vmatmul.mubr.f32.gmra.mxu0 %v1484
      %v1678 = vpop.f32.mrf.mxu0
      %v1679 = vadd.f32 0.0, %v1678
      %v1680 = vpop.f32.mrf.mxu0
      %1681 = vmatprep.mubr.f32.mxu0 0.0
      %1682 = vmatmul.mubr.f32.gmra.mxu0 %v1487
      %v1683 = vpop.f32.mrf.mxu0
      %v1684 = vadd.f32 0.0, %v1683
      %v1685 = vpop.f32.mrf.mxu0
      %1686 = vmatprep.mubr.f32.mxu0 0.0
      %1687 = vmatmul.mubr.f32.gmra.mxu0 %v1490
      %v1688 = vpop.f32.mrf.mxu0
      %v1689 = vadd.f32 0.0, %v1688
      %v1690 = vpop.f32.mrf.mxu0
      %1691 = vmatprep.mubr.f32.mxu0 0.0
      %1692 = vmatmul.mubr.f32.gmra.mxu0 %v1493
      %v1693 = vpop.f32.mrf.mxu0
      %v1694 = vadd.f32 0.0, %v1693
      %v1695 = vpop.f32.mrf.mxu0
      %1696 = vmatprep.mubr.f32.mxu0 0.0
      %1697 = vmatmul.mubr.f32.gmra.mxu0 %v1496
      %v1698 = vpop.f32.mrf.mxu0
      %v1699 = vadd.f32 0.0, %v1698
      %v1700 = vpop.f32.mrf.mxu0
      %1701 = vmatprep.mubr.f32.mxu0 0.0
      %1702 = vmatmul.mubr.f32.gmra.mxu0 %v1499
      %v1703 = vpop.f32.mrf.mxu0
      %v1704 = vadd.f32 0.0, %v1703
      %v1705 = vpop.f32.mrf.mxu0
      %1706 = vmatprep.mubr.f32.mxu0 0.0
      %1707 = vmatmul.mubr.f32.gmra.mxu0 %v1502
      %v1708 = vpop.f32.mrf.mxu0
      %v1709 = vadd.f32 0.0, %v1708
      %v1710 = vpop.f32.mrf.mxu0
      %1711 = vmatprep.mubr.f32.mxu0 0.0
      %1712 = vmatmul.mubr.f32.gmra.mxu0 %v1505
      %v1713 = vpop.f32.mrf.mxu0
      %v1714 = vadd.f32 0.0, %v1713
      %v1715 = vpop.f32.mrf.mxu0
      %1716 = vmatprep.mubr.f32.mxu0 0.0
      %1717 = vmatmul.mubr.f32.gmra.mxu0 %v1508
      %v1718 = vpop.f32.mrf.mxu0
      %v1719 = vadd.f32 0.0, %v1718
      %v1720 = vpop.f32.mrf.mxu0
      %1721 = vmatprep.mubr.f32.mxu0 0.0
      %1722 = vmatmul.mubr.f32.gmra.mxu0 %v1511
      %v1723 = vpop.f32.mrf.mxu0
      %v1724 = vadd.f32 0.0, %v1723
      %v1725 = vpop.f32.mrf.mxu0
      %1726 = vmatprep.mubr.f32.mxu0 0.0
      %1727 = vmatmul.mubr.f32.gmra.mxu0 %v1514
      %v1728 = vpop.f32.mrf.mxu0
      %v1729 = vadd.f32 0.0, %v1728
      %v1730 = vpop.f32.mrf.mxu0
      %1731 = vmatprep.mubr.f32.mxu0 0.0
      %1732 = vmatmul.mubr.f32.gmra.mxu0 %v1517
      %v1733 = vpop.f32.mrf.mxu0
      %v1734 = vadd.f32 0.0, %v1733
      %v1735 = vpop.f32.mrf.mxu0
      %1736 = vmatprep.mubr.f32.mxu0 0.0
      %1737 = vmatmul.mubr.f32.gmra.mxu0 %v1520
      %v1738 = vpop.f32.mrf.mxu0
      %v1739 = vadd.f32 0.0, %v1738
      %v1740 = vpop.f32.mrf.mxu0
      %1741 = vmatprep.mubr.f32.mxu0 0.0
      %1742 = vmatmul.mubr.f32.gmra.mxu0 %v1523
      %v1743 = vpop.f32.mrf.mxu0
      %v1744 = vadd.f32 0.0, %v1743
      %v1745 = vpop.f32.mrf.mxu0
      %1746 = vmatprep.mubr.f32.mxu0 0.0
      %1747 = vmatmul.mubr.f32.gmra.mxu0 %v1526
      %v1748 = vpop.f32.mrf.mxu0
      %v1749 = vadd.f32 0.0, %v1748
      %v1750 = vpop.f32.mrf.mxu0
      %1751 = vmatprep.mubr.f32.mxu0 0.0
      %1752 = vmatmul.mubr.f32.gmra.mxu0 %v1529
      %v1753 = vpop.f32.mrf.mxu0
      %v1754 = vadd.f32 0.0, %v1753
      %v1755 = vpop.f32.mrf.mxu0
      %1756 = vmatprep.mubr.f32.mxu0 0.0
      %1757 = vmatmul.mubr.f32.gmra.mxu0 %v1532
      %v1758 = vpop.f32.mrf.mxu0
      %v1759 = vadd.f32 0.0, %v1758
      %v1760 = vpop.f32.mrf.mxu0
      %1761 = vdwg.mxu0
      %v1762 = vadd.f32 %v1372, %v1604
      %v1763 = vadd.f32 %v1373, %v1609
      %v1764 = vadd.f32 %v1374, %v1614
      %v1765 = vadd.f32 %v1375, %v1619
      %v1766 = vadd.f32 %v1376, %v1624
      %v1767 = vadd.f32 %v1377, %v1629
      %v1768 = vadd.f32 %v1378, %v1634
      %v1769 = vadd.f32 %v1379, %v1639
      %v1770 = vadd.f32 %v1380, %v1644
      %v1771 = vadd.f32 %v1381, %v1649
      %v1772 = vadd.f32 %v1382, %v1654
      %v1773 = vadd.f32 %v1383, %v1659
      %v1774 = vadd.f32 %v1384, %v1664
      %v1775 = vadd.f32 %v1385, %v1669
      %v1776 = vadd.f32 %v1386, %v1674
      %v1777 = vadd.f32 %v1387, %v1679
      %v1778 = vadd.f32 %v1388, %v1684
      %v1779 = vadd.f32 %v1389, %v1689
      %v1780 = vadd.f32 %v1390, %v1694
      %v1781 = vadd.f32 %v1391, %v1699
      %v1782 = vadd.f32 %v1392, %v1704
      %v1783 = vadd.f32 %v1393, %v1709
      %v1784 = vadd.f32 %v1394, %v1714
      %v1785 = vadd.f32 %v1395, %v1719
      %v1786 = vadd.f32 %v1396, %v1724
      %v1787 = vadd.f32 %v1397, %v1729
      %v1788 = vadd.f32 %v1398, %v1734
      %v1789 = vadd.f32 %v1399, %v1739
      %v1790 = vadd.f32 %v1400, %v1744
      %v1791 = vadd.f32 %v1401, %v1749
      %v1792 = vadd.f32 %v1402, %v1754
      %v1793 = vadd.f32 %v1403, %v1759
      %v1795 = vlaneseq
      %v1796 = vshrl.u32 %v1795, 7
      %v1797 = vsub.s32 0, %v1796
      %v1798 = vrot.slane %v297, %v1797
      %v1800 = vadd.f32 %v1762, %v1798
      %v1801 = vadd.f32 %v1763, %v1798
      %v1802 = vadd.f32 %v1764, %v1798
      %v1803 = vadd.f32 %v1765, %v1798
      %v1804 = vadd.f32 %v1766, %v1798
      %v1805 = vadd.f32 %v1767, %v1798
      %v1806 = vadd.f32 %v1768, %v1798
      %v1807 = vadd.f32 %v1769, %v1798
      %v1808 = vadd.f32 %v1770, %v1798
      %v1809 = vadd.f32 %v1771, %v1798
      %v1810 = vadd.f32 %v1772, %v1798
      %v1811 = vadd.f32 %v1773, %v1798
      %v1812 = vadd.f32 %v1774, %v1798
      %v1813 = vadd.f32 %v1775, %v1798
      %v1814 = vadd.f32 %v1776, %v1798
      %v1815 = vadd.f32 %v1777, %v1798
      %v1816 = vadd.f32 %v1778, %v1798
      %v1817 = vadd.f32 %v1779, %v1798
      %v1818 = vadd.f32 %v1780, %v1798
      %v1819 = vadd.f32 %v1781, %v1798
      %v1820 = vadd.f32 %v1782, %v1798
      %v1821 = vadd.f32 %v1783, %v1798
      %v1822 = vadd.f32 %v1784, %v1798
      %v1823 = vadd.f32 %v1785, %v1798
      %v1824 = vadd.f32 %v1786, %v1798
      %v1825 = vadd.f32 %v1787, %v1798
      %v1826 = vadd.f32 %v1788, %v1798
      %v1827 = vadd.f32 %v1789, %v1798
      %v1828 = vadd.f32 %v1790, %v1798
      %v1829 = vadd.f32 %v1791, %v1798
      %v1830 = vadd.f32 %v1792, %v1798
      %v1831 = vadd.f32 %v1793, %v1798
      %1832 = vst.msk [vmem:[%s170] sm:$0xff] %vm264, %v1800
      %1833 = vst.msk [vmem:[%s170 + $0x8] sm:$0xff] %vm264, %v1801
      %1834 = vst.msk [vmem:[%s170 + $0x10] sm:$0xff] %vm264, %v1802
      %1835 = vst.msk [vmem:[%s170 + $0x18] sm:$0xff] %vm264, %v1803
      %1836 = vst.msk [vmem:[%s170 + $0x20] sm:$0xff] %vm264, %v1804
      %1837 = vst.msk [vmem:[%s170 + $0x28] sm:$0xff] %vm264, %v1805
      %1838 = vst.msk [vmem:[%s170 + $0x30] sm:$0xff] %vm264, %v1806
      %1839 = vst.msk [vmem:[%s170 + $0x38] sm:$0xff] %vm264, %v1807
      %1840 = vst.msk [vmem:[%s170 + $0x40] sm:$0xff] %vm264, %v1808
      %1841 = vst.msk [vmem:[%s170 + $0x48] sm:$0xff] %vm264, %v1809
      %1842 = vst.msk [vmem:[%s170 + $0x50] sm:$0xff] %vm264, %v1810
      %1843 = vst.msk [vmem:[%s170 + $0x58] sm:$0xff] %vm264, %v1811
      %1844 = vst.msk [vmem:[%s170 + $0x60] sm:$0xff] %vm264, %v1812
      %1845 = vst.msk [vmem:[%s170 + $0x68] sm:$0xff] %vm264, %v1813
      %1846 = vst.msk [vmem:[%s170 + $0x70] sm:$0xff] %vm264, %v1814
      %1847 = vst.msk [vmem:[%s170 + $0x78] sm:$0xff] %vm264, %v1815
      %1848 = vst.msk [vmem:[%s170 + $0x80] sm:$0xff] %vm264, %v1816
      %1849 = vst.msk [vmem:[%s170 + $0x88] sm:$0xff] %vm264, %v1817
      %1850 = vst.msk [vmem:[%s170 + $0x90] sm:$0xff] %vm264, %v1818
      %1851 = vst.msk [vmem:[%s170 + $0x98] sm:$0xff] %vm264, %v1819
      %1852 = vst.msk [vmem:[%s170 + $0xa0] sm:$0xff] %vm264, %v1820
      %1853 = vst.msk [vmem:[%s170 + $0xa8] sm:$0xff] %vm264, %v1821
      %1854 = vst.msk [vmem:[%s170 + $0xb0] sm:$0xff] %vm264, %v1822
      %1855 = vst.msk [vmem:[%s170 + $0xb8] sm:$0xff] %vm264, %v1823
      %1856 = vst.msk [vmem:[%s170 + $0xc0] sm:$0xff] %vm264, %v1824
      %1857 = vst.msk [vmem:[%s170 + $0xc8] sm:$0xff] %vm264, %v1825
      %1858 = vst.msk [vmem:[%s170 + $0xd0] sm:$0xff] %vm264, %v1826
      %1859 = vst.msk [vmem:[%s170 + $0xd8] sm:$0xff] %vm264, %v1827
      %1860 = vst.msk [vmem:[%s170 + $0xe0] sm:$0xff] %vm264, %v1828
      %1861 = vst.msk [vmem:[%s170 + $0xe8] sm:$0xff] %vm264, %v1829
      %1862 = vst.msk [vmem:[%s170 + $0xf0] sm:$0xff] %vm264, %v1830
      %1863 = vst.msk [vmem:[%s170 + $0xf8] sm:$0xff] %vm264, %v1831
      %v1864 = vld [vmem:[#allocation2 + $0x1] sm:$0xff]
      %v1865 = vld [vmem:[#allocation2 + $0x9] sm:$0xff]
      %v1866 = vld [vmem:[#allocation2 + $0x19] sm:$0xff]
      %v1867 = vld [vmem:[#allocation2 + $0x21] sm:$0xff]
      %v1868 = vld [vmem:[#allocation2 + $0x31] sm:$0xff]
      %v1869 = vld [vmem:[#allocation2 + $0x39] sm:$0xff]
      %v1870 = vld [vmem:[#allocation2 + $0x49] sm:$0xff]
      %v1871 = vld [vmem:[#allocation2 + $0x51] sm:$0xff]
      %v1872 = vld [vmem:[#allocation2 + $0x61] sm:$0xff]
      %v1873 = vld [vmem:[#allocation2 + $0x69] sm:$0xff]
      %v1874 = vld [vmem:[#allocation2 + $0x79] sm:$0xff]
      %v1875 = vld [vmem:[#allocation2 + $0x81] sm:$0xff]
      %v1876 = vld [vmem:[#allocation2 + $0x91] sm:$0xff]
      %v1877 = vld [vmem:[#allocation2 + $0x99] sm:$0xff]
      %v1878 = vld [vmem:[#allocation2 + $0xa9] sm:$0xff]
      %v1879 = vld [vmem:[#allocation2 + $0xb1] sm:$0xff]
      %v1880 = vld [vmem:[#allocation2 + $0xc1] sm:$0xff]
      %v1881 = vld [vmem:[#allocation2 + $0xc9] sm:$0xff]
      %v1882 = vld [vmem:[#allocation2 + $0xd9] sm:$0xff]
      %v1883 = vld [vmem:[#allocation2 + $0xe1] sm:$0xff]
      %v1884 = vld [vmem:[#allocation2 + $0xf1] sm:$0xff]
      %v1885 = vld [vmem:[#allocation2 + $0xf9] sm:$0xff]
      %v1886 = vld [vmem:[#allocation2 + $0x109] sm:$0xff]
      %v1887 = vld [vmem:[#allocation2 + $0x111] sm:$0xff]
      %v1888 = vld [vmem:[#allocation2 + $0x121] sm:$0xff]
      %v1889 = vld [vmem:[#allocation2 + $0x129] sm:$0xff]
      %v1890 = vld [vmem:[#allocation2 + $0x139] sm:$0xff]
      %v1891 = vld [vmem:[#allocation2 + $0x141] sm:$0xff]
      %v1892 = vld [vmem:[#allocation2 + $0x151] sm:$0xff]
      %v1893 = vld [vmem:[#allocation2 + $0x159] sm:$0xff]
      %v1894 = vld [vmem:[#allocation2 + $0x169] sm:$0xff]
      %v1895 = vld [vmem:[#allocation2 + $0x171] sm:$0xff]
      %s1896 = scalar_lea.vmem %s1, 16
      %v1897 = vld [vmem:[%s1896] sm:$0xf]
      %v1898 = vld [vmem:[#allocation2 + $0x2] sm:$0xff]
      %v1899 = vld [vmem:[#allocation2 + $0xa] sm:$0xff]
      %v1900 = vld [vmem:[#allocation2 + $0x1a] sm:$0xff]
      %v1901 = vld [vmem:[#allocation2 + $0x22] sm:$0xff]
      %v1902 = vld [vmem:[#allocation2 + $0x32] sm:$0xff]
      %v1903 = vld [vmem:[#allocation2 + $0x3a] sm:$0xff]
      %v1904 = vld [vmem:[#allocation2 + $0x4a] sm:$0xff]
      %v1905 = vld [vmem:[#allocation2 + $0x52] sm:$0xff]
      %v1906 = vld [vmem:[#allocation2 + $0x62] sm:$0xff]
      %v1907 = vld [vmem:[#allocation2 + $0x6a] sm:$0xff]
      %v1908 = vld [vmem:[#allocation2 + $0x7a] sm:$0xff]
      %v1909 = vld [vmem:[#allocation2 + $0x82] sm:$0xff]
      %v1910 = vld [vmem:[#allocation2 + $0x92] sm:$0xff]
      %v1911 = vld [vmem:[#allocation2 + $0x9a] sm:$0xff]
      %v1912 = vld [vmem:[#allocation2 + $0xaa] sm:$0xff]
      %v1913 = vld [vmem:[#allocation2 + $0xb2] sm:$0xff]
      %v1914 = vld [vmem:[#allocation2 + $0xc2] sm:$0xff]
      %v1915 = vld [vmem:[#allocation2 + $0xca] sm:$0xff]
      %v1916 = vld [vmem:[#allocation2 + $0xda] sm:$0xff]
      %v1917 = vld [vmem:[#allocation2 + $0xe2] sm:$0xff]
      %v1918 = vld [vmem:[#allocation2 + $0xf2] sm:$0xff]
      %v1919 = vld [vmem:[#allocation2 + $0xfa] sm:$0xff]
      %v1920 = vld [vmem:[#allocation2 + $0x10a] sm:$0xff]
      %v1921 = vld [vmem:[#allocation2 + $0x112] sm:$0xff]
      %v1922 = vld [vmem:[#allocation2 + $0x122] sm:$0xff]
      %v1923 = vld [vmem:[#allocation2 + $0x12a] sm:$0xff]
      %v1924 = vld [vmem:[#allocation2 + $0x13a] sm:$0xff]
      %v1925 = vld [vmem:[#allocation2 + $0x142] sm:$0xff]
      %v1926 = vld [vmem:[#allocation2 + $0x152] sm:$0xff]
      %v1927 = vld [vmem:[#allocation2 + $0x15a] sm:$0xff]
      %v1928 = vld [vmem:[#allocation2 + $0x16a] sm:$0xff]
      %v1929 = vld [vmem:[#allocation2 + $0x172] sm:$0xff]
      %s1930 = scalar_lea.vmem %s1, 20
      %v1931 = vld [vmem:[%s1930] sm:$0xf]
      %v1933 = vsel %vm264, %v1898, 0
      %v1936 = vsel %vm264, %v1899, 0
      %v1939 = vsel %vm264, %v1900, 0
      %v1942 = vsel %vm264, %v1901, 0
      %v1945 = vsel %vm264, %v1902, 0
      %v1948 = vsel %vm264, %v1903, 0
      %v1951 = vsel %vm264, %v1904, 0
      %v1954 = vsel %vm264, %v1905, 0
      %v1957 = vsel %vm264, %v1906, 0
      %v1960 = vsel %vm264, %v1907, 0
      %v1963 = vsel %vm264, %v1908, 0
      %v1966 = vsel %vm264, %v1909, 0
      %v1969 = vsel %vm264, %v1910, 0
      %v1972 = vsel %vm264, %v1911, 0
      %v1975 = vsel %vm264, %v1912, 0
      %v1978 = vsel %vm264, %v1913, 0
      %v1981 = vsel %vm264, %v1914, 0
      %v1984 = vsel %vm264, %v1915, 0
      %v1987 = vsel %vm264, %v1916, 0
      %v1990 = vsel %vm264, %v1917, 0
      %v1993 = vsel %vm264, %v1918, 0
      %v1996 = vsel %vm264, %v1919, 0
      %v1999 = vsel %vm264, %v1920, 0
      %v2002 = vsel %vm264, %v1921, 0
      %v2005 = vsel %vm264, %v1922, 0
      %v2008 = vsel %vm264, %v1923, 0
      %v2011 = vsel %vm264, %v1924, 0
      %v2014 = vsel %vm264, %v1925, 0
      %v2017 = vsel %vm264, %v1926, 0
      %v2020 = vsel %vm264, %v1927, 0
      %v2023 = vsel %vm264, %v1928, 0
      %v2026 = vsel %vm264, %v1929, 0
      %v2029 = vsel %vm461, %v1931, 0
      %2031 = vmatprep.subr.mxu0 0.0
      %2032 = vmatpush1.msra.mxu0 0.0
      %2033 = vmatprep.subr.mxu0 0.0
      %2034 = vmatpush1.msra.mxu0 0.0
      %2035 = vmatprep.subr.mxu0 0.0
      %2036 = vmatpush1.msra.mxu0 0.0
      %2037 = vmatprep.subr.mxu0 0.0
      %2038 = vmatpush1.msra.mxu0 0.0
      %2039 = vmatprep.subr.mxu0 0.0
      %2040 = vmatpush1.msra.mxu0 0.0
      %2041 = vmatprep.subr.mxu0 0.0
      %2042 = vmatpush1.msra.mxu0 0.0
      %2043 = vmatprep.subr.mxu0 0.0
      %2044 = vmatpush1.msra.mxu0 0.0
      %2045 = vmatprep.subr.mxu0 0.0
      %2046 = vmatpush1.msra.mxu0 0.0
      %2047 = vmatprep.subr.mxu0 0.0
      %2048 = vmatpush1.msra.mxu0 0.0
      %2049 = vmatprep.subr.mxu0 0.0
      %2050 = vmatpush1.msra.mxu0 0.0
      %2051 = vmatprep.subr.mxu0 0.0
      %2052 = vmatpush1.msra.mxu0 0.0
      %2053 = vmatprep.subr.mxu0 0.0
      %2054 = vmatpush1.msra.mxu0 0.0
      %2055 = vmatprep.subr.mxu0 0.0
      %2056 = vmatpush1.msra.mxu0 0.0
      %2057 = vmatprep.subr.mxu0 0.0
      %2058 = vmatpush1.msra.mxu0 0.0
      %2059 = vmatprep.subr.mxu0 0.0
      %2060 = vmatpush1.msra.mxu0 0.0
      %2061 = vmatprep.subr.mxu0 0.0
      %2062 = vmatpush1.msra.mxu0 %v2029
      %2063 = vmatprep.subr.mxu0 0.0
      %2064 = vmatpush2.msra.mxu0 0.0
      %2065 = vmatprep.subr.mxu0 0.0
      %2066 = vmatpush2.msra.mxu0 0.0
      %2067 = vmatprep.subr.mxu0 0.0
      %2068 = vmatpush2.msra.mxu0 0.0
      %2069 = vmatprep.subr.mxu0 0.0
      %2070 = vmatpush2.msra.mxu0 0.0
      %2071 = vmatprep.subr.mxu0 0.0
      %2072 = vmatpush2.msra.mxu0 0.0
      %2073 = vmatprep.subr.mxu0 0.0
      %2074 = vmatpush2.msra.mxu0 0.0
      %2075 = vmatprep.subr.mxu0 0.0
      %2076 = vmatpush2.msra.mxu0 0.0
      %2077 = vmatprep.subr.mxu0 0.0
      %2078 = vmatpush2.msra.mxu0 0.0
      %2079 = vmatprep.subr.mxu0 0.0
      %2080 = vmatpush2.msra.mxu0 0.0
      %2081 = vmatprep.subr.mxu0 0.0
      %2082 = vmatpush2.msra.mxu0 0.0
      %2083 = vmatprep.subr.mxu0 0.0
      %2084 = vmatpush2.msra.mxu0 0.0
      %2085 = vmatprep.subr.mxu0 0.0
      %2086 = vmatpush2.msra.mxu0 0.0
      %2087 = vmatprep.subr.mxu0 0.0
      %2088 = vmatpush2.msra.mxu0 0.0
      %2089 = vmatprep.subr.mxu0 0.0
      %2090 = vmatpush2.msra.mxu0 0.0
      %2091 = vmatprep.subr.mxu0 0.0
      %2092 = vmatpush2.msra.mxu0 0.0
      %2093 = vmatprep.subr.mxu0 0.0
      %2094 = vmatpush2.msra.mxu0 0.0
      %2095 = vmatprep.mubr.f32.mxu0 0.0
      %2096 = vmatmul.mubr.f32.gmra.mxu0 %v1933
      %v2097 = vpop.f32.mrf.mxu0
      %v2098 = vadd.f32 0.0, %v2097
      %v2099 = vpop.f32.mrf.mxu0
      %2100 = vmatprep.mubr.f32.mxu0 0.0
      %2101 = vmatmul.mubr.f32.gmra.mxu0 %v1936
      %v2102 = vpop.f32.mrf.mxu0
      %v2103 = vadd.f32 0.0, %v2102
      %v2104 = vpop.f32.mrf.mxu0
      %2105 = vmatprep.mubr.f32.mxu0 0.0
      %2106 = vmatmul.mubr.f32.gmra.mxu0 %v1939
      %v2107 = vpop.f32.mrf.mxu0
      %v2108 = vadd.f32 0.0, %v2107
      %v2109 = vpop.f32.mrf.mxu0
      %2110 = vmatprep.mubr.f32.mxu0 0.0
      %2111 = vmatmul.mubr.f32.gmra.mxu0 %v1942
      %v2112 = vpop.f32.mrf.mxu0
      %v2113 = vadd.f32 0.0, %v2112
      %v2114 = vpop.f32.mrf.mxu0
      %2115 = vmatprep.mubr.f32.mxu0 0.0
      %2116 = vmatmul.mubr.f32.gmra.mxu0 %v1945
      %v2117 = vpop.f32.mrf.mxu0
      %v2118 = vadd.f32 0.0, %v2117
      %v2119 = vpop.f32.mrf.mxu0
      %2120 = vmatprep.mubr.f32.mxu0 0.0
      %2121 = vmatmul.mubr.f32.gmra.mxu0 %v1948
      %v2122 = vpop.f32.mrf.mxu0
      %v2123 = vadd.f32 0.0, %v2122
      %v2124 = vpop.f32.mrf.mxu0
      %2125 = vmatprep.mubr.f32.mxu0 0.0
      %2126 = vmatmul.mubr.f32.gmra.mxu0 %v1951
      %v2127 = vpop.f32.mrf.mxu0
      %v2128 = vadd.f32 0.0, %v2127
      %v2129 = vpop.f32.mrf.mxu0
      %2130 = vmatprep.mubr.f32.mxu0 0.0
      %2131 = vmatmul.mubr.f32.gmra.mxu0 %v1954
      %v2132 = vpop.f32.mrf.mxu0
      %v2133 = vadd.f32 0.0, %v2132
      %v2134 = vpop.f32.mrf.mxu0
      %2135 = vmatprep.mubr.f32.mxu0 0.0
      %2136 = vmatmul.mubr.f32.gmra.mxu0 %v1957
      %v2137 = vpop.f32.mrf.mxu0
      %v2138 = vadd.f32 0.0, %v2137
      %v2139 = vpop.f32.mrf.mxu0
      %2140 = vmatprep.mubr.f32.mxu0 0.0
      %2141 = vmatmul.mubr.f32.gmra.mxu0 %v1960
      %v2142 = vpop.f32.mrf.mxu0
      %v2143 = vadd.f32 0.0, %v2142
      %v2144 = vpop.f32.mrf.mxu0
      %2145 = vmatprep.mubr.f32.mxu0 0.0
      %2146 = vmatmul.mubr.f32.gmra.mxu0 %v1963
      %v2147 = vpop.f32.mrf.mxu0
      %v2148 = vadd.f32 0.0, %v2147
      %v2149 = vpop.f32.mrf.mxu0
      %2150 = vmatprep.mubr.f32.mxu0 0.0
      %2151 = vmatmul.mubr.f32.gmra.mxu0 %v1966
      %v2152 = vpop.f32.mrf.mxu0
      %v2153 = vadd.f32 0.0, %v2152
      %v2154 = vpop.f32.mrf.mxu0
      %2155 = vmatprep.mubr.f32.mxu0 0.0
      %2156 = vmatmul.mubr.f32.gmra.mxu0 %v1969
      %v2157 = vpop.f32.mrf.mxu0
      %v2158 = vadd.f32 0.0, %v2157
      %v2159 = vpop.f32.mrf.mxu0
      %2160 = vmatprep.mubr.f32.mxu0 0.0
      %2161 = vmatmul.mubr.f32.gmra.mxu0 %v1972
      %v2162 = vpop.f32.mrf.mxu0
      %v2163 = vadd.f32 0.0, %v2162
      %v2164 = vpop.f32.mrf.mxu0
      %2165 = vmatprep.mubr.f32.mxu0 0.0
      %2166 = vmatmul.mubr.f32.gmra.mxu0 %v1975
      %v2167 = vpop.f32.mrf.mxu0
      %v2168 = vadd.f32 0.0, %v2167
      %v2169 = vpop.f32.mrf.mxu0
      %2170 = vmatprep.mubr.f32.mxu0 0.0
      %2171 = vmatmul.mubr.f32.gmra.mxu0 %v1978
      %v2172 = vpop.f32.mrf.mxu0
      %v2173 = vadd.f32 0.0, %v2172
      %v2174 = vpop.f32.mrf.mxu0
      %2175 = vmatprep.mubr.f32.mxu0 0.0
      %2176 = vmatmul.mubr.f32.gmra.mxu0 %v1981
      %v2177 = vpop.f32.mrf.mxu0
      %v2178 = vadd.f32 0.0, %v2177
      %v2179 = vpop.f32.mrf.mxu0
      %2180 = vmatprep.mubr.f32.mxu0 0.0
      %2181 = vmatmul.mubr.f32.gmra.mxu0 %v1984
      %v2182 = vpop.f32.mrf.mxu0
      %v2183 = vadd.f32 0.0, %v2182
      %v2184 = vpop.f32.mrf.mxu0
      %2185 = vmatprep.mubr.f32.mxu0 0.0
      %2186 = vmatmul.mubr.f32.gmra.mxu0 %v1987
      %v2187 = vpop.f32.mrf.mxu0
      %v2188 = vadd.f32 0.0, %v2187
      %v2189 = vpop.f32.mrf.mxu0
      %2190 = vmatprep.mubr.f32.mxu0 0.0
      %2191 = vmatmul.mubr.f32.gmra.mxu0 %v1990
      %v2192 = vpop.f32.mrf.mxu0
      %v2193 = vadd.f32 0.0, %v2192
      %v2194 = vpop.f32.mrf.mxu0
      %2195 = vmatprep.mubr.f32.mxu0 0.0
      %2196 = vmatmul.mubr.f32.gmra.mxu0 %v1993
      %v2197 = vpop.f32.mrf.mxu0
      %v2198 = vadd.f32 0.0, %v2197
      %v2199 = vpop.f32.mrf.mxu0
      %2200 = vmatprep.mubr.f32.mxu0 0.0
      %2201 = vmatmul.mubr.f32.gmra.mxu0 %v1996
      %v2202 = vpop.f32.mrf.mxu0
      %v2203 = vadd.f32 0.0, %v2202
      %v2204 = vpop.f32.mrf.mxu0
      %2205 = vmatprep.mubr.f32.mxu0 0.0
      %2206 = vmatmul.mubr.f32.gmra.mxu0 %v1999
      %v2207 = vpop.f32.mrf.mxu0
      %v2208 = vadd.f32 0.0, %v2207
      %v2209 = vpop.f32.mrf.mxu0
      %2210 = vmatprep.mubr.f32.mxu0 0.0
      %2211 = vmatmul.mubr.f32.gmra.mxu0 %v2002
      %v2212 = vpop.f32.mrf.mxu0
      %v2213 = vadd.f32 0.0, %v2212
      %v2214 = vpop.f32.mrf.mxu0
      %2215 = vmatprep.mubr.f32.mxu0 0.0
      %2216 = vmatmul.mubr.f32.gmra.mxu0 %v2005
      %v2217 = vpop.f32.mrf.mxu0
      %v2218 = vadd.f32 0.0, %v2217
      %v2219 = vpop.f32.mrf.mxu0
      %2220 = vmatprep.mubr.f32.mxu0 0.0
      %2221 = vmatmul.mubr.f32.gmra.mxu0 %v2008
      %v2222 = vpop.f32.mrf.mxu0
      %v2223 = vadd.f32 0.0, %v2222
      %v2224 = vpop.f32.mrf.mxu0
      %2225 = vmatprep.mubr.f32.mxu0 0.0
      %2226 = vmatmul.mubr.f32.gmra.mxu0 %v2011
      %v2227 = vpop.f32.mrf.mxu0
      %v2228 = vadd.f32 0.0, %v2227
      %v2229 = vpop.f32.mrf.mxu0
      %2230 = vmatprep.mubr.f32.mxu0 0.0
      %2231 = vmatmul.mubr.f32.gmra.mxu0 %v2014
      %v2232 = vpop.f32.mrf.mxu0
      %v2233 = vadd.f32 0.0, %v2232
      %v2234 = vpop.f32.mrf.mxu0
      %2235 = vmatprep.mubr.f32.mxu0 0.0
      %2236 = vmatmul.mubr.f32.gmra.mxu0 %v2017
      %v2237 = vpop.f32.mrf.mxu0
      %v2238 = vadd.f32 0.0, %v2237
      %v2239 = vpop.f32.mrf.mxu0
      %2240 = vmatprep.mubr.f32.mxu0 0.0
      %2241 = vmatmul.mubr.f32.gmra.mxu0 %v2020
      %v2242 = vpop.f32.mrf.mxu0
      %v2243 = vadd.f32 0.0, %v2242
      %v2244 = vpop.f32.mrf.mxu0
      %2245 = vmatprep.mubr.f32.mxu0 0.0
      %2246 = vmatmul.mubr.f32.gmra.mxu0 %v2023
      %v2247 = vpop.f32.mrf.mxu0
      %v2248 = vadd.f32 0.0, %v2247
      %v2249 = vpop.f32.mrf.mxu0
      %2250 = vmatprep.mubr.f32.mxu0 0.0
      %2251 = vmatmul.mubr.f32.gmra.mxu0 %v2026
      %v2252 = vpop.f32.mrf.mxu0
      %v2253 = vadd.f32 0.0, %v2252
      %v2254 = vpop.f32.mrf.mxu0
      %2255 = vdwg.mxu0
      %v2257 = vsel %vm264, %v1864, 0
      %v2260 = vsel %vm264, %v1865, 0
      %v2263 = vsel %vm264, %v1866, 0
      %v2266 = vsel %vm264, %v1867, 0
      %v2269 = vsel %vm264, %v1868, 0
      %v2272 = vsel %vm264, %v1869, 0
      %v2275 = vsel %vm264, %v1870, 0
      %v2278 = vsel %vm264, %v1871, 0
      %v2281 = vsel %vm264, %v1872, 0
      %v2284 = vsel %vm264, %v1873, 0
      %v2287 = vsel %vm264, %v1874, 0
      %v2290 = vsel %vm264, %v1875, 0
      %v2293 = vsel %vm264, %v1876, 0
      %v2296 = vsel %vm264, %v1877, 0
      %v2299 = vsel %vm264, %v1878, 0
      %v2302 = vsel %vm264, %v1879, 0
      %v2305 = vsel %vm264, %v1880, 0
      %v2308 = vsel %vm264, %v1881, 0
      %v2311 = vsel %vm264, %v1882, 0
      %v2314 = vsel %vm264, %v1883, 0
      %v2317 = vsel %vm264, %v1884, 0
      %v2320 = vsel %vm264, %v1885, 0
      %v2323 = vsel %vm264, %v1886, 0
      %v2326 = vsel %vm264, %v1887, 0
      %v2329 = vsel %vm264, %v1888, 0
      %v2332 = vsel %vm264, %v1889, 0
      %v2335 = vsel %vm264, %v1890, 0
      %v2338 = vsel %vm264, %v1891, 0
      %v2341 = vsel %vm264, %v1892, 0
      %v2344 = vsel %vm264, %v1893, 0
      %v2347 = vsel %vm264, %v1894, 0
      %v2350 = vsel %vm264, %v1895, 0
      %v2353 = vsel %vm461, %v1897, 0
      %2355 = vmatprep.subr.mxu0 0.0
      %2356 = vmatpush1.msra.mxu0 0.0
      %2357 = vmatprep.subr.mxu0 0.0
      %2358 = vmatpush1.msra.mxu0 0.0
      %2359 = vmatprep.subr.mxu0 0.0
      %2360 = vmatpush1.msra.mxu0 0.0
      %2361 = vmatprep.subr.mxu0 0.0
      %2362 = vmatpush1.msra.mxu0 0.0
      %2363 = vmatprep.subr.mxu0 0.0
      %2364 = vmatpush1.msra.mxu0 0.0
      %2365 = vmatprep.subr.mxu0 0.0
      %2366 = vmatpush1.msra.mxu0 0.0
      %2367 = vmatprep.subr.mxu0 0.0
      %2368 = vmatpush1.msra.mxu0 0.0
      %2369 = vmatprep.subr.mxu0 0.0
      %2370 = vmatpush1.msra.mxu0 0.0
      %2371 = vmatprep.subr.mxu0 0.0
      %2372 = vmatpush1.msra.mxu0 0.0
      %2373 = vmatprep.subr.mxu0 0.0
      %2374 = vmatpush1.msra.mxu0 0.0
      %2375 = vmatprep.subr.mxu0 0.0
      %2376 = vmatpush1.msra.mxu0 0.0
      %2377 = vmatprep.subr.mxu0 0.0
      %2378 = vmatpush1.msra.mxu0 0.0
      %2379 = vmatprep.subr.mxu0 0.0
      %2380 = vmatpush1.msra.mxu0 0.0
      %2381 = vmatprep.subr.mxu0 0.0
      %2382 = vmatpush1.msra.mxu0 0.0
      %2383 = vmatprep.subr.mxu0 0.0
      %2384 = vmatpush1.msra.mxu0 0.0
      %2385 = vmatprep.subr.mxu0 0.0
      %2386 = vmatpush1.msra.mxu0 %v2353
      %2387 = vmatprep.subr.mxu0 0.0
      %2388 = vmatpush2.msra.mxu0 0.0
      %2389 = vmatprep.subr.mxu0 0.0
      %2390 = vmatpush2.msra.mxu0 0.0
      %2391 = vmatprep.subr.mxu0 0.0
      %2392 = vmatpush2.msra.mxu0 0.0
      %2393 = vmatprep.subr.mxu0 0.0
      %2394 = vmatpush2.msra.mxu0 0.0
      %2395 = vmatprep.subr.mxu0 0.0
      %2396 = vmatpush2.msra.mxu0 0.0
      %2397 = vmatprep.subr.mxu0 0.0
      %2398 = vmatpush2.msra.mxu0 0.0
      %2399 = vmatprep.subr.mxu0 0.0
      %2400 = vmatpush2.msra.mxu0 0.0
      %2401 = vmatprep.subr.mxu0 0.0
      %2402 = vmatpush2.msra.mxu0 0.0
      %2403 = vmatprep.subr.mxu0 0.0
      %2404 = vmatpush2.msra.mxu0 0.0
      %2405 = vmatprep.subr.mxu0 0.0
      %2406 = vmatpush2.msra.mxu0 0.0
      %2407 = vmatprep.subr.mxu0 0.0
      %2408 = vmatpush2.msra.mxu0 0.0
      %2409 = vmatprep.subr.mxu0 0.0
      %2410 = vmatpush2.msra.mxu0 0.0
      %2411 = vmatprep.subr.mxu0 0.0
      %2412 = vmatpush2.msra.mxu0 0.0
      %2413 = vmatprep.subr.mxu0 0.0
      %2414 = vmatpush2.msra.mxu0 0.0
      %2415 = vmatprep.subr.mxu0 0.0
      %2416 = vmatpush2.msra.mxu0 0.0
      %2417 = vmatprep.subr.mxu0 0.0
      %2418 = vmatpush2.msra.mxu0 0.0
      %2419 = vmatprep.mubr.f32.mxu0 0.0
      %2420 = vmatmul.mubr.f32.gmra.mxu0 %v2257
      %v2421 = vpop.f32.mrf.mxu0
      %v2422 = vadd.f32 %v2098, %v2421
      %v2423 = vpop.f32.mrf.mxu0
      %2424 = vmatprep.mubr.f32.mxu0 0.0
      %2425 = vmatmul.mubr.f32.gmra.mxu0 %v2260
      %v2426 = vpop.f32.mrf.mxu0
      %v2427 = vadd.f32 %v2103, %v2426
      %v2428 = vpop.f32.mrf.mxu0
      %2429 = vmatprep.mubr.f32.mxu0 0.0
      %2430 = vmatmul.mubr.f32.gmra.mxu0 %v2263
      %v2431 = vpop.f32.mrf.mxu0
      %v2432 = vadd.f32 %v2108, %v2431
      %v2433 = vpop.f32.mrf.mxu0
      %2434 = vmatprep.mubr.f32.mxu0 0.0
      %2435 = vmatmul.mubr.f32.gmra.mxu0 %v2266
      %v2436 = vpop.f32.mrf.mxu0
      %v2437 = vadd.f32 %v2113, %v2436
      %v2438 = vpop.f32.mrf.mxu0
      %2439 = vmatprep.mubr.f32.mxu0 0.0
      %2440 = vmatmul.mubr.f32.gmra.mxu0 %v2269
      %v2441 = vpop.f32.mrf.mxu0
      %v2442 = vadd.f32 %v2118, %v2441
      %v2443 = vpop.f32.mrf.mxu0
      %2444 = vmatprep.mubr.f32.mxu0 0.0
      %2445 = vmatmul.mubr.f32.gmra.mxu0 %v2272
      %v2446 = vpop.f32.mrf.mxu0
      %v2447 = vadd.f32 %v2123, %v2446
      %v2448 = vpop.f32.mrf.mxu0
      %2449 = vmatprep.mubr.f32.mxu0 0.0
      %2450 = vmatmul.mubr.f32.gmra.mxu0 %v2275
      %v2451 = vpop.f32.mrf.mxu0
      %v2452 = vadd.f32 %v2128, %v2451
      %v2453 = vpop.f32.mrf.mxu0
      %2454 = vmatprep.mubr.f32.mxu0 0.0
      %2455 = vmatmul.mubr.f32.gmra.mxu0 %v2278
      %v2456 = vpop.f32.mrf.mxu0
      %v2457 = vadd.f32 %v2133, %v2456
      %v2458 = vpop.f32.mrf.mxu0
      %2459 = vmatprep.mubr.f32.mxu0 0.0
      %2460 = vmatmul.mubr.f32.gmra.mxu0 %v2281
      %v2461 = vpop.f32.mrf.mxu0
      %v2462 = vadd.f32 %v2138, %v2461
      %v2463 = vpop.f32.mrf.mxu0
      %2464 = vmatprep.mubr.f32.mxu0 0.0
      %2465 = vmatmul.mubr.f32.gmra.mxu0 %v2284
      %v2466 = vpop.f32.mrf.mxu0
      %v2467 = vadd.f32 %v2143, %v2466
      %v2468 = vpop.f32.mrf.mxu0
      %2469 = vmatprep.mubr.f32.mxu0 0.0
      %2470 = vmatmul.mubr.f32.gmra.mxu0 %v2287
      %v2471 = vpop.f32.mrf.mxu0
      %v2472 = vadd.f32 %v2148, %v2471
      %v2473 = vpop.f32.mrf.mxu0
      %2474 = vmatprep.mubr.f32.mxu0 0.0
      %2475 = vmatmul.mubr.f32.gmra.mxu0 %v2290
      %v2476 = vpop.f32.mrf.mxu0
      %v2477 = vadd.f32 %v2153, %v2476
      %v2478 = vpop.f32.mrf.mxu0
      %2479 = vmatprep.mubr.f32.mxu0 0.0
      %2480 = vmatmul.mubr.f32.gmra.mxu0 %v2293
      %v2481 = vpop.f32.mrf.mxu0
      %v2482 = vadd.f32 %v2158, %v2481
      %v2483 = vpop.f32.mrf.mxu0
      %2484 = vmatprep.mubr.f32.mxu0 0.0
      %2485 = vmatmul.mubr.f32.gmra.mxu0 %v2296
      %v2486 = vpop.f32.mrf.mxu0
      %v2487 = vadd.f32 %v2163, %v2486
      %v2488 = vpop.f32.mrf.mxu0
      %2489 = vmatprep.mubr.f32.mxu0 0.0
      %2490 = vmatmul.mubr.f32.gmra.mxu0 %v2299
      %v2491 = vpop.f32.mrf.mxu0
      %v2492 = vadd.f32 %v2168, %v2491
      %v2493 = vpop.f32.mrf.mxu0
      %2494 = vmatprep.mubr.f32.mxu0 0.0
      %2495 = vmatmul.mubr.f32.gmra.mxu0 %v2302
      %v2496 = vpop.f32.mrf.mxu0
      %v2497 = vadd.f32 %v2173, %v2496
      %v2498 = vpop.f32.mrf.mxu0
      %2499 = vmatprep.mubr.f32.mxu0 0.0
      %2500 = vmatmul.mubr.f32.gmra.mxu0 %v2305
      %v2501 = vpop.f32.mrf.mxu0
      %v2502 = vadd.f32 %v2178, %v2501
      %v2503 = vpop.f32.mrf.mxu0
      %2504 = vmatprep.mubr.f32.mxu0 0.0
      %2505 = vmatmul.mubr.f32.gmra.mxu0 %v2308
      %v2506 = vpop.f32.mrf.mxu0
      %v2507 = vadd.f32 %v2183, %v2506
      %v2508 = vpop.f32.mrf.mxu0
      %2509 = vmatprep.mubr.f32.mxu0 0.0
      %2510 = vmatmul.mubr.f32.gmra.mxu0 %v2311
      %v2511 = vpop.f32.mrf.mxu0
      %v2512 = vadd.f32 %v2188, %v2511
      %v2513 = vpop.f32.mrf.mxu0
      %2514 = vmatprep.mubr.f32.mxu0 0.0
      %2515 = vmatmul.mubr.f32.gmra.mxu0 %v2314
      %v2516 = vpop.f32.mrf.mxu0
      %v2517 = vadd.f32 %v2193, %v2516
      %v2518 = vpop.f32.mrf.mxu0
      %2519 = vmatprep.mubr.f32.mxu0 0.0
      %2520 = vmatmul.mubr.f32.gmra.mxu0 %v2317
      %v2521 = vpop.f32.mrf.mxu0
      %v2522 = vadd.f32 %v2198, %v2521
      %v2523 = vpop.f32.mrf.mxu0
      %2524 = vmatprep.mubr.f32.mxu0 0.0
      %2525 = vmatmul.mubr.f32.gmra.mxu0 %v2320
      %v2526 = vpop.f32.mrf.mxu0
      %v2527 = vadd.f32 %v2203, %v2526
      %v2528 = vpop.f32.mrf.mxu0
      %2529 = vmatprep.mubr.f32.mxu0 0.0
      %2530 = vmatmul.mubr.f32.gmra.mxu0 %v2323
      %v2531 = vpop.f32.mrf.mxu0
      %v2532 = vadd.f32 %v2208, %v2531
      %v2533 = vpop.f32.mrf.mxu0
      %2534 = vmatprep.mubr.f32.mxu0 0.0
      %2535 = vmatmul.mubr.f32.gmra.mxu0 %v2326
      %v2536 = vpop.f32.mrf.mxu0
      %v2537 = vadd.f32 %v2213, %v2536
      %v2538 = vpop.f32.mrf.mxu0
      %2539 = vmatprep.mubr.f32.mxu0 0.0
      %2540 = vmatmul.mubr.f32.gmra.mxu0 %v2329
      %v2541 = vpop.f32.mrf.mxu0
      %v2542 = vadd.f32 %v2218, %v2541
      %v2543 = vpop.f32.mrf.mxu0
      %2544 = vmatprep.mubr.f32.mxu0 0.0
      %2545 = vmatmul.mubr.f32.gmra.mxu0 %v2332
      %v2546 = vpop.f32.mrf.mxu0
      %v2547 = vadd.f32 %v2223, %v2546
      %v2548 = vpop.f32.mrf.mxu0
      %2549 = vmatprep.mubr.f32.mxu0 0.0
      %2550 = vmatmul.mubr.f32.gmra.mxu0 %v2335
      %v2551 = vpop.f32.mrf.mxu0
      %v2552 = vadd.f32 %v2228, %v2551
      %v2553 = vpop.f32.mrf.mxu0
      %2554 = vmatprep.mubr.f32.mxu0 0.0
      %2555 = vmatmul.mubr.f32.gmra.mxu0 %v2338
      %v2556 = vpop.f32.mrf.mxu0
      %v2557 = vadd.f32 %v2233, %v2556
      %v2558 = vpop.f32.mrf.mxu0
      %2559 = vmatprep.mubr.f32.mxu0 0.0
      %2560 = vmatmul.mubr.f32.gmra.mxu0 %v2341
      %v2561 = vpop.f32.mrf.mxu0
      %v2562 = vadd.f32 %v2238, %v2561
      %v2563 = vpop.f32.mrf.mxu0
      %2564 = vmatprep.mubr.f32.mxu0 0.0
      %2565 = vmatmul.mubr.f32.gmra.mxu0 %v2344
      %v2566 = vpop.f32.mrf.mxu0
      %v2567 = vadd.f32 %v2243, %v2566
      %v2568 = vpop.f32.mrf.mxu0
      %2569 = vmatprep.mubr.f32.mxu0 0.0
      %2570 = vmatmul.mubr.f32.gmra.mxu0 %v2347
      %v2571 = vpop.f32.mrf.mxu0
      %v2572 = vadd.f32 %v2248, %v2571
      %v2573 = vpop.f32.mrf.mxu0
      %2574 = vmatprep.mubr.f32.mxu0 0.0
      %2575 = vmatmul.mubr.f32.gmra.mxu0 %v2350
      %v2576 = vpop.f32.mrf.mxu0
      %v2577 = vadd.f32 %v2253, %v2576
      %v2578 = vpop.f32.mrf.mxu0
      %2579 = vdwg.mxu0
      %v2580 = vld [vmem:[%s263 + $0x1] sm:$0xff]
      %v2581 = vld [vmem:[%s263 + $0x9] sm:$0xff]
      %v2582 = vld [vmem:[%s263 + $0x19] sm:$0xff]
      %v2583 = vld [vmem:[%s263 + $0x21] sm:$0xff]
      %v2584 = vld [vmem:[%s263 + $0x31] sm:$0xff]
      %v2585 = vld [vmem:[%s263 + $0x39] sm:$0xff]
      %v2586 = vld [vmem:[%s263 + $0x49] sm:$0xff]
      %v2587 = vld [vmem:[%s263 + $0x51] sm:$0xff]
      %v2588 = vld [vmem:[%s263 + $0x61] sm:$0xff]
      %v2589 = vld [vmem:[%s263 + $0x69] sm:$0xff]
      %v2590 = vld [vmem:[%s263 + $0x79] sm:$0xff]
      %v2591 = vld [vmem:[%s263 + $0x81] sm:$0xff]
      %v2592 = vld [vmem:[%s263 + $0x91] sm:$0xff]
      %v2593 = vld [vmem:[%s263 + $0x99] sm:$0xff]
      %v2594 = vld [vmem:[%s263 + $0xa9] sm:$0xff]
      %v2595 = vld [vmem:[%s263 + $0xb1] sm:$0xff]
      %v2596 = vld [vmem:[%s263 + $0xc1] sm:$0xff]
      %v2597 = vld [vmem:[%s263 + $0xc9] sm:$0xff]
      %v2598 = vld [vmem:[%s263 + $0xd9] sm:$0xff]
      %v2599 = vld [vmem:[%s263 + $0xe1] sm:$0xff]
      %v2600 = vld [vmem:[%s263 + $0xf1] sm:$0xff]
      %v2601 = vld [vmem:[%s263 + $0xf9] sm:$0xff]
      %v2602 = vld [vmem:[%s263 + $0x109] sm:$0xff]
      %v2603 = vld [vmem:[%s263 + $0x111] sm:$0xff]
      %v2604 = vld [vmem:[%s263 + $0x121] sm:$0xff]
      %v2605 = vld [vmem:[%s263 + $0x129] sm:$0xff]
      %v2606 = vld [vmem:[%s263 + $0x139] sm:$0xff]
      %v2607 = vld [vmem:[%s263 + $0x141] sm:$0xff]
      %v2608 = vld [vmem:[%s263 + $0x151] sm:$0xff]
      %v2609 = vld [vmem:[%s263 + $0x159] sm:$0xff]
      %v2610 = vld [vmem:[%s263 + $0x169] sm:$0xff]
      %v2611 = vld [vmem:[%s263 + $0x171] sm:$0xff]
      %s2612 = scalar_lea.vmem %s1, 24
      %v2613 = vld [vmem:[%s2612] sm:$0xf]
      %v2615 = vsel %vm264, %v2580, 0
      %v2618 = vsel %vm264, %v2581, 0
      %v2621 = vsel %vm264, %v2582, 0
      %v2624 = vsel %vm264, %v2583, 0
      %v2627 = vsel %vm264, %v2584, 0
      %v2630 = vsel %vm264, %v2585, 0
      %v2633 = vsel %vm264, %v2586, 0
      %v2636 = vsel %vm264, %v2587, 0
      %v2639 = vsel %vm264, %v2588, 0
      %v2642 = vsel %vm264, %v2589, 0
      %v2645 = vsel %vm264, %v2590, 0
      %v2648 = vsel %vm264, %v2591, 0
      %v2651 = vsel %vm264, %v2592, 0
      %v2654 = vsel %vm264, %v2593, 0
      %v2657 = vsel %vm264, %v2594, 0
      %v2660 = vsel %vm264, %v2595, 0
      %v2663 = vsel %vm264, %v2596, 0
      %v2666 = vsel %vm264, %v2597, 0
      %v2669 = vsel %vm264, %v2598, 0
      %v2672 = vsel %vm264, %v2599, 0
      %v2675 = vsel %vm264, %v2600, 0
      %v2678 = vsel %vm264, %v2601, 0
      %v2681 = vsel %vm264, %v2602, 0
      %v2684 = vsel %vm264, %v2603, 0
      %v2687 = vsel %vm264, %v2604, 0
      %v2690 = vsel %vm264, %v2605, 0
      %v2693 = vsel %vm264, %v2606, 0
      %v2696 = vsel %vm264, %v2607, 0
      %v2699 = vsel %vm264, %v2608, 0
      %v2702 = vsel %vm264, %v2609, 0
      %v2705 = vsel %vm264, %v2610, 0
      %v2708 = vsel %vm264, %v2611, 0
      %v2711 = vsel %vm461, %v2613, 0
      %2713 = vmatprep.subr.mxu0 0.0
      %2714 = vmatpush1.msra.mxu0 0.0
      %2715 = vmatprep.subr.mxu0 0.0
      %2716 = vmatpush1.msra.mxu0 0.0
      %2717 = vmatprep.subr.mxu0 0.0
      %2718 = vmatpush1.msra.mxu0 0.0
      %2719 = vmatprep.subr.mxu0 0.0
      %2720 = vmatpush1.msra.mxu0 0.0
      %2721 = vmatprep.subr.mxu0 0.0
      %2722 = vmatpush1.msra.mxu0 0.0
      %2723 = vmatprep.subr.mxu0 0.0
      %2724 = vmatpush1.msra.mxu0 0.0
      %2725 = vmatprep.subr.mxu0 0.0
      %2726 = vmatpush1.msra.mxu0 0.0
      %2727 = vmatprep.subr.mxu0 0.0
      %2728 = vmatpush1.msra.mxu0 0.0
      %2729 = vmatprep.subr.mxu0 0.0
      %2730 = vmatpush1.msra.mxu0 0.0
      %2731 = vmatprep.subr.mxu0 0.0
      %2732 = vmatpush1.msra.mxu0 0.0
      %2733 = vmatprep.subr.mxu0 0.0
      %2734 = vmatpush1.msra.mxu0 0.0
      %2735 = vmatprep.subr.mxu0 0.0
      %2736 = vmatpush1.msra.mxu0 0.0
      %2737 = vmatprep.subr.mxu0 0.0
      %2738 = vmatpush1.msra.mxu0 0.0
      %2739 = vmatprep.subr.mxu0 0.0
      %2740 = vmatpush1.msra.mxu0 0.0
      %2741 = vmatprep.subr.mxu0 0.0
      %2742 = vmatpush1.msra.mxu0 0.0
      %2743 = vmatprep.subr.mxu0 0.0
      %2744 = vmatpush1.msra.mxu0 %v2711
      %2745 = vmatprep.subr.mxu0 0.0
      %2746 = vmatpush2.msra.mxu0 0.0
      %2747 = vmatprep.subr.mxu0 0.0
      %2748 = vmatpush2.msra.mxu0 0.0
      %2749 = vmatprep.subr.mxu0 0.0
      %2750 = vmatpush2.msra.mxu0 0.0
      %2751 = vmatprep.subr.mxu0 0.0
      %2752 = vmatpush2.msra.mxu0 0.0
      %2753 = vmatprep.subr.mxu0 0.0
      %2754 = vmatpush2.msra.mxu0 0.0
      %2755 = vmatprep.subr.mxu0 0.0
      %2756 = vmatpush2.msra.mxu0 0.0
      %2757 = vmatprep.subr.mxu0 0.0
      %2758 = vmatpush2.msra.mxu0 0.0
      %2759 = vmatprep.subr.mxu0 0.0
      %2760 = vmatpush2.msra.mxu0 0.0
      %2761 = vmatprep.subr.mxu0 0.0
      %2762 = vmatpush2.msra.mxu0 0.0
      %2763 = vmatprep.subr.mxu0 0.0
      %2764 = vmatpush2.msra.mxu0 0.0
      %2765 = vmatprep.subr.mxu0 0.0
      %2766 = vmatpush2.msra.mxu0 0.0
      %2767 = vmatprep.subr.mxu0 0.0
      %2768 = vmatpush2.msra.mxu0 0.0
      %2769 = vmatprep.subr.mxu0 0.0
      %2770 = vmatpush2.msra.mxu0 0.0
      %2771 = vmatprep.subr.mxu0 0.0
      %2772 = vmatpush2.msra.mxu0 0.0
      %2773 = vmatprep.subr.mxu0 0.0
      %2774 = vmatpush2.msra.mxu0 0.0
      %2775 = vmatprep.subr.mxu0 0.0
      %2776 = vmatpush2.msra.mxu0 0.0
      %2777 = vmatprep.mubr.f32.mxu0 0.0
      %2778 = vmatmul.mubr.f32.gmra.mxu0 %v2615
      %v2779 = vpop.f32.mrf.mxu0
      %v2780 = vadd.f32 0.0, %v2779
      %v2781 = vpop.f32.mrf.mxu0
      %2782 = vmatprep.mubr.f32.mxu0 0.0
      %2783 = vmatmul.mubr.f32.gmra.mxu0 %v2618
      %v2784 = vpop.f32.mrf.mxu0
      %v2785 = vadd.f32 0.0, %v2784
      %v2786 = vpop.f32.mrf.mxu0
      %2787 = vmatprep.mubr.f32.mxu0 0.0
      %2788 = vmatmul.mubr.f32.gmra.mxu0 %v2621
      %v2789 = vpop.f32.mrf.mxu0
      %v2790 = vadd.f32 0.0, %v2789
      %v2791 = vpop.f32.mrf.mxu0
      %2792 = vmatprep.mubr.f32.mxu0 0.0
      %2793 = vmatmul.mubr.f32.gmra.mxu0 %v2624
      %v2794 = vpop.f32.mrf.mxu0
      %v2795 = vadd.f32 0.0, %v2794
      %v2796 = vpop.f32.mrf.mxu0
      %2797 = vmatprep.mubr.f32.mxu0 0.0
      %2798 = vmatmul.mubr.f32.gmra.mxu0 %v2627
      %v2799 = vpop.f32.mrf.mxu0
      %v2800 = vadd.f32 0.0, %v2799
      %v2801 = vpop.f32.mrf.mxu0
      %2802 = vmatprep.mubr.f32.mxu0 0.0
      %2803 = vmatmul.mubr.f32.gmra.mxu0 %v2630
      %v2804 = vpop.f32.mrf.mxu0
      %v2805 = vadd.f32 0.0, %v2804
      %v2806 = vpop.f32.mrf.mxu0
      %2807 = vmatprep.mubr.f32.mxu0 0.0
      %2808 = vmatmul.mubr.f32.gmra.mxu0 %v2633
      %v2809 = vpop.f32.mrf.mxu0
      %v2810 = vadd.f32 0.0, %v2809
      %v2811 = vpop.f32.mrf.mxu0
      %2812 = vmatprep.mubr.f32.mxu0 0.0
      %2813 = vmatmul.mubr.f32.gmra.mxu0 %v2636
      %v2814 = vpop.f32.mrf.mxu0
      %v2815 = vadd.f32 0.0, %v2814
      %v2816 = vpop.f32.mrf.mxu0
      %2817 = vmatprep.mubr.f32.mxu0 0.0
      %2818 = vmatmul.mubr.f32.gmra.mxu0 %v2639
      %v2819 = vpop.f32.mrf.mxu0
      %v2820 = vadd.f32 0.0, %v2819
      %v2821 = vpop.f32.mrf.mxu0
      %2822 = vmatprep.mubr.f32.mxu0 0.0
      %2823 = vmatmul.mubr.f32.gmra.mxu0 %v2642
      %v2824 = vpop.f32.mrf.mxu0
      %v2825 = vadd.f32 0.0, %v2824
      %v2826 = vpop.f32.mrf.mxu0
      %2827 = vmatprep.mubr.f32.mxu0 0.0
      %2828 = vmatmul.mubr.f32.gmra.mxu0 %v2645
      %v2829 = vpop.f32.mrf.mxu0
      %v2830 = vadd.f32 0.0, %v2829
      %v2831 = vpop.f32.mrf.mxu0
      %2832 = vmatprep.mubr.f32.mxu0 0.0
      %2833 = vmatmul.mubr.f32.gmra.mxu0 %v2648
      %v2834 = vpop.f32.mrf.mxu0
      %v2835 = vadd.f32 0.0, %v2834
      %v2836 = vpop.f32.mrf.mxu0
      %2837 = vmatprep.mubr.f32.mxu0 0.0
      %2838 = vmatmul.mubr.f32.gmra.mxu0 %v2651
      %v2839 = vpop.f32.mrf.mxu0
      %v2840 = vadd.f32 0.0, %v2839
      %v2841 = vpop.f32.mrf.mxu0
      %2842 = vmatprep.mubr.f32.mxu0 0.0
      %2843 = vmatmul.mubr.f32.gmra.mxu0 %v2654
      %v2844 = vpop.f32.mrf.mxu0
      %v2845 = vadd.f32 0.0, %v2844
      %v2846 = vpop.f32.mrf.mxu0
      %2847 = vmatprep.mubr.f32.mxu0 0.0
      %2848 = vmatmul.mubr.f32.gmra.mxu0 %v2657
      %v2849 = vpop.f32.mrf.mxu0
      %v2850 = vadd.f32 0.0, %v2849
      %v2851 = vpop.f32.mrf.mxu0
      %2852 = vmatprep.mubr.f32.mxu0 0.0
      %2853 = vmatmul.mubr.f32.gmra.mxu0 %v2660
      %v2854 = vpop.f32.mrf.mxu0
      %v2855 = vadd.f32 0.0, %v2854
      %v2856 = vpop.f32.mrf.mxu0
      %2857 = vmatprep.mubr.f32.mxu0 0.0
      %2858 = vmatmul.mubr.f32.gmra.mxu0 %v2663
      %v2859 = vpop.f32.mrf.mxu0
      %v2860 = vadd.f32 0.0, %v2859
      %v2861 = vpop.f32.mrf.mxu0
      %2862 = vmatprep.mubr.f32.mxu0 0.0
      %2863 = vmatmul.mubr.f32.gmra.mxu0 %v2666
      %v2864 = vpop.f32.mrf.mxu0
      %v2865 = vadd.f32 0.0, %v2864
      %v2866 = vpop.f32.mrf.mxu0
      %2867 = vmatprep.mubr.f32.mxu0 0.0
      %2868 = vmatmul.mubr.f32.gmra.mxu0 %v2669
      %v2869 = vpop.f32.mrf.mxu0
      %v2870 = vadd.f32 0.0, %v2869
      %v2871 = vpop.f32.mrf.mxu0
      %2872 = vmatprep.mubr.f32.mxu0 0.0
      %2873 = vmatmul.mubr.f32.gmra.mxu0 %v2672
      %v2874 = vpop.f32.mrf.mxu0
      %v2875 = vadd.f32 0.0, %v2874
      %v2876 = vpop.f32.mrf.mxu0
      %2877 = vmatprep.mubr.f32.mxu0 0.0
      %2878 = vmatmul.mubr.f32.gmra.mxu0 %v2675
      %v2879 = vpop.f32.mrf.mxu0
      %v2880 = vadd.f32 0.0, %v2879
      %v2881 = vpop.f32.mrf.mxu0
      %2882 = vmatprep.mubr.f32.mxu0 0.0
      %2883 = vmatmul.mubr.f32.gmra.mxu0 %v2678
      %v2884 = vpop.f32.mrf.mxu0
      %v2885 = vadd.f32 0.0, %v2884
      %v2886 = vpop.f32.mrf.mxu0
      %2887 = vmatprep.mubr.f32.mxu0 0.0
      %2888 = vmatmul.mubr.f32.gmra.mxu0 %v2681
      %v2889 = vpop.f32.mrf.mxu0
      %v2890 = vadd.f32 0.0, %v2889
      %v2891 = vpop.f32.mrf.mxu0
      %2892 = vmatprep.mubr.f32.mxu0 0.0
      %2893 = vmatmul.mubr.f32.gmra.mxu0 %v2684
      %v2894 = vpop.f32.mrf.mxu0
      %v2895 = vadd.f32 0.0, %v2894
      %v2896 = vpop.f32.mrf.mxu0
      %2897 = vmatprep.mubr.f32.mxu0 0.0
      %2898 = vmatmul.mubr.f32.gmra.mxu0 %v2687
      %v2899 = vpop.f32.mrf.mxu0
      %v2900 = vadd.f32 0.0, %v2899
      %v2901 = vpop.f32.mrf.mxu0
      %2902 = vmatprep.mubr.f32.mxu0 0.0
      %2903 = vmatmul.mubr.f32.gmra.mxu0 %v2690
      %v2904 = vpop.f32.mrf.mxu0
      %v2905 = vadd.f32 0.0, %v2904
      %v2906 = vpop.f32.mrf.mxu0
      %2907 = vmatprep.mubr.f32.mxu0 0.0
      %2908 = vmatmul.mubr.f32.gmra.mxu0 %v2693
      %v2909 = vpop.f32.mrf.mxu0
      %v2910 = vadd.f32 0.0, %v2909
      %v2911 = vpop.f32.mrf.mxu0
      %2912 = vmatprep.mubr.f32.mxu0 0.0
      %2913 = vmatmul.mubr.f32.gmra.mxu0 %v2696
      %v2914 = vpop.f32.mrf.mxu0
      %v2915 = vadd.f32 0.0, %v2914
      %v2916 = vpop.f32.mrf.mxu0
      %2917 = vmatprep.mubr.f32.mxu0 0.0
      %2918 = vmatmul.mubr.f32.gmra.mxu0 %v2699
      %v2919 = vpop.f32.mrf.mxu0
      %v2920 = vadd.f32 0.0, %v2919
      %v2921 = vpop.f32.mrf.mxu0
      %2922 = vmatprep.mubr.f32.mxu0 0.0
      %2923 = vmatmul.mubr.f32.gmra.mxu0 %v2702
      %v2924 = vpop.f32.mrf.mxu0
      %v2925 = vadd.f32 0.0, %v2924
      %v2926 = vpop.f32.mrf.mxu0
      %2927 = vmatprep.mubr.f32.mxu0 0.0
      %2928 = vmatmul.mubr.f32.gmra.mxu0 %v2705
      %v2929 = vpop.f32.mrf.mxu0
      %v2930 = vadd.f32 0.0, %v2929
      %v2931 = vpop.f32.mrf.mxu0
      %2932 = vmatprep.mubr.f32.mxu0 0.0
      %2933 = vmatmul.mubr.f32.gmra.mxu0 %v2708
      %v2934 = vpop.f32.mrf.mxu0
      %v2935 = vadd.f32 0.0, %v2934
      %v2936 = vpop.f32.mrf.mxu0
      %2937 = vdwg.mxu0
      %v2938 = vadd.f32 %v2422, %v2780
      %v2939 = vadd.f32 %v2427, %v2785
      %v2940 = vadd.f32 %v2432, %v2790
      %v2941 = vadd.f32 %v2437, %v2795
      %v2942 = vadd.f32 %v2442, %v2800
      %v2943 = vadd.f32 %v2447, %v2805
      %v2944 = vadd.f32 %v2452, %v2810
      %v2945 = vadd.f32 %v2457, %v2815
      %v2946 = vadd.f32 %v2462, %v2820
      %v2947 = vadd.f32 %v2467, %v2825
      %v2948 = vadd.f32 %v2472, %v2830
      %v2949 = vadd.f32 %v2477, %v2835
      %v2950 = vadd.f32 %v2482, %v2840
      %v2951 = vadd.f32 %v2487, %v2845
      %v2952 = vadd.f32 %v2492, %v2850
      %v2953 = vadd.f32 %v2497, %v2855
      %v2954 = vadd.f32 %v2502, %v2860
      %v2955 = vadd.f32 %v2507, %v2865
      %v2956 = vadd.f32 %v2512, %v2870
      %v2957 = vadd.f32 %v2517, %v2875
      %v2958 = vadd.f32 %v2522, %v2880
      %v2959 = vadd.f32 %v2527, %v2885
      %v2960 = vadd.f32 %v2532, %v2890
      %v2961 = vadd.f32 %v2537, %v2895
      %v2962 = vadd.f32 %v2542, %v2900
      %v2963 = vadd.f32 %v2547, %v2905
      %v2964 = vadd.f32 %v2552, %v2910
      %v2965 = vadd.f32 %v2557, %v2915
      %v2966 = vadd.f32 %v2562, %v2920
      %v2967 = vadd.f32 %v2567, %v2925
      %v2968 = vadd.f32 %v2572, %v2930
      %v2969 = vadd.f32 %v2577, %v2935
      %v2970 = vld [vmem:[%s263 + $0x2] sm:$0xff]
      %v2971 = vld [vmem:[%s263 + $0xa] sm:$0xff]
      %v2972 = vld [vmem:[%s263 + $0x1a] sm:$0xff]
      %v2973 = vld [vmem:[%s263 + $0x22] sm:$0xff]
      %v2974 = vld [vmem:[%s263 + $0x32] sm:$0xff]
      %v2975 = vld [vmem:[%s263 + $0x3a] sm:$0xff]
      %v2976 = vld [vmem:[%s263 + $0x4a] sm:$0xff]
      %v2977 = vld [vmem:[%s263 + $0x52] sm:$0xff]
      %v2978 = vld [vmem:[%s263 + $0x62] sm:$0xff]
      %v2979 = vld [vmem:[%s263 + $0x6a] sm:$0xff]
      %v2980 = vld [vmem:[%s263 + $0x7a] sm:$0xff]
      %v2981 = vld [vmem:[%s263 + $0x82] sm:$0xff]
      %v2982 = vld [vmem:[%s263 + $0x92] sm:$0xff]
      %v2983 = vld [vmem:[%s263 + $0x9a] sm:$0xff]
      %v2984 = vld [vmem:[%s263 + $0xaa] sm:$0xff]
      %v2985 = vld [vmem:[%s263 + $0xb2] sm:$0xff]
      %v2986 = vld [vmem:[%s263 + $0xc2] sm:$0xff]
      %v2987 = vld [vmem:[%s263 + $0xca] sm:$0xff]
      %v2988 = vld [vmem:[%s263 + $0xda] sm:$0xff]
      %v2989 = vld [vmem:[%s263 + $0xe2] sm:$0xff]
      %v2990 = vld [vmem:[%s263 + $0xf2] sm:$0xff]
      %v2991 = vld [vmem:[%s263 + $0xfa] sm:$0xff]
      %v2992 = vld [vmem:[%s263 + $0x10a] sm:$0xff]
      %v2993 = vld [vmem:[%s263 + $0x112] sm:$0xff]
      %v2994 = vld [vmem:[%s263 + $0x122] sm:$0xff]
      %v2995 = vld [vmem:[%s263 + $0x12a] sm:$0xff]
      %v2996 = vld [vmem:[%s263 + $0x13a] sm:$0xff]
      %v2997 = vld [vmem:[%s263 + $0x142] sm:$0xff]
      %v2998 = vld [vmem:[%s263 + $0x152] sm:$0xff]
      %v2999 = vld [vmem:[%s263 + $0x15a] sm:$0xff]
      %v3000 = vld [vmem:[%s263 + $0x16a] sm:$0xff]
      %v3001 = vld [vmem:[%s263 + $0x172] sm:$0xff]
      %s3002 = scalar_lea.vmem %s1, 28
      %v3003 = vld [vmem:[%s3002] sm:$0xf]
      %v3005 = vsel %vm264, %v2970, 0
      %v3008 = vsel %vm264, %v2971, 0
      %v3011 = vsel %vm264, %v2972, 0
      %v3014 = vsel %vm264, %v2973, 0
      %v3017 = vsel %vm264, %v2974, 0
      %v3020 = vsel %vm264, %v2975, 0
      %v3023 = vsel %vm264, %v2976, 0
      %v3026 = vsel %vm264, %v2977, 0
      %v3029 = vsel %vm264, %v2978, 0
      %v3032 = vsel %vm264, %v2979, 0
      %v3035 = vsel %vm264, %v2980, 0
      %v3038 = vsel %vm264, %v2981, 0
      %v3041 = vsel %vm264, %v2982, 0
      %v3044 = vsel %vm264, %v2983, 0
      %v3047 = vsel %vm264, %v2984, 0
      %v3050 = vsel %vm264, %v2985, 0
      %v3053 = vsel %vm264, %v2986, 0
      %v3056 = vsel %vm264, %v2987, 0
      %v3059 = vsel %vm264, %v2988, 0
      %v3062 = vsel %vm264, %v2989, 0
      %v3065 = vsel %vm264, %v2990, 0
      %v3068 = vsel %vm264, %v2991, 0
      %v3071 = vsel %vm264, %v2992, 0
      %v3074 = vsel %vm264, %v2993, 0
      %v3077 = vsel %vm264, %v2994, 0
      %v3080 = vsel %vm264, %v2995, 0
      %v3083 = vsel %vm264, %v2996, 0
      %v3086 = vsel %vm264, %v2997, 0
      %v3089 = vsel %vm264, %v2998, 0
      %v3092 = vsel %vm264, %v2999, 0
      %v3095 = vsel %vm264, %v3000, 0
      %v3098 = vsel %vm264, %v3001, 0
      %v3101 = vsel %vm461, %v3003, 0
      %3103 = vmatprep.subr.mxu0 0.0
      %3104 = vmatpush1.msra.mxu0 0.0
      %3105 = vmatprep.subr.mxu0 0.0
      %3106 = vmatpush1.msra.mxu0 0.0
      %3107 = vmatprep.subr.mxu0 0.0
      %3108 = vmatpush1.msra.mxu0 0.0
      %3109 = vmatprep.subr.mxu0 0.0
      %3110 = vmatpush1.msra.mxu0 0.0
      %3111 = vmatprep.subr.mxu0 0.0
      %3112 = vmatpush1.msra.mxu0 0.0
      %3113 = vmatprep.subr.mxu0 0.0
      %3114 = vmatpush1.msra.mxu0 0.0
      %3115 = vmatprep.subr.mxu0 0.0
      %3116 = vmatpush1.msra.mxu0 0.0
      %3117 = vmatprep.subr.mxu0 0.0
      %3118 = vmatpush1.msra.mxu0 0.0
      %3119 = vmatprep.subr.mxu0 0.0
      %3120 = vmatpush1.msra.mxu0 0.0
      %3121 = vmatprep.subr.mxu0 0.0
      %3122 = vmatpush1.msra.mxu0 0.0
      %3123 = vmatprep.subr.mxu0 0.0
      %3124 = vmatpush1.msra.mxu0 0.0
      %3125 = vmatprep.subr.mxu0 0.0
      %3126 = vmatpush1.msra.mxu0 0.0
      %3127 = vmatprep.subr.mxu0 0.0
      %3128 = vmatpush1.msra.mxu0 0.0
      %3129 = vmatprep.subr.mxu0 0.0
      %3130 = vmatpush1.msra.mxu0 0.0
      %3131 = vmatprep.subr.mxu0 0.0
      %3132 = vmatpush1.msra.mxu0 0.0
      %3133 = vmatprep.subr.mxu0 0.0
      %3134 = vmatpush1.msra.mxu0 %v3101
      %3135 = vmatprep.subr.mxu0 0.0
      %3136 = vmatpush2.msra.mxu0 0.0
      %3137 = vmatprep.subr.mxu0 0.0
      %3138 = vmatpush2.msra.mxu0 0.0
      %3139 = vmatprep.subr.mxu0 0.0
      %3140 = vmatpush2.msra.mxu0 0.0
      %3141 = vmatprep.subr.mxu0 0.0
      %3142 = vmatpush2.msra.mxu0 0.0
      %3143 = vmatprep.subr.mxu0 0.0
      %3144 = vmatpush2.msra.mxu0 0.0
      %3145 = vmatprep.subr.mxu0 0.0
      %3146 = vmatpush2.msra.mxu0 0.0
      %3147 = vmatprep.subr.mxu0 0.0
      %3148 = vmatpush2.msra.mxu0 0.0
      %3149 = vmatprep.subr.mxu0 0.0
      %3150 = vmatpush2.msra.mxu0 0.0
      %3151 = vmatprep.subr.mxu0 0.0
      %3152 = vmatpush2.msra.mxu0 0.0
      %3153 = vmatprep.subr.mxu0 0.0
      %3154 = vmatpush2.msra.mxu0 0.0
      %3155 = vmatprep.subr.mxu0 0.0
      %3156 = vmatpush2.msra.mxu0 0.0
      %3157 = vmatprep.subr.mxu0 0.0
      %3158 = vmatpush2.msra.mxu0 0.0
      %3159 = vmatprep.subr.mxu0 0.0
      %3160 = vmatpush2.msra.mxu0 0.0
      %3161 = vmatprep.subr.mxu0 0.0
      %3162 = vmatpush2.msra.mxu0 0.0
      %3163 = vmatprep.subr.mxu0 0.0
      %3164 = vmatpush2.msra.mxu0 0.0
      %3165 = vmatprep.subr.mxu0 0.0
      %3166 = vmatpush2.msra.mxu0 0.0
      %3167 = vmatprep.mubr.f32.mxu0 0.0
      %3168 = vmatmul.mubr.f32.gmra.mxu0 %v3005
      %v3169 = vpop.f32.mrf.mxu0
      %v3170 = vadd.f32 0.0, %v3169
      %v3171 = vpop.f32.mrf.mxu0
      %3172 = vmatprep.mubr.f32.mxu0 0.0
      %3173 = vmatmul.mubr.f32.gmra.mxu0 %v3008
      %v3174 = vpop.f32.mrf.mxu0
      %v3175 = vadd.f32 0.0, %v3174
      %v3176 = vpop.f32.mrf.mxu0
      %3177 = vmatprep.mubr.f32.mxu0 0.0
      %3178 = vmatmul.mubr.f32.gmra.mxu0 %v3011
      %v3179 = vpop.f32.mrf.mxu0
      %v3180 = vadd.f32 0.0, %v3179
      %v3181 = vpop.f32.mrf.mxu0
      %3182 = vmatprep.mubr.f32.mxu0 0.0
      %3183 = vmatmul.mubr.f32.gmra.mxu0 %v3014
      %v3184 = vpop.f32.mrf.mxu0
      %v3185 = vadd.f32 0.0, %v3184
      %v3186 = vpop.f32.mrf.mxu0
      %3187 = vmatprep.mubr.f32.mxu0 0.0
      %3188 = vmatmul.mubr.f32.gmra.mxu0 %v3017
      %v3189 = vpop.f32.mrf.mxu0
      %v3190 = vadd.f32 0.0, %v3189
      %v3191 = vpop.f32.mrf.mxu0
      %3192 = vmatprep.mubr.f32.mxu0 0.0
      %3193 = vmatmul.mubr.f32.gmra.mxu0 %v3020
      %v3194 = vpop.f32.mrf.mxu0
      %v3195 = vadd.f32 0.0, %v3194
      %v3196 = vpop.f32.mrf.mxu0
      %3197 = vmatprep.mubr.f32.mxu0 0.0
      %3198 = vmatmul.mubr.f32.gmra.mxu0 %v3023
      %v3199 = vpop.f32.mrf.mxu0
      %v3200 = vadd.f32 0.0, %v3199
      %v3201 = vpop.f32.mrf.mxu0
      %3202 = vmatprep.mubr.f32.mxu0 0.0
      %3203 = vmatmul.mubr.f32.gmra.mxu0 %v3026
      %v3204 = vpop.f32.mrf.mxu0
      %v3205 = vadd.f32 0.0, %v3204
      %v3206 = vpop.f32.mrf.mxu0
      %3207 = vmatprep.mubr.f32.mxu0 0.0
      %3208 = vmatmul.mubr.f32.gmra.mxu0 %v3029
      %v3209 = vpop.f32.mrf.mxu0
      %v3210 = vadd.f32 0.0, %v3209
      %v3211 = vpop.f32.mrf.mxu0
      %3212 = vmatprep.mubr.f32.mxu0 0.0
      %3213 = vmatmul.mubr.f32.gmra.mxu0 %v3032
      %v3214 = vpop.f32.mrf.mxu0
      %v3215 = vadd.f32 0.0, %v3214
      %v3216 = vpop.f32.mrf.mxu0
      %3217 = vmatprep.mubr.f32.mxu0 0.0
      %3218 = vmatmul.mubr.f32.gmra.mxu0 %v3035
      %v3219 = vpop.f32.mrf.mxu0
      %v3220 = vadd.f32 0.0, %v3219
      %v3221 = vpop.f32.mrf.mxu0
      %3222 = vmatprep.mubr.f32.mxu0 0.0
      %3223 = vmatmul.mubr.f32.gmra.mxu0 %v3038
      %v3224 = vpop.f32.mrf.mxu0
      %v3225 = vadd.f32 0.0, %v3224
      %v3226 = vpop.f32.mrf.mxu0
      %3227 = vmatprep.mubr.f32.mxu0 0.0
      %3228 = vmatmul.mubr.f32.gmra.mxu0 %v3041
      %v3229 = vpop.f32.mrf.mxu0
      %v3230 = vadd.f32 0.0, %v3229
      %v3231 = vpop.f32.mrf.mxu0
      %3232 = vmatprep.mubr.f32.mxu0 0.0
      %3233 = vmatmul.mubr.f32.gmra.mxu0 %v3044
      %v3234 = vpop.f32.mrf.mxu0
      %v3235 = vadd.f32 0.0, %v3234
      %v3236 = vpop.f32.mrf.mxu0
      %3237 = vmatprep.mubr.f32.mxu0 0.0
      %3238 = vmatmul.mubr.f32.gmra.mxu0 %v3047
      %v3239 = vpop.f32.mrf.mxu0
      %v3240 = vadd.f32 0.0, %v3239
      %v3241 = vpop.f32.mrf.mxu0
      %3242 = vmatprep.mubr.f32.mxu0 0.0
      %3243 = vmatmul.mubr.f32.gmra.mxu0 %v3050
      %v3244 = vpop.f32.mrf.mxu0
      %v3245 = vadd.f32 0.0, %v3244
      %v3246 = vpop.f32.mrf.mxu0
      %3247 = vmatprep.mubr.f32.mxu0 0.0
      %3248 = vmatmul.mubr.f32.gmra.mxu0 %v3053
      %v3249 = vpop.f32.mrf.mxu0
      %v3250 = vadd.f32 0.0, %v3249
      %v3251 = vpop.f32.mrf.mxu0
      %3252 = vmatprep.mubr.f32.mxu0 0.0
      %3253 = vmatmul.mubr.f32.gmra.mxu0 %v3056
      %v3254 = vpop.f32.mrf.mxu0
      %v3255 = vadd.f32 0.0, %v3254
      %v3256 = vpop.f32.mrf.mxu0
      %3257 = vmatprep.mubr.f32.mxu0 0.0
      %3258 = vmatmul.mubr.f32.gmra.mxu0 %v3059
      %v3259 = vpop.f32.mrf.mxu0
      %v3260 = vadd.f32 0.0, %v3259
      %v3261 = vpop.f32.mrf.mxu0
      %3262 = vmatprep.mubr.f32.mxu0 0.0
      %3263 = vmatmul.mubr.f32.gmra.mxu0 %v3062
      %v3264 = vpop.f32.mrf.mxu0
      %v3265 = vadd.f32 0.0, %v3264
      %v3266 = vpop.f32.mrf.mxu0
      %3267 = vmatprep.mubr.f32.mxu0 0.0
      %3268 = vmatmul.mubr.f32.gmra.mxu0 %v3065
      %v3269 = vpop.f32.mrf.mxu0
      %v3270 = vadd.f32 0.0, %v3269
      %v3271 = vpop.f32.mrf.mxu0
      %3272 = vmatprep.mubr.f32.mxu0 0.0
      %3273 = vmatmul.mubr.f32.gmra.mxu0 %v3068
      %v3274 = vpop.f32.mrf.mxu0
      %v3275 = vadd.f32 0.0, %v3274
      %v3276 = vpop.f32.mrf.mxu0
      %3277 = vmatprep.mubr.f32.mxu0 0.0
      %3278 = vmatmul.mubr.f32.gmra.mxu0 %v3071
      %v3279 = vpop.f32.mrf.mxu0
      %v3280 = vadd.f32 0.0, %v3279
      %v3281 = vpop.f32.mrf.mxu0
      %3282 = vmatprep.mubr.f32.mxu0 0.0
      %3283 = vmatmul.mubr.f32.gmra.mxu0 %v3074
      %v3284 = vpop.f32.mrf.mxu0
      %v3285 = vadd.f32 0.0, %v3284
      %v3286 = vpop.f32.mrf.mxu0
      %3287 = vmatprep.mubr.f32.mxu0 0.0
      %3288 = vmatmul.mubr.f32.gmra.mxu0 %v3077
      %v3289 = vpop.f32.mrf.mxu0
      %v3290 = vadd.f32 0.0, %v3289
      %v3291 = vpop.f32.mrf.mxu0
      %3292 = vmatprep.mubr.f32.mxu0 0.0
      %3293 = vmatmul.mubr.f32.gmra.mxu0 %v3080
      %v3294 = vpop.f32.mrf.mxu0
      %v3295 = vadd.f32 0.0, %v3294
      %v3296 = vpop.f32.mrf.mxu0
      %3297 = vmatprep.mubr.f32.mxu0 0.0
      %3298 = vmatmul.mubr.f32.gmra.mxu0 %v3083
      %v3299 = vpop.f32.mrf.mxu0
      %v3300 = vadd.f32 0.0, %v3299
      %v3301 = vpop.f32.mrf.mxu0
      %3302 = vmatprep.mubr.f32.mxu0 0.0
      %3303 = vmatmul.mubr.f32.gmra.mxu0 %v3086
      %v3304 = vpop.f32.mrf.mxu0
      %v3305 = vadd.f32 0.0, %v3304
      %v3306 = vpop.f32.mrf.mxu0
      %3307 = vmatprep.mubr.f32.mxu0 0.0
      %3308 = vmatmul.mubr.f32.gmra.mxu0 %v3089
      %v3309 = vpop.f32.mrf.mxu0
      %v3310 = vadd.f32 0.0, %v3309
      %v3311 = vpop.f32.mrf.mxu0
      %3312 = vmatprep.mubr.f32.mxu0 0.0
      %3313 = vmatmul.mubr.f32.gmra.mxu0 %v3092
      %v3314 = vpop.f32.mrf.mxu0
      %v3315 = vadd.f32 0.0, %v3314
      %v3316 = vpop.f32.mrf.mxu0
      %3317 = vmatprep.mubr.f32.mxu0 0.0
      %3318 = vmatmul.mubr.f32.gmra.mxu0 %v3095
      %v3319 = vpop.f32.mrf.mxu0
      %v3320 = vadd.f32 0.0, %v3319
      %v3321 = vpop.f32.mrf.mxu0
      %3322 = vmatprep.mubr.f32.mxu0 0.0
      %3323 = vmatmul.mubr.f32.gmra.mxu0 %v3098
      %v3324 = vpop.f32.mrf.mxu0
      %v3325 = vadd.f32 0.0, %v3324
      %v3326 = vpop.f32.mrf.mxu0
      %3327 = vdwg.mxu0
      %v3328 = vadd.f32 %v2938, %v3170
      %v3329 = vadd.f32 %v2939, %v3175
      %v3330 = vadd.f32 %v2940, %v3180
      %v3331 = vadd.f32 %v2941, %v3185
      %v3332 = vadd.f32 %v2942, %v3190
      %v3333 = vadd.f32 %v2943, %v3195
      %v3334 = vadd.f32 %v2944, %v3200
      %v3335 = vadd.f32 %v2945, %v3205
      %v3336 = vadd.f32 %v2946, %v3210
      %v3337 = vadd.f32 %v2947, %v3215
      %v3338 = vadd.f32 %v2948, %v3220
      %v3339 = vadd.f32 %v2949, %v3225
      %v3340 = vadd.f32 %v2950, %v3230
      %v3341 = vadd.f32 %v2951, %v3235
      %v3342 = vadd.f32 %v2952, %v3240
      %v3343 = vadd.f32 %v2953, %v3245
      %v3344 = vadd.f32 %v2954, %v3250
      %v3345 = vadd.f32 %v2955, %v3255
      %v3346 = vadd.f32 %v2956, %v3260
      %v3347 = vadd.f32 %v2957, %v3265
      %v3348 = vadd.f32 %v2958, %v3270
      %v3349 = vadd.f32 %v2959, %v3275
      %v3350 = vadd.f32 %v2960, %v3280
      %v3351 = vadd.f32 %v2961, %v3285
      %v3352 = vadd.f32 %v2962, %v3290
      %v3353 = vadd.f32 %v2963, %v3295
      %v3354 = vadd.f32 %v2964, %v3300
      %v3355 = vadd.f32 %v2965, %v3305
      %v3356 = vadd.f32 %v2966, %v3310
      %v3357 = vadd.f32 %v2967, %v3315
      %v3358 = vadd.f32 %v2968, %v3320
      %v3359 = vadd.f32 %v2969, %v3325
      %v3360 = vadd.f32 %v3328, %v1798
      %v3361 = vadd.f32 %v3329, %v1798
      %v3362 = vadd.f32 %v3330, %v1798
      %v3363 = vadd.f32 %v3331, %v1798
      %v3364 = vadd.f32 %v3332, %v1798
      %v3365 = vadd.f32 %v3333, %v1798
      %v3366 = vadd.f32 %v3334, %v1798
      %v3367 = vadd.f32 %v3335, %v1798
      %v3368 = vadd.f32 %v3336, %v1798
      %v3369 = vadd.f32 %v3337, %v1798
      %v3370 = vadd.f32 %v3338, %v1798
      %v3371 = vadd.f32 %v3339, %v1798
      %v3372 = vadd.f32 %v3340, %v1798
      %v3373 = vadd.f32 %v3341, %v1798
      %v3374 = vadd.f32 %v3342, %v1798
      %v3375 = vadd.f32 %v3343, %v1798
      %v3376 = vadd.f32 %v3344, %v1798
      %v3377 = vadd.f32 %v3345, %v1798
      %v3378 = vadd.f32 %v3346, %v1798
      %v3379 = vadd.f32 %v3347, %v1798
      %v3380 = vadd.f32 %v3348, %v1798
      %v3381 = vadd.f32 %v3349, %v1798
      %v3382 = vadd.f32 %v3350, %v1798
      %v3383 = vadd.f32 %v3351, %v1798
      %v3384 = vadd.f32 %v3352, %v1798
      %v3385 = vadd.f32 %v3353, %v1798
      %v3386 = vadd.f32 %v3354, %v1798
      %v3387 = vadd.f32 %v3355, %v1798
      %v3388 = vadd.f32 %v3356, %v1798
      %v3389 = vadd.f32 %v3357, %v1798
      %v3390 = vadd.f32 %v3358, %v1798
      %v3391 = vadd.f32 %v3359, %v1798
      %s3392 = scalar_lea.vmem %s170, 256
      %3393 = vst.msk [vmem:[%s3392] sm:$0xff] %vm264, %v3360
      %3394 = vst.msk [vmem:[%s3392 + $0x8] sm:$0xff] %vm264, %v3361
      %3395 = vst.msk [vmem:[%s3392 + $0x10] sm:$0xff] %vm264, %v3362
      %3396 = vst.msk [vmem:[%s3392 + $0x18] sm:$0xff] %vm264, %v3363
      %3397 = vst.msk [vmem:[%s3392 + $0x20] sm:$0xff] %vm264, %v3364
      %3398 = vst.msk [vmem:[%s3392 + $0x28] sm:$0xff] %vm264, %v3365
      %3399 = vst.msk [vmem:[%s3392 + $0x30] sm:$0xff] %vm264, %v3366
      %3400 = vst.msk [vmem:[%s3392 + $0x38] sm:$0xff] %vm264, %v3367
      %3401 = vst.msk [vmem:[%s3392 + $0x40] sm:$0xff] %vm264, %v3368
      %3402 = vst.msk [vmem:[%s3392 + $0x48] sm:$0xff] %vm264, %v3369
      %3403 = vst.msk [vmem:[%s3392 + $0x50] sm:$0xff] %vm264, %v3370
      %3404 = vst.msk [vmem:[%s3392 + $0x58] sm:$0xff] %vm264, %v3371
      %3405 = vst.msk [vmem:[%s3392 + $0x60] sm:$0xff] %vm264, %v3372
      %3406 = vst.msk [vmem:[%s3392 + $0x68] sm:$0xff] %vm264, %v3373
      %3407 = vst.msk [vmem:[%s3392 + $0x70] sm:$0xff] %vm264, %v3374
      %3408 = vst.msk [vmem:[%s3392 + $0x78] sm:$0xff] %vm264, %v3375
      %3409 = vst.msk [vmem:[%s3392 + $0x80] sm:$0xff] %vm264, %v3376
      %3410 = vst.msk [vmem:[%s3392 + $0x88] sm:$0xff] %vm264, %v3377
      %3411 = vst.msk [vmem:[%s3392 + $0x90] sm:$0xff] %vm264, %v3378
      %3412 = vst.msk [vmem:[%s3392 + $0x98] sm:$0xff] %vm264, %v3379
      %3413 = vst.msk [vmem:[%s3392 + $0xa0] sm:$0xff] %vm264, %v3380
      %3414 = vst.msk [vmem:[%s3392 + $0xa8] sm:$0xff] %vm264, %v3381
      %3415 = vst.msk [vmem:[%s3392 + $0xb0] sm:$0xff] %vm264, %v3382
      %3416 = vst.msk [vmem:[%s3392 + $0xb8] sm:$0xff] %vm264, %v3383
      %3417 = vst.msk [vmem:[%s3392 + $0xc0] sm:$0xff] %vm264, %v3384
      %3418 = vst.msk [vmem:[%s3392 + $0xc8] sm:$0xff] %vm264, %v3385
      %3419 = vst.msk [vmem:[%s3392 + $0xd0] sm:$0xff] %vm264, %v3386
      %3420 = vst.msk [vmem:[%s3392 + $0xd8] sm:$0xff] %vm264, %v3387
      %3421 = vst.msk [vmem:[%s3392 + $0xe0] sm:$0xff] %vm264, %v3388
      %3422 = vst.msk [vmem:[%s3392 + $0xe8] sm:$0xff] %vm264, %v3389
      %3423 = vst.msk [vmem:[%s3392 + $0xf0] sm:$0xff] %vm264, %v3390
      %3424 = vst.msk [vmem:[%s3392 + $0xf8] sm:$0xff] %vm264, %v3391
      %v3425 = vld [vmem:[%s263] sm:$0xff]
      %v3426 = vld [vmem:[%s263 + $0x8] sm:$0xff]
      %v3427 = vld [vmem:[%s263 + $0x18] sm:$0xff]
      %v3428 = vld [vmem:[%s263 + $0x20] sm:$0xff]
      %v3429 = vld [vmem:[%s263 + $0x30] sm:$0xff]
      %v3430 = vld [vmem:[%s263 + $0x38] sm:$0xff]
      %v3431 = vld [vmem:[%s263 + $0x48] sm:$0xff]
      %v3432 = vld [vmem:[%s263 + $0x50] sm:$0xff]
      %v3433 = vld [vmem:[%s263 + $0x60] sm:$0xff]
      %v3434 = vld [vmem:[%s263 + $0x68] sm:$0xff]
      %v3435 = vld [vmem:[%s263 + $0x78] sm:$0xff]
      %v3436 = vld [vmem:[%s263 + $0x80] sm:$0xff]
      %v3437 = vld [vmem:[%s263 + $0x90] sm:$0xff]
      %v3438 = vld [vmem:[%s263 + $0x98] sm:$0xff]
      %v3439 = vld [vmem:[%s263 + $0xa8] sm:$0xff]
      %v3440 = vld [vmem:[%s263 + $0xb0] sm:$0xff]
      %v3441 = vld [vmem:[%s263 + $0xc0] sm:$0xff]
      %v3442 = vld [vmem:[%s263 + $0xc8] sm:$0xff]
      %v3443 = vld [vmem:[%s263 + $0xd8] sm:$0xff]
      %v3444 = vld [vmem:[%s263 + $0xe0] sm:$0xff]
      %v3445 = vld [vmem:[%s263 + $0xf0] sm:$0xff]
      %v3446 = vld [vmem:[%s263 + $0xf8] sm:$0xff]
      %v3447 = vld [vmem:[%s263 + $0x108] sm:$0xff]
      %v3448 = vld [vmem:[%s263 + $0x110] sm:$0xff]
      %v3449 = vld [vmem:[%s263 + $0x120] sm:$0xff]
      %v3450 = vld [vmem:[%s263 + $0x128] sm:$0xff]
      %v3451 = vld [vmem:[%s263 + $0x138] sm:$0xff]
      %v3452 = vld [vmem:[%s263 + $0x140] sm:$0xff]
      %v3453 = vld [vmem:[%s263 + $0x150] sm:$0xff]
      %v3454 = vld [vmem:[%s263 + $0x158] sm:$0xff]
      %v3455 = vld [vmem:[%s263 + $0x168] sm:$0xff]
      %v3456 = vld [vmem:[%s263 + $0x170] sm:$0xff]
      %s3457 = scalar_lea.vmem %s1, 32
      %v3458 = vld [vmem:[%s3457] sm:$0xf]
      %v3459 = vld [vmem:[%s263 + $0x1] sm:$0xff]
      %v3460 = vld [vmem:[%s263 + $0x9] sm:$0xff]
      %v3461 = vld [vmem:[%s263 + $0x19] sm:$0xff]
      %v3462 = vld [vmem:[%s263 + $0x21] sm:$0xff]
      %v3463 = vld [vmem:[%s263 + $0x31] sm:$0xff]
      %v3464 = vld [vmem:[%s263 + $0x39] sm:$0xff]
      %v3465 = vld [vmem:[%s263 + $0x49] sm:$0xff]
      %v3466 = vld [vmem:[%s263 + $0x51] sm:$0xff]
      %v3467 = vld [vmem:[%s263 + $0x61] sm:$0xff]
      %v3468 = vld [vmem:[%s263 + $0x69] sm:$0xff]
      %v3469 = vld [vmem:[%s263 + $0x79] sm:$0xff]
      %v3470 = vld [vmem:[%s263 + $0x81] sm:$0xff]
      %v3471 = vld [vmem:[%s263 + $0x91] sm:$0xff]
      %v3472 = vld [vmem:[%s263 + $0x99] sm:$0xff]
      %v3473 = vld [vmem:[%s263 + $0xa9] sm:$0xff]
      %v3474 = vld [vmem:[%s263 + $0xb1] sm:$0xff]
      %v3475 = vld [vmem:[%s263 + $0xc1] sm:$0xff]
      %v3476 = vld [vmem:[%s263 + $0xc9] sm:$0xff]
      %v3477 = vld [vmem:[%s263 + $0xd9] sm:$0xff]
      %v3478 = vld [vmem:[%s263 + $0xe1] sm:$0xff]
      %v3479 = vld [vmem:[%s263 + $0xf1] sm:$0xff]
      %v3480 = vld [vmem:[%s263 + $0xf9] sm:$0xff]
      %v3481 = vld [vmem:[%s263 + $0x109] sm:$0xff]
      %v3482 = vld [vmem:[%s263 + $0x111] sm:$0xff]
      %v3483 = vld [vmem:[%s263 + $0x121] sm:$0xff]
      %v3484 = vld [vmem:[%s263 + $0x129] sm:$0xff]
      %v3485 = vld [vmem:[%s263 + $0x139] sm:$0xff]
      %v3486 = vld [vmem:[%s263 + $0x141] sm:$0xff]
      %v3487 = vld [vmem:[%s263 + $0x151] sm:$0xff]
      %v3488 = vld [vmem:[%s263 + $0x159] sm:$0xff]
      %v3489 = vld [vmem:[%s263 + $0x169] sm:$0xff]
      %v3490 = vld [vmem:[%s263 + $0x171] sm:$0xff]
      %s3491 = scalar_lea.vmem %s1, 36
      %v3492 = vld [vmem:[%s3491] sm:$0xf]
      %v3494 = vsel %vm264, %v3459, 0
      %v3497 = vsel %vm264, %v3460, 0
      %v3500 = vsel %vm264, %v3461, 0
      %v3503 = vsel %vm264, %v3462, 0
      %v3506 = vsel %vm264, %v3463, 0
      %v3509 = vsel %vm264, %v3464, 0
      %v3512 = vsel %vm264, %v3465, 0
      %v3515 = vsel %vm264, %v3466, 0
      %v3518 = vsel %vm264, %v3467, 0
      %v3521 = vsel %vm264, %v3468, 0
      %v3524 = vsel %vm264, %v3469, 0
      %v3527 = vsel %vm264, %v3470, 0
      %v3530 = vsel %vm264, %v3471, 0
      %v3533 = vsel %vm264, %v3472, 0
      %v3536 = vsel %vm264, %v3473, 0
      %v3539 = vsel %vm264, %v3474, 0
      %v3542 = vsel %vm264, %v3475, 0
      %v3545 = vsel %vm264, %v3476, 0
      %v3548 = vsel %vm264, %v3477, 0
      %v3551 = vsel %vm264, %v3478, 0
      %v3554 = vsel %vm264, %v3479, 0
      %v3557 = vsel %vm264, %v3480, 0
      %v3560 = vsel %vm264, %v3481, 0
      %v3563 = vsel %vm264, %v3482, 0
      %v3566 = vsel %vm264, %v3483, 0
      %v3569 = vsel %vm264, %v3484, 0
      %v3572 = vsel %vm264, %v3485, 0
      %v3575 = vsel %vm264, %v3486, 0
      %v3578 = vsel %vm264, %v3487, 0
      %v3581 = vsel %vm264, %v3488, 0
      %v3584 = vsel %vm264, %v3489, 0
      %v3587 = vsel %vm264, %v3490, 0
      %v3590 = vsel %vm461, %v3492, 0
      %3592 = vmatprep.subr.mxu0 0.0
      %3593 = vmatpush1.msra.mxu0 0.0
      %3594 = vmatprep.subr.mxu0 0.0
      %3595 = vmatpush1.msra.mxu0 0.0
      %3596 = vmatprep.subr.mxu0 0.0
      %3597 = vmatpush1.msra.mxu0 0.0
      %3598 = vmatprep.subr.mxu0 0.0
      %3599 = vmatpush1.msra.mxu0 0.0
      %3600 = vmatprep.subr.mxu0 0.0
      %3601 = vmatpush1.msra.mxu0 0.0
      %3602 = vmatprep.subr.mxu0 0.0
      %3603 = vmatpush1.msra.mxu0 0.0
      %3604 = vmatprep.subr.mxu0 0.0
      %3605 = vmatpush1.msra.mxu0 0.0
      %3606 = vmatprep.subr.mxu0 0.0
      %3607 = vmatpush1.msra.mxu0 0.0
      %3608 = vmatprep.subr.mxu0 0.0
      %3609 = vmatpush1.msra.mxu0 0.0
      %3610 = vmatprep.subr.mxu0 0.0
      %3611 = vmatpush1.msra.mxu0 0.0
      %3612 = vmatprep.subr.mxu0 0.0
      %3613 = vmatpush1.msra.mxu0 0.0
      %3614 = vmatprep.subr.mxu0 0.0
      %3615 = vmatpush1.msra.mxu0 0.0
      %3616 = vmatprep.subr.mxu0 0.0
      %3617 = vmatpush1.msra.mxu0 0.0
      %3618 = vmatprep.subr.mxu0 0.0
      %3619 = vmatpush1.msra.mxu0 0.0
      %3620 = vmatprep.subr.mxu0 0.0
      %3621 = vmatpush1.msra.mxu0 0.0
      %3622 = vmatprep.subr.mxu0 0.0
      %3623 = vmatpush1.msra.mxu0 %v3590
      %3624 = vmatprep.subr.mxu0 0.0
      %3625 = vmatpush2.msra.mxu0 0.0
      %3626 = vmatprep.subr.mxu0 0.0
      %3627 = vmatpush2.msra.mxu0 0.0
      %3628 = vmatprep.subr.mxu0 0.0
      %3629 = vmatpush2.msra.mxu0 0.0
      %3630 = vmatprep.subr.mxu0 0.0
      %3631 = vmatpush2.msra.mxu0 0.0
      %3632 = vmatprep.subr.mxu0 0.0
      %3633 = vmatpush2.msra.mxu0 0.0
      %3634 = vmatprep.subr.mxu0 0.0
      %3635 = vmatpush2.msra.mxu0 0.0
      %3636 = vmatprep.subr.mxu0 0.0
      %3637 = vmatpush2.msra.mxu0 0.0
      %3638 = vmatprep.subr.mxu0 0.0
      %3639 = vmatpush2.msra.mxu0 0.0
      %3640 = vmatprep.subr.mxu0 0.0
      %3641 = vmatpush2.msra.mxu0 0.0
      %3642 = vmatprep.subr.mxu0 0.0
      %3643 = vmatpush2.msra.mxu0 0.0
      %3644 = vmatprep.subr.mxu0 0.0
      %3645 = vmatpush2.msra.mxu0 0.0
      %3646 = vmatprep.subr.mxu0 0.0
      %3647 = vmatpush2.msra.mxu0 0.0
      %3648 = vmatprep.subr.mxu0 0.0
      %3649 = vmatpush2.msra.mxu0 0.0
      %3650 = vmatprep.subr.mxu0 0.0
      %3651 = vmatpush2.msra.mxu0 0.0
      %3652 = vmatprep.subr.mxu0 0.0
      %3653 = vmatpush2.msra.mxu0 0.0
      %3654 = vmatprep.subr.mxu0 0.0
      %3655 = vmatpush2.msra.mxu0 0.0
      %3656 = vmatprep.mubr.f32.mxu0 0.0
      %3657 = vmatmul.mubr.f32.gmra.mxu0 %v3494
      %v3658 = vpop.f32.mrf.mxu0
      %v3659 = vadd.f32 0.0, %v3658
      %v3660 = vpop.f32.mrf.mxu0
      %3661 = vmatprep.mubr.f32.mxu0 0.0
      %3662 = vmatmul.mubr.f32.gmra.mxu0 %v3497
      %v3663 = vpop.f32.mrf.mxu0
      %v3664 = vadd.f32 0.0, %v3663
      %v3665 = vpop.f32.mrf.mxu0
      %3666 = vmatprep.mubr.f32.mxu0 0.0
      %3667 = vmatmul.mubr.f32.gmra.mxu0 %v3500
      %v3668 = vpop.f32.mrf.mxu0
      %v3669 = vadd.f32 0.0, %v3668
      %v3670 = vpop.f32.mrf.mxu0
      %3671 = vmatprep.mubr.f32.mxu0 0.0
      %3672 = vmatmul.mubr.f32.gmra.mxu0 %v3503
      %v3673 = vpop.f32.mrf.mxu0
      %v3674 = vadd.f32 0.0, %v3673
      %v3675 = vpop.f32.mrf.mxu0
      %3676 = vmatprep.mubr.f32.mxu0 0.0
      %3677 = vmatmul.mubr.f32.gmra.mxu0 %v3506
      %v3678 = vpop.f32.mrf.mxu0
      %v3679 = vadd.f32 0.0, %v3678
      %v3680 = vpop.f32.mrf.mxu0
      %3681 = vmatprep.mubr.f32.mxu0 0.0
      %3682 = vmatmul.mubr.f32.gmra.mxu0 %v3509
      %v3683 = vpop.f32.mrf.mxu0
      %v3684 = vadd.f32 0.0, %v3683
      %v3685 = vpop.f32.mrf.mxu0
      %3686 = vmatprep.mubr.f32.mxu0 0.0
      %3687 = vmatmul.mubr.f32.gmra.mxu0 %v3512
      %v3688 = vpop.f32.mrf.mxu0
      %v3689 = vadd.f32 0.0, %v3688
      %v3690 = vpop.f32.mrf.mxu0
      %3691 = vmatprep.mubr.f32.mxu0 0.0
      %3692 = vmatmul.mubr.f32.gmra.mxu0 %v3515
      %v3693 = vpop.f32.mrf.mxu0
      %v3694 = vadd.f32 0.0, %v3693
      %v3695 = vpop.f32.mrf.mxu0
      %3696 = vmatprep.mubr.f32.mxu0 0.0
      %3697 = vmatmul.mubr.f32.gmra.mxu0 %v3518
      %v3698 = vpop.f32.mrf.mxu0
      %v3699 = vadd.f32 0.0, %v3698
      %v3700 = vpop.f32.mrf.mxu0
      %3701 = vmatprep.mubr.f32.mxu0 0.0
      %3702 = vmatmul.mubr.f32.gmra.mxu0 %v3521
      %v3703 = vpop.f32.mrf.mxu0
      %v3704 = vadd.f32 0.0, %v3703
      %v3705 = vpop.f32.mrf.mxu0
      %3706 = vmatprep.mubr.f32.mxu0 0.0
      %3707 = vmatmul.mubr.f32.gmra.mxu0 %v3524
      %v3708 = vpop.f32.mrf.mxu0
      %v3709 = vadd.f32 0.0, %v3708
      %v3710 = vpop.f32.mrf.mxu0
      %3711 = vmatprep.mubr.f32.mxu0 0.0
      %3712 = vmatmul.mubr.f32.gmra.mxu0 %v3527
      %v3713 = vpop.f32.mrf.mxu0
      %v3714 = vadd.f32 0.0, %v3713
      %v3715 = vpop.f32.mrf.mxu0
      %3716 = vmatprep.mubr.f32.mxu0 0.0
      %3717 = vmatmul.mubr.f32.gmra.mxu0 %v3530
      %v3718 = vpop.f32.mrf.mxu0
      %v3719 = vadd.f32 0.0, %v3718
      %v3720 = vpop.f32.mrf.mxu0
      %3721 = vmatprep.mubr.f32.mxu0 0.0
      %3722 = vmatmul.mubr.f32.gmra.mxu0 %v3533
      %v3723 = vpop.f32.mrf.mxu0
      %v3724 = vadd.f32 0.0, %v3723
      %v3725 = vpop.f32.mrf.mxu0
      %3726 = vmatprep.mubr.f32.mxu0 0.0
      %3727 = vmatmul.mubr.f32.gmra.mxu0 %v3536
      %v3728 = vpop.f32.mrf.mxu0
      %v3729 = vadd.f32 0.0, %v3728
      %v3730 = vpop.f32.mrf.mxu0
      %3731 = vmatprep.mubr.f32.mxu0 0.0
      %3732 = vmatmul.mubr.f32.gmra.mxu0 %v3539
      %v3733 = vpop.f32.mrf.mxu0
      %v3734 = vadd.f32 0.0, %v3733
      %v3735 = vpop.f32.mrf.mxu0
      %3736 = vmatprep.mubr.f32.mxu0 0.0
      %3737 = vmatmul.mubr.f32.gmra.mxu0 %v3542
      %v3738 = vpop.f32.mrf.mxu0
      %v3739 = vadd.f32 0.0, %v3738
      %v3740 = vpop.f32.mrf.mxu0
      %3741 = vmatprep.mubr.f32.mxu0 0.0
      %3742 = vmatmul.mubr.f32.gmra.mxu0 %v3545
      %v3743 = vpop.f32.mrf.mxu0
      %v3744 = vadd.f32 0.0, %v3743
      %v3745 = vpop.f32.mrf.mxu0
      %3746 = vmatprep.mubr.f32.mxu0 0.0
      %3747 = vmatmul.mubr.f32.gmra.mxu0 %v3548
      %v3748 = vpop.f32.mrf.mxu0
      %v3749 = vadd.f32 0.0, %v3748
      %v3750 = vpop.f32.mrf.mxu0
      %3751 = vmatprep.mubr.f32.mxu0 0.0
      %3752 = vmatmul.mubr.f32.gmra.mxu0 %v3551
      %v3753 = vpop.f32.mrf.mxu0
      %v3754 = vadd.f32 0.0, %v3753
      %v3755 = vpop.f32.mrf.mxu0
      %3756 = vmatprep.mubr.f32.mxu0 0.0
      %3757 = vmatmul.mubr.f32.gmra.mxu0 %v3554
      %v3758 = vpop.f32.mrf.mxu0
      %v3759 = vadd.f32 0.0, %v3758
      %v3760 = vpop.f32.mrf.mxu0
      %3761 = vmatprep.mubr.f32.mxu0 0.0
      %3762 = vmatmul.mubr.f32.gmra.mxu0 %v3557
      %v3763 = vpop.f32.mrf.mxu0
      %v3764 = vadd.f32 0.0, %v3763
      %v3765 = vpop.f32.mrf.mxu0
      %3766 = vmatprep.mubr.f32.mxu0 0.0
      %3767 = vmatmul.mubr.f32.gmra.mxu0 %v3560
      %v3768 = vpop.f32.mrf.mxu0
      %v3769 = vadd.f32 0.0, %v3768
      %v3770 = vpop.f32.mrf.mxu0
      %3771 = vmatprep.mubr.f32.mxu0 0.0
      %3772 = vmatmul.mubr.f32.gmra.mxu0 %v3563
      %v3773 = vpop.f32.mrf.mxu0
      %v3774 = vadd.f32 0.0, %v3773
      %v3775 = vpop.f32.mrf.mxu0
      %3776 = vmatprep.mubr.f32.mxu0 0.0
      %3777 = vmatmul.mubr.f32.gmra.mxu0 %v3566
      %v3778 = vpop.f32.mrf.mxu0
      %v3779 = vadd.f32 0.0, %v3778
      %v3780 = vpop.f32.mrf.mxu0
      %3781 = vmatprep.mubr.f32.mxu0 0.0
      %3782 = vmatmul.mubr.f32.gmra.mxu0 %v3569
      %v3783 = vpop.f32.mrf.mxu0
      %v3784 = vadd.f32 0.0, %v3783
      %v3785 = vpop.f32.mrf.mxu0
      %3786 = vmatprep.mubr.f32.mxu0 0.0
      %3787 = vmatmul.mubr.f32.gmra.mxu0 %v3572
      %v3788 = vpop.f32.mrf.mxu0
      %v3789 = vadd.f32 0.0, %v3788
      %v3790 = vpop.f32.mrf.mxu0
      %3791 = vmatprep.mubr.f32.mxu0 0.0
      %3792 = vmatmul.mubr.f32.gmra.mxu0 %v3575
      %v3793 = vpop.f32.mrf.mxu0
      %v3794 = vadd.f32 0.0, %v3793
      %v3795 = vpop.f32.mrf.mxu0
      %3796 = vmatprep.mubr.f32.mxu0 0.0
      %3797 = vmatmul.mubr.f32.gmra.mxu0 %v3578
      %v3798 = vpop.f32.mrf.mxu0
      %v3799 = vadd.f32 0.0, %v3798
      %v3800 = vpop.f32.mrf.mxu0
      %3801 = vmatprep.mubr.f32.mxu0 0.0
      %3802 = vmatmul.mubr.f32.gmra.mxu0 %v3581
      %v3803 = vpop.f32.mrf.mxu0
      %v3804 = vadd.f32 0.0, %v3803
      %v3805 = vpop.f32.mrf.mxu0
      %3806 = vmatprep.mubr.f32.mxu0 0.0
      %3807 = vmatmul.mubr.f32.gmra.mxu0 %v3584
      %v3808 = vpop.f32.mrf.mxu0
      %v3809 = vadd.f32 0.0, %v3808
      %v3810 = vpop.f32.mrf.mxu0
      %3811 = vmatprep.mubr.f32.mxu0 0.0
      %3812 = vmatmul.mubr.f32.gmra.mxu0 %v3587
      %v3813 = vpop.f32.mrf.mxu0
      %v3814 = vadd.f32 0.0, %v3813
      %v3815 = vpop.f32.mrf.mxu0
      %3816 = vdwg.mxu0
      %v3818 = vsel %vm264, %v3425, 0
      %v3821 = vsel %vm264, %v3426, 0
      %v3824 = vsel %vm264, %v3427, 0
      %v3827 = vsel %vm264, %v3428, 0
      %v3830 = vsel %vm264, %v3429, 0
      %v3833 = vsel %vm264, %v3430, 0
      %v3836 = vsel %vm264, %v3431, 0
      %v3839 = vsel %vm264, %v3432, 0
      %v3842 = vsel %vm264, %v3433, 0
      %v3845 = vsel %vm264, %v3434, 0
      %v3848 = vsel %vm264, %v3435, 0
      %v3851 = vsel %vm264, %v3436, 0
      %v3854 = vsel %vm264, %v3437, 0
      %v3857 = vsel %vm264, %v3438, 0
      %v3860 = vsel %vm264, %v3439, 0
      %v3863 = vsel %vm264, %v3440, 0
      %v3866 = vsel %vm264, %v3441, 0
      %v3869 = vsel %vm264, %v3442, 0
      %v3872 = vsel %vm264, %v3443, 0
      %v3875 = vsel %vm264, %v3444, 0
      %v3878 = vsel %vm264, %v3445, 0
      %v3881 = vsel %vm264, %v3446, 0
      %v3884 = vsel %vm264, %v3447, 0
      %v3887 = vsel %vm264, %v3448, 0
      %v3890 = vsel %vm264, %v3449, 0
      %v3893 = vsel %vm264, %v3450, 0
      %v3896 = vsel %vm264, %v3451, 0
      %v3899 = vsel %vm264, %v3452, 0
      %v3902 = vsel %vm264, %v3453, 0
      %v3905 = vsel %vm264, %v3454, 0
      %v3908 = vsel %vm264, %v3455, 0
      %v3911 = vsel %vm264, %v3456, 0
      %v3914 = vsel %vm461, %v3458, 0
      %3916 = vmatprep.subr.mxu0 0.0
      %3917 = vmatpush1.msra.mxu0 0.0
      %3918 = vmatprep.subr.mxu0 0.0
      %3919 = vmatpush1.msra.mxu0 0.0
      %3920 = vmatprep.subr.mxu0 0.0
      %3921 = vmatpush1.msra.mxu0 0.0
      %3922 = vmatprep.subr.mxu0 0.0
      %3923 = vmatpush1.msra.mxu0 0.0
      %3924 = vmatprep.subr.mxu0 0.0
      %3925 = vmatpush1.msra.mxu0 0.0
      %3926 = vmatprep.subr.mxu0 0.0
      %3927 = vmatpush1.msra.mxu0 0.0
      %3928 = vmatprep.subr.mxu0 0.0
      %3929 = vmatpush1.msra.mxu0 0.0
      %3930 = vmatprep.subr.mxu0 0.0
      %3931 = vmatpush1.msra.mxu0 0.0
      %3932 = vmatprep.subr.mxu0 0.0
      %3933 = vmatpush1.msra.mxu0 0.0
      %3934 = vmatprep.subr.mxu0 0.0
      %3935 = vmatpush1.msra.mxu0 0.0
      %3936 = vmatprep.subr.mxu0 0.0
      %3937 = vmatpush1.msra.mxu0 0.0
      %3938 = vmatprep.subr.mxu0 0.0
      %3939 = vmatpush1.msra.mxu0 0.0
      %3940 = vmatprep.subr.mxu0 0.0
      %3941 = vmatpush1.msra.mxu0 0.0
      %3942 = vmatprep.subr.mxu0 0.0
      %3943 = vmatpush1.msra.mxu0 0.0
      %3944 = vmatprep.subr.mxu0 0.0
      %3945 = vmatpush1.msra.mxu0 0.0
      %3946 = vmatprep.subr.mxu0 0.0
      %3947 = vmatpush1.msra.mxu0 %v3914
      %3948 = vmatprep.subr.mxu0 0.0
      %3949 = vmatpush2.msra.mxu0 0.0
      %3950 = vmatprep.subr.mxu0 0.0
      %3951 = vmatpush2.msra.mxu0 0.0
      %3952 = vmatprep.subr.mxu0 0.0
      %3953 = vmatpush2.msra.mxu0 0.0
      %3954 = vmatprep.subr.mxu0 0.0
      %3955 = vmatpush2.msra.mxu0 0.0
      %3956 = vmatprep.subr.mxu0 0.0
      %3957 = vmatpush2.msra.mxu0 0.0
      %3958 = vmatprep.subr.mxu0 0.0
      %3959 = vmatpush2.msra.mxu0 0.0
      %3960 = vmatprep.subr.mxu0 0.0
      %3961 = vmatpush2.msra.mxu0 0.0
      %3962 = vmatprep.subr.mxu0 0.0
      %3963 = vmatpush2.msra.mxu0 0.0
      %3964 = vmatprep.subr.mxu0 0.0
      %3965 = vmatpush2.msra.mxu0 0.0
      %3966 = vmatprep.subr.mxu0 0.0
      %3967 = vmatpush2.msra.mxu0 0.0
      %3968 = vmatprep.subr.mxu0 0.0
      %3969 = vmatpush2.msra.mxu0 0.0
      %3970 = vmatprep.subr.mxu0 0.0
      %3971 = vmatpush2.msra.mxu0 0.0
      %3972 = vmatprep.subr.mxu0 0.0
      %3973 = vmatpush2.msra.mxu0 0.0
      %3974 = vmatprep.subr.mxu0 0.0
      %3975 = vmatpush2.msra.mxu0 0.0
      %3976 = vmatprep.subr.mxu0 0.0
      %3977 = vmatpush2.msra.mxu0 0.0
      %3978 = vmatprep.subr.mxu0 0.0
      %3979 = vmatpush2.msra.mxu0 0.0
      %3980 = vmatprep.mubr.f32.mxu0 0.0
      %3981 = vmatmul.mubr.f32.gmra.mxu0 %v3818
      %v3982 = vpop.f32.mrf.mxu0
      %v3983 = vadd.f32 %v3659, %v3982
      %v3984 = vpop.f32.mrf.mxu0
      %3985 = vmatprep.mubr.f32.mxu0 0.0
      %3986 = vmatmul.mubr.f32.gmra.mxu0 %v3821
      %v3987 = vpop.f32.mrf.mxu0
      %v3988 = vadd.f32 %v3664, %v3987
      %v3989 = vpop.f32.mrf.mxu0
      %3990 = vmatprep.mubr.f32.mxu0 0.0
      %3991 = vmatmul.mubr.f32.gmra.mxu0 %v3824
      %v3992 = vpop.f32.mrf.mxu0
      %v3993 = vadd.f32 %v3669, %v3992
      %v3994 = vpop.f32.mrf.mxu0
      %3995 = vmatprep.mubr.f32.mxu0 0.0
      %3996 = vmatmul.mubr.f32.gmra.mxu0 %v3827
      %v3997 = vpop.f32.mrf.mxu0
      %v3998 = vadd.f32 %v3674, %v3997
      %v3999 = vpop.f32.mrf.mxu0
      %4000 = vmatprep.mubr.f32.mxu0 0.0
      %4001 = vmatmul.mubr.f32.gmra.mxu0 %v3830
      %v4002 = vpop.f32.mrf.mxu0
      %v4003 = vadd.f32 %v3679, %v4002
      %v4004 = vpop.f32.mrf.mxu0
      %4005 = vmatprep.mubr.f32.mxu0 0.0
      %4006 = vmatmul.mubr.f32.gmra.mxu0 %v3833
      %v4007 = vpop.f32.mrf.mxu0
      %v4008 = vadd.f32 %v3684, %v4007
      %v4009 = vpop.f32.mrf.mxu0
      %4010 = vmatprep.mubr.f32.mxu0 0.0
      %4011 = vmatmul.mubr.f32.gmra.mxu0 %v3836
      %v4012 = vpop.f32.mrf.mxu0
      %v4013 = vadd.f32 %v3689, %v4012
      %v4014 = vpop.f32.mrf.mxu0
      %4015 = vmatprep.mubr.f32.mxu0 0.0
      %4016 = vmatmul.mubr.f32.gmra.mxu0 %v3839
      %v4017 = vpop.f32.mrf.mxu0
      %v4018 = vadd.f32 %v3694, %v4017
      %v4019 = vpop.f32.mrf.mxu0
      %4020 = vmatprep.mubr.f32.mxu0 0.0
      %4021 = vmatmul.mubr.f32.gmra.mxu0 %v3842
      %v4022 = vpop.f32.mrf.mxu0
      %v4023 = vadd.f32 %v3699, %v4022
      %v4024 = vpop.f32.mrf.mxu0
      %4025 = vmatprep.mubr.f32.mxu0 0.0
      %4026 = vmatmul.mubr.f32.gmra.mxu0 %v3845
      %v4027 = vpop.f32.mrf.mxu0
      %v4028 = vadd.f32 %v3704, %v4027
      %v4029 = vpop.f32.mrf.mxu0
      %4030 = vmatprep.mubr.f32.mxu0 0.0
      %4031 = vmatmul.mubr.f32.gmra.mxu0 %v3848
      %v4032 = vpop.f32.mrf.mxu0
      %v4033 = vadd.f32 %v3709, %v4032
      %v4034 = vpop.f32.mrf.mxu0
      %4035 = vmatprep.mubr.f32.mxu0 0.0
      %4036 = vmatmul.mubr.f32.gmra.mxu0 %v3851
      %v4037 = vpop.f32.mrf.mxu0
      %v4038 = vadd.f32 %v3714, %v4037
      %v4039 = vpop.f32.mrf.mxu0
      %4040 = vmatprep.mubr.f32.mxu0 0.0
      %4041 = vmatmul.mubr.f32.gmra.mxu0 %v3854
      %v4042 = vpop.f32.mrf.mxu0
      %v4043 = vadd.f32 %v3719, %v4042
      %v4044 = vpop.f32.mrf.mxu0
      %4045 = vmatprep.mubr.f32.mxu0 0.0
      %4046 = vmatmul.mubr.f32.gmra.mxu0 %v3857
      %v4047 = vpop.f32.mrf.mxu0
      %v4048 = vadd.f32 %v3724, %v4047
      %v4049 = vpop.f32.mrf.mxu0
      %4050 = vmatprep.mubr.f32.mxu0 0.0
      %4051 = vmatmul.mubr.f32.gmra.mxu0 %v3860
      %v4052 = vpop.f32.mrf.mxu0
      %v4053 = vadd.f32 %v3729, %v4052
      %v4054 = vpop.f32.mrf.mxu0
      %4055 = vmatprep.mubr.f32.mxu0 0.0
      %4056 = vmatmul.mubr.f32.gmra.mxu0 %v3863
      %v4057 = vpop.f32.mrf.mxu0
      %v4058 = vadd.f32 %v3734, %v4057
      %v4059 = vpop.f32.mrf.mxu0
      %4060 = vmatprep.mubr.f32.mxu0 0.0
      %4061 = vmatmul.mubr.f32.gmra.mxu0 %v3866
      %v4062 = vpop.f32.mrf.mxu0
      %v4063 = vadd.f32 %v3739, %v4062
      %v4064 = vpop.f32.mrf.mxu0
      %4065 = vmatprep.mubr.f32.mxu0 0.0
      %4066 = vmatmul.mubr.f32.gmra.mxu0 %v3869
      %v4067 = vpop.f32.mrf.mxu0
      %v4068 = vadd.f32 %v3744, %v4067
      %v4069 = vpop.f32.mrf.mxu0
      %4070 = vmatprep.mubr.f32.mxu0 0.0
      %4071 = vmatmul.mubr.f32.gmra.mxu0 %v3872
      %v4072 = vpop.f32.mrf.mxu0
      %v4073 = vadd.f32 %v3749, %v4072
      %v4074 = vpop.f32.mrf.mxu0
      %4075 = vmatprep.mubr.f32.mxu0 0.0
      %4076 = vmatmul.mubr.f32.gmra.mxu0 %v3875
      %v4077 = vpop.f32.mrf.mxu0
      %v4078 = vadd.f32 %v3754, %v4077
      %v4079 = vpop.f32.mrf.mxu0
      %4080 = vmatprep.mubr.f32.mxu0 0.0
      %4081 = vmatmul.mubr.f32.gmra.mxu0 %v3878
      %v4082 = vpop.f32.mrf.mxu0
      %v4083 = vadd.f32 %v3759, %v4082
      %v4084 = vpop.f32.mrf.mxu0
      %4085 = vmatprep.mubr.f32.mxu0 0.0
      %4086 = vmatmul.mubr.f32.gmra.mxu0 %v3881
      %v4087 = vpop.f32.mrf.mxu0
      %v4088 = vadd.f32 %v3764, %v4087
      %v4089 = vpop.f32.mrf.mxu0
      %4090 = vmatprep.mubr.f32.mxu0 0.0
      %4091 = vmatmul.mubr.f32.gmra.mxu0 %v3884
      %v4092 = vpop.f32.mrf.mxu0
      %v4093 = vadd.f32 %v3769, %v4092
      %v4094 = vpop.f32.mrf.mxu0
      %4095 = vmatprep.mubr.f32.mxu0 0.0
      %4096 = vmatmul.mubr.f32.gmra.mxu0 %v3887
      %v4097 = vpop.f32.mrf.mxu0
      %v4098 = vadd.f32 %v3774, %v4097
      %v4099 = vpop.f32.mrf.mxu0
      %4100 = vmatprep.mubr.f32.mxu0 0.0
      %4101 = vmatmul.mubr.f32.gmra.mxu0 %v3890
      %v4102 = vpop.f32.mrf.mxu0
      %v4103 = vadd.f32 %v3779, %v4102
      %v4104 = vpop.f32.mrf.mxu0
      %4105 = vmatprep.mubr.f32.mxu0 0.0
      %4106 = vmatmul.mubr.f32.gmra.mxu0 %v3893
      %v4107 = vpop.f32.mrf.mxu0
      %v4108 = vadd.f32 %v3784, %v4107
      %v4109 = vpop.f32.mrf.mxu0
      %4110 = vmatprep.mubr.f32.mxu0 0.0
      %4111 = vmatmul.mubr.f32.gmra.mxu0 %v3896
      %v4112 = vpop.f32.mrf.mxu0
      %v4113 = vadd.f32 %v3789, %v4112
      %v4114 = vpop.f32.mrf.mxu0
      %4115 = vmatprep.mubr.f32.mxu0 0.0
      %4116 = vmatmul.mubr.f32.gmra.mxu0 %v3899
      %v4117 = vpop.f32.mrf.mxu0
      %v4118 = vadd.f32 %v3794, %v4117
      %v4119 = vpop.f32.mrf.mxu0
      %4120 = vmatprep.mubr.f32.mxu0 0.0
      %4121 = vmatmul.mubr.f32.gmra.mxu0 %v3902
      %v4122 = vpop.f32.mrf.mxu0
      %v4123 = vadd.f32 %v3799, %v4122
      %v4124 = vpop.f32.mrf.mxu0
      %4125 = vmatprep.mubr.f32.mxu0 0.0
      %4126 = vmatmul.mubr.f32.gmra.mxu0 %v3905
      %v4127 = vpop.f32.mrf.mxu0
      %v4128 = vadd.f32 %v3804, %v4127
      %v4129 = vpop.f32.mrf.mxu0
      %4130 = vmatprep.mubr.f32.mxu0 0.0
      %4131 = vmatmul.mubr.f32.gmra.mxu0 %v3908
      %v4132 = vpop.f32.mrf.mxu0
      %v4133 = vadd.f32 %v3809, %v4132
      %v4134 = vpop.f32.mrf.mxu0
      %4135 = vmatprep.mubr.f32.mxu0 0.0
      %4136 = vmatmul.mubr.f32.gmra.mxu0 %v3911
      %v4137 = vpop.f32.mrf.mxu0
      %v4138 = vadd.f32 %v3814, %v4137
      %v4139 = vpop.f32.mrf.mxu0
      %4140 = vdwg.mxu0
      %s4141 = scalar_lea.vmem [#allocation2], 48
      %v4142 = vld [vmem:[%s4141] sm:$0xff]
      %v4143 = vld [vmem:[%s4141 + $0x8] sm:$0xff]
      %v4144 = vld [vmem:[%s4141 + $0x18] sm:$0xff]
      %v4145 = vld [vmem:[%s4141 + $0x20] sm:$0xff]
      %v4146 = vld [vmem:[%s4141 + $0x30] sm:$0xff]
      %v4147 = vld [vmem:[%s4141 + $0x38] sm:$0xff]
      %v4148 = vld [vmem:[%s4141 + $0x48] sm:$0xff]
      %v4149 = vld [vmem:[%s4141 + $0x50] sm:$0xff]
      %v4150 = vld [vmem:[%s4141 + $0x60] sm:$0xff]
      %v4151 = vld [vmem:[%s4141 + $0x68] sm:$0xff]
      %v4152 = vld [vmem:[%s4141 + $0x78] sm:$0xff]
      %v4153 = vld [vmem:[%s4141 + $0x80] sm:$0xff]
      %v4154 = vld [vmem:[%s4141 + $0x90] sm:$0xff]
      %v4155 = vld [vmem:[%s4141 + $0x98] sm:$0xff]
      %v4156 = vld [vmem:[%s4141 + $0xa8] sm:$0xff]
      %v4157 = vld [vmem:[%s4141 + $0xb0] sm:$0xff]
      %v4158 = vld [vmem:[%s4141 + $0xc0] sm:$0xff]
      %v4159 = vld [vmem:[%s4141 + $0xc8] sm:$0xff]
      %v4160 = vld [vmem:[%s4141 + $0xd8] sm:$0xff]
      %v4161 = vld [vmem:[%s4141 + $0xe0] sm:$0xff]
      %v4162 = vld [vmem:[%s4141 + $0xf0] sm:$0xff]
      %v4163 = vld [vmem:[%s4141 + $0xf8] sm:$0xff]
      %v4164 = vld [vmem:[%s4141 + $0x108] sm:$0xff]
      %v4165 = vld [vmem:[%s4141 + $0x110] sm:$0xff]
      %v4166 = vld [vmem:[%s4141 + $0x120] sm:$0xff]
      %v4167 = vld [vmem:[%s4141 + $0x128] sm:$0xff]
      %v4168 = vld [vmem:[%s4141 + $0x138] sm:$0xff]
      %v4169 = vld [vmem:[%s4141 + $0x140] sm:$0xff]
      %v4170 = vld [vmem:[%s4141 + $0x150] sm:$0xff]
      %v4171 = vld [vmem:[%s4141 + $0x158] sm:$0xff]
      %v4172 = vld [vmem:[%s4141 + $0x168] sm:$0xff]
      %v4173 = vld [vmem:[%s4141 + $0x170] sm:$0xff]
      %s4174 = scalar_lea.vmem %s1, 40
      %v4175 = vld [vmem:[%s4174] sm:$0xf]
      %v4177 = vsel %vm264, %v4142, 0
      %v4180 = vsel %vm264, %v4143, 0
      %v4183 = vsel %vm264, %v4144, 0
      %v4186 = vsel %vm264, %v4145, 0
      %v4189 = vsel %vm264, %v4146, 0
      %v4192 = vsel %vm264, %v4147, 0
      %v4195 = vsel %vm264, %v4148, 0
      %v4198 = vsel %vm264, %v4149, 0
      %v4201 = vsel %vm264, %v4150, 0
      %v4204 = vsel %vm264, %v4151, 0
      %v4207 = vsel %vm264, %v4152, 0
      %v4210 = vsel %vm264, %v4153, 0
      %v4213 = vsel %vm264, %v4154, 0
      %v4216 = vsel %vm264, %v4155, 0
      %v4219 = vsel %vm264, %v4156, 0
      %v4222 = vsel %vm264, %v4157, 0
      %v4225 = vsel %vm264, %v4158, 0
      %v4228 = vsel %vm264, %v4159, 0
      %v4231 = vsel %vm264, %v4160, 0
      %v4234 = vsel %vm264, %v4161, 0
      %v4237 = vsel %vm264, %v4162, 0
      %v4240 = vsel %vm264, %v4163, 0
      %v4243 = vsel %vm264, %v4164, 0
      %v4246 = vsel %vm264, %v4165, 0
      %v4249 = vsel %vm264, %v4166, 0
      %v4252 = vsel %vm264, %v4167, 0
      %v4255 = vsel %vm264, %v4168, 0
      %v4258 = vsel %vm264, %v4169, 0
      %v4261 = vsel %vm264, %v4170, 0
      %v4264 = vsel %vm264, %v4171, 0
      %v4267 = vsel %vm264, %v4172, 0
      %v4270 = vsel %vm264, %v4173, 0
      %v4273 = vsel %vm461, %v4175, 0
      %4275 = vmatprep.subr.mxu0 0.0
      %4276 = vmatpush1.msra.mxu0 0.0
      %4277 = vmatprep.subr.mxu0 0.0
      %4278 = vmatpush1.msra.mxu0 0.0
      %4279 = vmatprep.subr.mxu0 0.0
      %4280 = vmatpush1.msra.mxu0 0.0
      %4281 = vmatprep.subr.mxu0 0.0
      %4282 = vmatpush1.msra.mxu0 0.0
      %4283 = vmatprep.subr.mxu0 0.0
      %4284 = vmatpush1.msra.mxu0 0.0
      %4285 = vmatprep.subr.mxu0 0.0
      %4286 = vmatpush1.msra.mxu0 0.0
      %4287 = vmatprep.subr.mxu0 0.0
      %4288 = vmatpush1.msra.mxu0 0.0
      %4289 = vmatprep.subr.mxu0 0.0
      %4290 = vmatpush1.msra.mxu0 0.0
      %4291 = vmatprep.subr.mxu0 0.0
      %4292 = vmatpush1.msra.mxu0 0.0
      %4293 = vmatprep.subr.mxu0 0.0
      %4294 = vmatpush1.msra.mxu0 0.0
      %4295 = vmatprep.subr.mxu0 0.0
      %4296 = vmatpush1.msra.mxu0 0.0
      %4297 = vmatprep.subr.mxu0 0.0
      %4298 = vmatpush1.msra.mxu0 0.0
      %4299 = vmatprep.subr.mxu0 0.0
      %4300 = vmatpush1.msra.mxu0 0.0
      %4301 = vmatprep.subr.mxu0 0.0
      %4302 = vmatpush1.msra.mxu0 0.0
      %4303 = vmatprep.subr.mxu0 0.0
      %4304 = vmatpush1.msra.mxu0 0.0
      %4305 = vmatprep.subr.mxu0 0.0
      %4306 = vmatpush1.msra.mxu0 %v4273
      %4307 = vmatprep.subr.mxu0 0.0
      %4308 = vmatpush2.msra.mxu0 0.0
      %4309 = vmatprep.subr.mxu0 0.0
      %4310 = vmatpush2.msra.mxu0 0.0
      %4311 = vmatprep.subr.mxu0 0.0
      %4312 = vmatpush2.msra.mxu0 0.0
      %4313 = vmatprep.subr.mxu0 0.0
      %4314 = vmatpush2.msra.mxu0 0.0
      %4315 = vmatprep.subr.mxu0 0.0
      %4316 = vmatpush2.msra.mxu0 0.0
      %4317 = vmatprep.subr.mxu0 0.0
      %4318 = vmatpush2.msra.mxu0 0.0
      %4319 = vmatprep.subr.mxu0 0.0
      %4320 = vmatpush2.msra.mxu0 0.0
      %4321 = vmatprep.subr.mxu0 0.0
      %4322 = vmatpush2.msra.mxu0 0.0
      %4323 = vmatprep.subr.mxu0 0.0
      %4324 = vmatpush2.msra.mxu0 0.0
      %4325 = vmatprep.subr.mxu0 0.0
      %4326 = vmatpush2.msra.mxu0 0.0
      %4327 = vmatprep.subr.mxu0 0.0
      %4328 = vmatpush2.msra.mxu0 0.0
      %4329 = vmatprep.subr.mxu0 0.0
      %4330 = vmatpush2.msra.mxu0 0.0
      %4331 = vmatprep.subr.mxu0 0.0
      %4332 = vmatpush2.msra.mxu0 0.0
      %4333 = vmatprep.subr.mxu0 0.0
      %4334 = vmatpush2.msra.mxu0 0.0
      %4335 = vmatprep.subr.mxu0 0.0
      %4336 = vmatpush2.msra.mxu0 0.0
      %4337 = vmatprep.subr.mxu0 0.0
      %4338 = vmatpush2.msra.mxu0 0.0
      %4339 = vmatprep.mubr.f32.mxu0 0.0
      %4340 = vmatmul.mubr.f32.gmra.mxu0 %v4177
      %v4341 = vpop.f32.mrf.mxu0
      %v4342 = vadd.f32 0.0, %v4341
      %v4343 = vpop.f32.mrf.mxu0
      %4344 = vmatprep.mubr.f32.mxu0 0.0
      %4345 = vmatmul.mubr.f32.gmra.mxu0 %v4180
      %v4346 = vpop.f32.mrf.mxu0
      %v4347 = vadd.f32 0.0, %v4346
      %v4348 = vpop.f32.mrf.mxu0
      %4349 = vmatprep.mubr.f32.mxu0 0.0
      %4350 = vmatmul.mubr.f32.gmra.mxu0 %v4183
      %v4351 = vpop.f32.mrf.mxu0
      %v4352 = vadd.f32 0.0, %v4351
      %v4353 = vpop.f32.mrf.mxu0
      %4354 = vmatprep.mubr.f32.mxu0 0.0
      %4355 = vmatmul.mubr.f32.gmra.mxu0 %v4186
      %v4356 = vpop.f32.mrf.mxu0
      %v4357 = vadd.f32 0.0, %v4356
      %v4358 = vpop.f32.mrf.mxu0
      %4359 = vmatprep.mubr.f32.mxu0 0.0
      %4360 = vmatmul.mubr.f32.gmra.mxu0 %v4189
      %v4361 = vpop.f32.mrf.mxu0
      %v4362 = vadd.f32 0.0, %v4361
      %v4363 = vpop.f32.mrf.mxu0
      %4364 = vmatprep.mubr.f32.mxu0 0.0
      %4365 = vmatmul.mubr.f32.gmra.mxu0 %v4192
      %v4366 = vpop.f32.mrf.mxu0
      %v4367 = vadd.f32 0.0, %v4366
      %v4368 = vpop.f32.mrf.mxu0
      %4369 = vmatprep.mubr.f32.mxu0 0.0
      %4370 = vmatmul.mubr.f32.gmra.mxu0 %v4195
      %v4371 = vpop.f32.mrf.mxu0
      %v4372 = vadd.f32 0.0, %v4371
      %v4373 = vpop.f32.mrf.mxu0
      %4374 = vmatprep.mubr.f32.mxu0 0.0
      %4375 = vmatmul.mubr.f32.gmra.mxu0 %v4198
      %v4376 = vpop.f32.mrf.mxu0
      %v4377 = vadd.f32 0.0, %v4376
      %v4378 = vpop.f32.mrf.mxu0
      %4379 = vmatprep.mubr.f32.mxu0 0.0
      %4380 = vmatmul.mubr.f32.gmra.mxu0 %v4201
      %v4381 = vpop.f32.mrf.mxu0
      %v4382 = vadd.f32 0.0, %v4381
      %v4383 = vpop.f32.mrf.mxu0
      %4384 = vmatprep.mubr.f32.mxu0 0.0
      %4385 = vmatmul.mubr.f32.gmra.mxu0 %v4204
      %v4386 = vpop.f32.mrf.mxu0
      %v4387 = vadd.f32 0.0, %v4386
      %v4388 = vpop.f32.mrf.mxu0
      %4389 = vmatprep.mubr.f32.mxu0 0.0
      %4390 = vmatmul.mubr.f32.gmra.mxu0 %v4207
      %v4391 = vpop.f32.mrf.mxu0
      %v4392 = vadd.f32 0.0, %v4391
      %v4393 = vpop.f32.mrf.mxu0
      %4394 = vmatprep.mubr.f32.mxu0 0.0
      %4395 = vmatmul.mubr.f32.gmra.mxu0 %v4210
      %v4396 = vpop.f32.mrf.mxu0
      %v4397 = vadd.f32 0.0, %v4396
      %v4398 = vpop.f32.mrf.mxu0
      %4399 = vmatprep.mubr.f32.mxu0 0.0
      %4400 = vmatmul.mubr.f32.gmra.mxu0 %v4213
      %v4401 = vpop.f32.mrf.mxu0
      %v4402 = vadd.f32 0.0, %v4401
      %v4403 = vpop.f32.mrf.mxu0
      %4404 = vmatprep.mubr.f32.mxu0 0.0
      %4405 = vmatmul.mubr.f32.gmra.mxu0 %v4216
      %v4406 = vpop.f32.mrf.mxu0
      %v4407 = vadd.f32 0.0, %v4406
      %v4408 = vpop.f32.mrf.mxu0
      %4409 = vmatprep.mubr.f32.mxu0 0.0
      %4410 = vmatmul.mubr.f32.gmra.mxu0 %v4219
      %v4411 = vpop.f32.mrf.mxu0
      %v4412 = vadd.f32 0.0, %v4411
      %v4413 = vpop.f32.mrf.mxu0
      %4414 = vmatprep.mubr.f32.mxu0 0.0
      %4415 = vmatmul.mubr.f32.gmra.mxu0 %v4222
      %v4416 = vpop.f32.mrf.mxu0
      %v4417 = vadd.f32 0.0, %v4416
      %v4418 = vpop.f32.mrf.mxu0
      %4419 = vmatprep.mubr.f32.mxu0 0.0
      %4420 = vmatmul.mubr.f32.gmra.mxu0 %v4225
      %v4421 = vpop.f32.mrf.mxu0
      %v4422 = vadd.f32 0.0, %v4421
      %v4423 = vpop.f32.mrf.mxu0
      %4424 = vmatprep.mubr.f32.mxu0 0.0
      %4425 = vmatmul.mubr.f32.gmra.mxu0 %v4228
      %v4426 = vpop.f32.mrf.mxu0
      %v4427 = vadd.f32 0.0, %v4426
      %v4428 = vpop.f32.mrf.mxu0
      %4429 = vmatprep.mubr.f32.mxu0 0.0
      %4430 = vmatmul.mubr.f32.gmra.mxu0 %v4231
      %v4431 = vpop.f32.mrf.mxu0
      %v4432 = vadd.f32 0.0, %v4431
      %v4433 = vpop.f32.mrf.mxu0
      %4434 = vmatprep.mubr.f32.mxu0 0.0
      %4435 = vmatmul.mubr.f32.gmra.mxu0 %v4234
      %v4436 = vpop.f32.mrf.mxu0
      %v4437 = vadd.f32 0.0, %v4436
      %v4438 = vpop.f32.mrf.mxu0
      %4439 = vmatprep.mubr.f32.mxu0 0.0
      %4440 = vmatmul.mubr.f32.gmra.mxu0 %v4237
      %v4441 = vpop.f32.mrf.mxu0
      %v4442 = vadd.f32 0.0, %v4441
      %v4443 = vpop.f32.mrf.mxu0
      %4444 = vmatprep.mubr.f32.mxu0 0.0
      %4445 = vmatmul.mubr.f32.gmra.mxu0 %v4240
      %v4446 = vpop.f32.mrf.mxu0
      %v4447 = vadd.f32 0.0, %v4446
      %v4448 = vpop.f32.mrf.mxu0
      %4449 = vmatprep.mubr.f32.mxu0 0.0
      %4450 = vmatmul.mubr.f32.gmra.mxu0 %v4243
      %v4451 = vpop.f32.mrf.mxu0
      %v4452 = vadd.f32 0.0, %v4451
      %v4453 = vpop.f32.mrf.mxu0
      %4454 = vmatprep.mubr.f32.mxu0 0.0
      %4455 = vmatmul.mubr.f32.gmra.mxu0 %v4246
      %v4456 = vpop.f32.mrf.mxu0
      %v4457 = vadd.f32 0.0, %v4456
      %v4458 = vpop.f32.mrf.mxu0
      %4459 = vmatprep.mubr.f32.mxu0 0.0
      %4460 = vmatmul.mubr.f32.gmra.mxu0 %v4249
      %v4461 = vpop.f32.mrf.mxu0
      %v4462 = vadd.f32 0.0, %v4461
      %v4463 = vpop.f32.mrf.mxu0
      %4464 = vmatprep.mubr.f32.mxu0 0.0
      %4465 = vmatmul.mubr.f32.gmra.mxu0 %v4252
      %v4466 = vpop.f32.mrf.mxu0
      %v4467 = vadd.f32 0.0, %v4466
      %v4468 = vpop.f32.mrf.mxu0
      %4469 = vmatprep.mubr.f32.mxu0 0.0
      %4470 = vmatmul.mubr.f32.gmra.mxu0 %v4255
      %v4471 = vpop.f32.mrf.mxu0
      %v4472 = vadd.f32 0.0, %v4471
      %v4473 = vpop.f32.mrf.mxu0
      %4474 = vmatprep.mubr.f32.mxu0 0.0
      %4475 = vmatmul.mubr.f32.gmra.mxu0 %v4258
      %v4476 = vpop.f32.mrf.mxu0
      %v4477 = vadd.f32 0.0, %v4476
      %v4478 = vpop.f32.mrf.mxu0
      %4479 = vmatprep.mubr.f32.mxu0 0.0
      %4480 = vmatmul.mubr.f32.gmra.mxu0 %v4261
      %v4481 = vpop.f32.mrf.mxu0
      %v4482 = vadd.f32 0.0, %v4481
      %v4483 = vpop.f32.mrf.mxu0
      %4484 = vmatprep.mubr.f32.mxu0 0.0
      %4485 = vmatmul.mubr.f32.gmra.mxu0 %v4264
      %v4486 = vpop.f32.mrf.mxu0
      %v4487 = vadd.f32 0.0, %v4486
      %v4488 = vpop.f32.mrf.mxu0
      %4489 = vmatprep.mubr.f32.mxu0 0.0
      %4490 = vmatmul.mubr.f32.gmra.mxu0 %v4267
      %v4491 = vpop.f32.mrf.mxu0
      %v4492 = vadd.f32 0.0, %v4491
      %v4493 = vpop.f32.mrf.mxu0
      %4494 = vmatprep.mubr.f32.mxu0 0.0
      %4495 = vmatmul.mubr.f32.gmra.mxu0 %v4270
      %v4496 = vpop.f32.mrf.mxu0
      %v4497 = vadd.f32 0.0, %v4496
      %v4498 = vpop.f32.mrf.mxu0
      %4499 = vdwg.mxu0
      %v4500 = vadd.f32 %v3983, %v4342
      %v4501 = vadd.f32 %v3988, %v4347
      %v4502 = vadd.f32 %v3993, %v4352
      %v4503 = vadd.f32 %v3998, %v4357
      %v4504 = vadd.f32 %v4003, %v4362
      %v4505 = vadd.f32 %v4008, %v4367
      %v4506 = vadd.f32 %v4013, %v4372
      %v4507 = vadd.f32 %v4018, %v4377
      %v4508 = vadd.f32 %v4023, %v4382
      %v4509 = vadd.f32 %v4028, %v4387
      %v4510 = vadd.f32 %v4033, %v4392
      %v4511 = vadd.f32 %v4038, %v4397
      %v4512 = vadd.f32 %v4043, %v4402
      %v4513 = vadd.f32 %v4048, %v4407
      %v4514 = vadd.f32 %v4053, %v4412
      %v4515 = vadd.f32 %v4058, %v4417
      %v4516 = vadd.f32 %v4063, %v4422
      %v4517 = vadd.f32 %v4068, %v4427
      %v4518 = vadd.f32 %v4073, %v4432
      %v4519 = vadd.f32 %v4078, %v4437
      %v4520 = vadd.f32 %v4083, %v4442
      %v4521 = vadd.f32 %v4088, %v4447
      %v4522 = vadd.f32 %v4093, %v4452
      %v4523 = vadd.f32 %v4098, %v4457
      %v4524 = vadd.f32 %v4103, %v4462
      %v4525 = vadd.f32 %v4108, %v4467
      %v4526 = vadd.f32 %v4113, %v4472
      %v4527 = vadd.f32 %v4118, %v4477
      %v4528 = vadd.f32 %v4123, %v4482
      %v4529 = vadd.f32 %v4128, %v4487
      %v4530 = vadd.f32 %v4133, %v4492
      %v4531 = vadd.f32 %v4138, %v4497
      %v4532 = vld [vmem:[%s4141 + $0x1] sm:$0xff]
      %v4533 = vld [vmem:[%s4141 + $0x9] sm:$0xff]
      %v4534 = vld [vmem:[%s4141 + $0x19] sm:$0xff]
      %v4535 = vld [vmem:[%s4141 + $0x21] sm:$0xff]
      %v4536 = vld [vmem:[%s4141 + $0x31] sm:$0xff]
      %v4537 = vld [vmem:[%s4141 + $0x39] sm:$0xff]
      %v4538 = vld [vmem:[%s4141 + $0x49] sm:$0xff]
      %v4539 = vld [vmem:[%s4141 + $0x51] sm:$0xff]
      %v4540 = vld [vmem:[%s4141 + $0x61] sm:$0xff]
      %v4541 = vld [vmem:[%s4141 + $0x69] sm:$0xff]
      %v4542 = vld [vmem:[%s4141 + $0x79] sm:$0xff]
      %v4543 = vld [vmem:[%s4141 + $0x81] sm:$0xff]
      %v4544 = vld [vmem:[%s4141 + $0x91] sm:$0xff]
      %v4545 = vld [vmem:[%s4141 + $0x99] sm:$0xff]
      %v4546 = vld [vmem:[%s4141 + $0xa9] sm:$0xff]
      %v4547 = vld [vmem:[%s4141 + $0xb1] sm:$0xff]
      %v4548 = vld [vmem:[%s4141 + $0xc1] sm:$0xff]
      %v4549 = vld [vmem:[%s4141 + $0xc9] sm:$0xff]
      %v4550 = vld [vmem:[%s4141 + $0xd9] sm:$0xff]
      %v4551 = vld [vmem:[%s4141 + $0xe1] sm:$0xff]
      %v4552 = vld [vmem:[%s4141 + $0xf1] sm:$0xff]
      %v4553 = vld [vmem:[%s4141 + $0xf9] sm:$0xff]
      %v4554 = vld [vmem:[%s4141 + $0x109] sm:$0xff]
      %v4555 = vld [vmem:[%s4141 + $0x111] sm:$0xff]
      %v4556 = vld [vmem:[%s4141 + $0x121] sm:$0xff]
      %v4557 = vld [vmem:[%s4141 + $0x129] sm:$0xff]
      %v4558 = vld [vmem:[%s4141 + $0x139] sm:$0xff]
      %v4559 = vld [vmem:[%s4141 + $0x141] sm:$0xff]
      %v4560 = vld [vmem:[%s4141 + $0x151] sm:$0xff]
      %v4561 = vld [vmem:[%s4141 + $0x159] sm:$0xff]
      %v4562 = vld [vmem:[%s4141 + $0x169] sm:$0xff]
      %v4563 = vld [vmem:[%s4141 + $0x171] sm:$0xff]
      %s4564 = scalar_lea.vmem %s1, 44
      %v4565 = vld [vmem:[%s4564] sm:$0xf]
      %v4567 = vsel %vm264, %v4532, 0
      %v4570 = vsel %vm264, %v4533, 0
      %v4573 = vsel %vm264, %v4534, 0
      %v4576 = vsel %vm264, %v4535, 0
      %v4579 = vsel %vm264, %v4536, 0
      %v4582 = vsel %vm264, %v4537, 0
      %v4585 = vsel %vm264, %v4538, 0
      %v4588 = vsel %vm264, %v4539, 0
      %v4591 = vsel %vm264, %v4540, 0
      %v4594 = vsel %vm264, %v4541, 0
      %v4597 = vsel %vm264, %v4542, 0
      %v4600 = vsel %vm264, %v4543, 0
      %v4603 = vsel %vm264, %v4544, 0
      %v4606 = vsel %vm264, %v4545, 0
      %v4609 = vsel %vm264, %v4546, 0
      %v4612 = vsel %vm264, %v4547, 0
      %v4615 = vsel %vm264, %v4548, 0
      %v4618 = vsel %vm264, %v4549, 0
      %v4621 = vsel %vm264, %v4550, 0
      %v4624 = vsel %vm264, %v4551, 0
      %v4627 = vsel %vm264, %v4552, 0
      %v4630 = vsel %vm264, %v4553, 0
      %v4633 = vsel %vm264, %v4554, 0
      %v4636 = vsel %vm264, %v4555, 0
      %v4639 = vsel %vm264, %v4556, 0
      %v4642 = vsel %vm264, %v4557, 0
      %v4645 = vsel %vm264, %v4558, 0
      %v4648 = vsel %vm264, %v4559, 0
      %v4651 = vsel %vm264, %v4560, 0
      %v4654 = vsel %vm264, %v4561, 0
      %v4657 = vsel %vm264, %v4562, 0
      %v4660 = vsel %vm264, %v4563, 0
      %v4663 = vsel %vm461, %v4565, 0
      %4665 = vmatprep.subr.mxu0 0.0
      %4666 = vmatpush1.msra.mxu0 0.0
      %4667 = vmatprep.subr.mxu0 0.0
      %4668 = vmatpush1.msra.mxu0 0.0
      %4669 = vmatprep.subr.mxu0 0.0
      %4670 = vmatpush1.msra.mxu0 0.0
      %4671 = vmatprep.subr.mxu0 0.0
      %4672 = vmatpush1.msra.mxu0 0.0
      %4673 = vmatprep.subr.mxu0 0.0
      %4674 = vmatpush1.msra.mxu0 0.0
      %4675 = vmatprep.subr.mxu0 0.0
      %4676 = vmatpush1.msra.mxu0 0.0
      %4677 = vmatprep.subr.mxu0 0.0
      %4678 = vmatpush1.msra.mxu0 0.0
      %4679 = vmatprep.subr.mxu0 0.0
      %4680 = vmatpush1.msra.mxu0 0.0
      %4681 = vmatprep.subr.mxu0 0.0
      %4682 = vmatpush1.msra.mxu0 0.0
      %4683 = vmatprep.subr.mxu0 0.0
      %4684 = vmatpush1.msra.mxu0 0.0
      %4685 = vmatprep.subr.mxu0 0.0
      %4686 = vmatpush1.msra.mxu0 0.0
      %4687 = vmatprep.subr.mxu0 0.0
      %4688 = vmatpush1.msra.mxu0 0.0
      %4689 = vmatprep.subr.mxu0 0.0
      %4690 = vmatpush1.msra.mxu0 0.0
      %4691 = vmatprep.subr.mxu0 0.0
      %4692 = vmatpush1.msra.mxu0 0.0
      %4693 = vmatprep.subr.mxu0 0.0
      %4694 = vmatpush1.msra.mxu0 0.0
      %4695 = vmatprep.subr.mxu0 0.0
      %4696 = vmatpush1.msra.mxu0 %v4663
      %4697 = vmatprep.subr.mxu0 0.0
      %4698 = vmatpush2.msra.mxu0 0.0
      %4699 = vmatprep.subr.mxu0 0.0
      %4700 = vmatpush2.msra.mxu0 0.0
      %4701 = vmatprep.subr.mxu0 0.0
      %4702 = vmatpush2.msra.mxu0 0.0
      %4703 = vmatprep.subr.mxu0 0.0
      %4704 = vmatpush2.msra.mxu0 0.0
      %4705 = vmatprep.subr.mxu0 0.0
      %4706 = vmatpush2.msra.mxu0 0.0
      %4707 = vmatprep.subr.mxu0 0.0
      %4708 = vmatpush2.msra.mxu0 0.0
      %4709 = vmatprep.subr.mxu0 0.0
      %4710 = vmatpush2.msra.mxu0 0.0
      %4711 = vmatprep.subr.mxu0 0.0
      %4712 = vmatpush2.msra.mxu0 0.0
      %4713 = vmatprep.subr.mxu0 0.0
      %4714 = vmatpush2.msra.mxu0 0.0
      %4715 = vmatprep.subr.mxu0 0.0
      %4716 = vmatpush2.msra.mxu0 0.0
      %4717 = vmatprep.subr.mxu0 0.0
      %4718 = vmatpush2.msra.mxu0 0.0
      %4719 = vmatprep.subr.mxu0 0.0
      %4720 = vmatpush2.msra.mxu0 0.0
      %4721 = vmatprep.subr.mxu0 0.0
      %4722 = vmatpush2.msra.mxu0 0.0
      %4723 = vmatprep.subr.mxu0 0.0
      %4724 = vmatpush2.msra.mxu0 0.0
      %4725 = vmatprep.subr.mxu0 0.0
      %4726 = vmatpush2.msra.mxu0 0.0
      %4727 = vmatprep.subr.mxu0 0.0
      %4728 = vmatpush2.msra.mxu0 0.0
      %4729 = vmatprep.mubr.f32.mxu0 0.0
      %4730 = vmatmul.mubr.f32.gmra.mxu0 %v4567
      %v4731 = vpop.f32.mrf.mxu0
      %v4732 = vadd.f32 0.0, %v4731
      %v4733 = vpop.f32.mrf.mxu0
      %4734 = vmatprep.mubr.f32.mxu0 0.0
      %4735 = vmatmul.mubr.f32.gmra.mxu0 %v4570
      %v4736 = vpop.f32.mrf.mxu0
      %v4737 = vadd.f32 0.0, %v4736
      %v4738 = vpop.f32.mrf.mxu0
      %4739 = vmatprep.mubr.f32.mxu0 0.0
      %4740 = vmatmul.mubr.f32.gmra.mxu0 %v4573
      %v4741 = vpop.f32.mrf.mxu0
      %v4742 = vadd.f32 0.0, %v4741
      %v4743 = vpop.f32.mrf.mxu0
      %4744 = vmatprep.mubr.f32.mxu0 0.0
      %4745 = vmatmul.mubr.f32.gmra.mxu0 %v4576
      %v4746 = vpop.f32.mrf.mxu0
      %v4747 = vadd.f32 0.0, %v4746
      %v4748 = vpop.f32.mrf.mxu0
      %4749 = vmatprep.mubr.f32.mxu0 0.0
      %4750 = vmatmul.mubr.f32.gmra.mxu0 %v4579
      %v4751 = vpop.f32.mrf.mxu0
      %v4752 = vadd.f32 0.0, %v4751
      %v4753 = vpop.f32.mrf.mxu0
      %4754 = vmatprep.mubr.f32.mxu0 0.0
      %4755 = vmatmul.mubr.f32.gmra.mxu0 %v4582
      %v4756 = vpop.f32.mrf.mxu0
      %v4757 = vadd.f32 0.0, %v4756
      %v4758 = vpop.f32.mrf.mxu0
      %4759 = vmatprep.mubr.f32.mxu0 0.0
      %4760 = vmatmul.mubr.f32.gmra.mxu0 %v4585
      %v4761 = vpop.f32.mrf.mxu0
      %v4762 = vadd.f32 0.0, %v4761
      %v4763 = vpop.f32.mrf.mxu0
      %4764 = vmatprep.mubr.f32.mxu0 0.0
      %4765 = vmatmul.mubr.f32.gmra.mxu0 %v4588
      %v4766 = vpop.f32.mrf.mxu0
      %v4767 = vadd.f32 0.0, %v4766
      %v4768 = vpop.f32.mrf.mxu0
      %4769 = vmatprep.mubr.f32.mxu0 0.0
      %4770 = vmatmul.mubr.f32.gmra.mxu0 %v4591
      %v4771 = vpop.f32.mrf.mxu0
      %v4772 = vadd.f32 0.0, %v4771
      %v4773 = vpop.f32.mrf.mxu0
      %4774 = vmatprep.mubr.f32.mxu0 0.0
      %4775 = vmatmul.mubr.f32.gmra.mxu0 %v4594
      %v4776 = vpop.f32.mrf.mxu0
      %v4777 = vadd.f32 0.0, %v4776
      %v4778 = vpop.f32.mrf.mxu0
      %4779 = vmatprep.mubr.f32.mxu0 0.0
      %4780 = vmatmul.mubr.f32.gmra.mxu0 %v4597
      %v4781 = vpop.f32.mrf.mxu0
      %v4782 = vadd.f32 0.0, %v4781
      %v4783 = vpop.f32.mrf.mxu0
      %4784 = vmatprep.mubr.f32.mxu0 0.0
      %4785 = vmatmul.mubr.f32.gmra.mxu0 %v4600
      %v4786 = vpop.f32.mrf.mxu0
      %v4787 = vadd.f32 0.0, %v4786
      %v4788 = vpop.f32.mrf.mxu0
      %4789 = vmatprep.mubr.f32.mxu0 0.0
      %4790 = vmatmul.mubr.f32.gmra.mxu0 %v4603
      %v4791 = vpop.f32.mrf.mxu0
      %v4792 = vadd.f32 0.0, %v4791
      %v4793 = vpop.f32.mrf.mxu0
      %4794 = vmatprep.mubr.f32.mxu0 0.0
      %4795 = vmatmul.mubr.f32.gmra.mxu0 %v4606
      %v4796 = vpop.f32.mrf.mxu0
      %v4797 = vadd.f32 0.0, %v4796
      %v4798 = vpop.f32.mrf.mxu0
      %4799 = vmatprep.mubr.f32.mxu0 0.0
      %4800 = vmatmul.mubr.f32.gmra.mxu0 %v4609
      %v4801 = vpop.f32.mrf.mxu0
      %v4802 = vadd.f32 0.0, %v4801
      %v4803 = vpop.f32.mrf.mxu0
      %4804 = vmatprep.mubr.f32.mxu0 0.0
      %4805 = vmatmul.mubr.f32.gmra.mxu0 %v4612
      %v4806 = vpop.f32.mrf.mxu0
      %v4807 = vadd.f32 0.0, %v4806
      %v4808 = vpop.f32.mrf.mxu0
      %4809 = vmatprep.mubr.f32.mxu0 0.0
      %4810 = vmatmul.mubr.f32.gmra.mxu0 %v4615
      %v4811 = vpop.f32.mrf.mxu0
      %v4812 = vadd.f32 0.0, %v4811
      %v4813 = vpop.f32.mrf.mxu0
      %4814 = vmatprep.mubr.f32.mxu0 0.0
      %4815 = vmatmul.mubr.f32.gmra.mxu0 %v4618
      %v4816 = vpop.f32.mrf.mxu0
      %v4817 = vadd.f32 0.0, %v4816
      %v4818 = vpop.f32.mrf.mxu0
      %4819 = vmatprep.mubr.f32.mxu0 0.0
      %4820 = vmatmul.mubr.f32.gmra.mxu0 %v4621
      %v4821 = vpop.f32.mrf.mxu0
      %v4822 = vadd.f32 0.0, %v4821
      %v4823 = vpop.f32.mrf.mxu0
      %4824 = vmatprep.mubr.f32.mxu0 0.0
      %4825 = vmatmul.mubr.f32.gmra.mxu0 %v4624
      %v4826 = vpop.f32.mrf.mxu0
      %v4827 = vadd.f32 0.0, %v4826
      %v4828 = vpop.f32.mrf.mxu0
      %4829 = vmatprep.mubr.f32.mxu0 0.0
      %4830 = vmatmul.mubr.f32.gmra.mxu0 %v4627
      %v4831 = vpop.f32.mrf.mxu0
      %v4832 = vadd.f32 0.0, %v4831
      %v4833 = vpop.f32.mrf.mxu0
      %4834 = vmatprep.mubr.f32.mxu0 0.0
      %4835 = vmatmul.mubr.f32.gmra.mxu0 %v4630
      %v4836 = vpop.f32.mrf.mxu0
      %v4837 = vadd.f32 0.0, %v4836
      %v4838 = vpop.f32.mrf.mxu0
      %4839 = vmatprep.mubr.f32.mxu0 0.0
      %4840 = vmatmul.mubr.f32.gmra.mxu0 %v4633
      %v4841 = vpop.f32.mrf.mxu0
      %v4842 = vadd.f32 0.0, %v4841
      %v4843 = vpop.f32.mrf.mxu0
      %4844 = vmatprep.mubr.f32.mxu0 0.0
      %4845 = vmatmul.mubr.f32.gmra.mxu0 %v4636
      %v4846 = vpop.f32.mrf.mxu0
      %v4847 = vadd.f32 0.0, %v4846
      %v4848 = vpop.f32.mrf.mxu0
      %4849 = vmatprep.mubr.f32.mxu0 0.0
      %4850 = vmatmul.mubr.f32.gmra.mxu0 %v4639
      %v4851 = vpop.f32.mrf.mxu0
      %v4852 = vadd.f32 0.0, %v4851
      %v4853 = vpop.f32.mrf.mxu0
      %4854 = vmatprep.mubr.f32.mxu0 0.0
      %4855 = vmatmul.mubr.f32.gmra.mxu0 %v4642
      %v4856 = vpop.f32.mrf.mxu0
      %v4857 = vadd.f32 0.0, %v4856
      %v4858 = vpop.f32.mrf.mxu0
      %4859 = vmatprep.mubr.f32.mxu0 0.0
      %4860 = vmatmul.mubr.f32.gmra.mxu0 %v4645
      %v4861 = vpop.f32.mrf.mxu0
      %v4862 = vadd.f32 0.0, %v4861
      %v4863 = vpop.f32.mrf.mxu0
      %4864 = vmatprep.mubr.f32.mxu0 0.0
      %4865 = vmatmul.mubr.f32.gmra.mxu0 %v4648
      %v4866 = vpop.f32.mrf.mxu0
      %v4867 = vadd.f32 0.0, %v4866
      %v4868 = vpop.f32.mrf.mxu0
      %4869 = vmatprep.mubr.f32.mxu0 0.0
      %4870 = vmatmul.mubr.f32.gmra.mxu0 %v4651
      %v4871 = vpop.f32.mrf.mxu0
      %v4872 = vadd.f32 0.0, %v4871
      %v4873 = vpop.f32.mrf.mxu0
      %4874 = vmatprep.mubr.f32.mxu0 0.0
      %4875 = vmatmul.mubr.f32.gmra.mxu0 %v4654
      %v4876 = vpop.f32.mrf.mxu0
      %v4877 = vadd.f32 0.0, %v4876
      %v4878 = vpop.f32.mrf.mxu0
      %4879 = vmatprep.mubr.f32.mxu0 0.0
      %4880 = vmatmul.mubr.f32.gmra.mxu0 %v4657
      %v4881 = vpop.f32.mrf.mxu0
      %v4882 = vadd.f32 0.0, %v4881
      %v4883 = vpop.f32.mrf.mxu0
      %4884 = vmatprep.mubr.f32.mxu0 0.0
      %4885 = vmatmul.mubr.f32.gmra.mxu0 %v4660
      %v4886 = vpop.f32.mrf.mxu0
      %v4887 = vadd.f32 0.0, %v4886
      %v4888 = vpop.f32.mrf.mxu0
      %4889 = vdwg.mxu0
      %v4890 = vadd.f32 %v4500, %v4732
      %v4891 = vadd.f32 %v4501, %v4737
      %v4892 = vadd.f32 %v4502, %v4742
      %v4893 = vadd.f32 %v4503, %v4747
      %v4894 = vadd.f32 %v4504, %v4752
      %v4895 = vadd.f32 %v4505, %v4757
      %v4896 = vadd.f32 %v4506, %v4762
      %v4897 = vadd.f32 %v4507, %v4767
      %v4898 = vadd.f32 %v4508, %v4772
      %v4899 = vadd.f32 %v4509, %v4777
      %v4900 = vadd.f32 %v4510, %v4782
      %v4901 = vadd.f32 %v4511, %v4787
      %v4902 = vadd.f32 %v4512, %v4792
      %v4903 = vadd.f32 %v4513, %v4797
      %v4904 = vadd.f32 %v4514, %v4802
      %v4905 = vadd.f32 %v4515, %v4807
      %v4906 = vadd.f32 %v4516, %v4812
      %v4907 = vadd.f32 %v4517, %v4817
      %v4908 = vadd.f32 %v4518, %v4822
      %v4909 = vadd.f32 %v4519, %v4827
      %v4910 = vadd.f32 %v4520, %v4832
      %v4911 = vadd.f32 %v4521, %v4837
      %v4912 = vadd.f32 %v4522, %v4842
      %v4913 = vadd.f32 %v4523, %v4847
      %v4914 = vadd.f32 %v4524, %v4852
      %v4915 = vadd.f32 %v4525, %v4857
      %v4916 = vadd.f32 %v4526, %v4862
      %v4917 = vadd.f32 %v4527, %v4867
      %v4918 = vadd.f32 %v4528, %v4872
      %v4919 = vadd.f32 %v4529, %v4877
      %v4920 = vadd.f32 %v4530, %v4882
      %v4921 = vadd.f32 %v4531, %v4887
      %v4922 = vadd.f32 %v4890, %v1798
      %v4923 = vadd.f32 %v4891, %v1798
      %v4924 = vadd.f32 %v4892, %v1798
      %v4925 = vadd.f32 %v4893, %v1798
      %v4926 = vadd.f32 %v4894, %v1798
      %v4927 = vadd.f32 %v4895, %v1798
      %v4928 = vadd.f32 %v4896, %v1798
      %v4929 = vadd.f32 %v4897, %v1798
      %v4930 = vadd.f32 %v4898, %v1798
      %v4931 = vadd.f32 %v4899, %v1798
      %v4932 = vadd.f32 %v4900, %v1798
      %v4933 = vadd.f32 %v4901, %v1798
      %v4934 = vadd.f32 %v4902, %v1798
      %v4935 = vadd.f32 %v4903, %v1798
      %v4936 = vadd.f32 %v4904, %v1798
      %v4937 = vadd.f32 %v4905, %v1798
      %v4938 = vadd.f32 %v4906, %v1798
      %v4939 = vadd.f32 %v4907, %v1798
      %v4940 = vadd.f32 %v4908, %v1798
      %v4941 = vadd.f32 %v4909, %v1798
      %v4942 = vadd.f32 %v4910, %v1798
      %v4943 = vadd.f32 %v4911, %v1798
      %v4944 = vadd.f32 %v4912, %v1798
      %v4945 = vadd.f32 %v4913, %v1798
      %v4946 = vadd.f32 %v4914, %v1798
      %v4947 = vadd.f32 %v4915, %v1798
      %v4948 = vadd.f32 %v4916, %v1798
      %v4949 = vadd.f32 %v4917, %v1798
      %v4950 = vadd.f32 %v4918, %v1798
      %v4951 = vadd.f32 %v4919, %v1798
      %v4952 = vadd.f32 %v4920, %v1798
      %v4953 = vadd.f32 %v4921, %v1798
      %s4954 = scalar_lea.vmem %s170, 512
      %4955 = vst.msk [vmem:[%s4954] sm:$0xff] %vm264, %v4922
      %4956 = vst.msk [vmem:[%s4954 + $0x8] sm:$0xff] %vm264, %v4923
      %4957 = vst.msk [vmem:[%s4954 + $0x10] sm:$0xff] %vm264, %v4924
      %4958 = vst.msk [vmem:[%s4954 + $0x18] sm:$0xff] %vm264, %v4925
      %4959 = vst.msk [vmem:[%s4954 + $0x20] sm:$0xff] %vm264, %v4926
      %4960 = vst.msk [vmem:[%s4954 + $0x28] sm:$0xff] %vm264, %v4927
      %4961 = vst.msk [vmem:[%s4954 + $0x30] sm:$0xff] %vm264, %v4928
      %4962 = vst.msk [vmem:[%s4954 + $0x38] sm:$0xff] %vm264, %v4929
      %4963 = vst.msk [vmem:[%s4954 + $0x40] sm:$0xff] %vm264, %v4930
      %4964 = vst.msk [vmem:[%s4954 + $0x48] sm:$0xff] %vm264, %v4931
      %4965 = vst.msk [vmem:[%s4954 + $0x50] sm:$0xff] %vm264, %v4932
      %4966 = vst.msk [vmem:[%s4954 + $0x58] sm:$0xff] %vm264, %v4933
      %4967 = vst.msk [vmem:[%s4954 + $0x60] sm:$0xff] %vm264, %v4934
      %4968 = vst.msk [vmem:[%s4954 + $0x68] sm:$0xff] %vm264, %v4935
      %4969 = vst.msk [vmem:[%s4954 + $0x70] sm:$0xff] %vm264, %v4936
      %4970 = vst.msk [vmem:[%s4954 + $0x78] sm:$0xff] %vm264, %v4937
      %4971 = vst.msk [vmem:[%s4954 + $0x80] sm:$0xff] %vm264, %v4938
      %4972 = vst.msk [vmem:[%s4954 + $0x88] sm:$0xff] %vm264, %v4939
      %4973 = vst.msk [vmem:[%s4954 + $0x90] sm:$0xff] %vm264, %v4940
      %4974 = vst.msk [vmem:[%s4954 + $0x98] sm:$0xff] %vm264, %v4941
      %4975 = vst.msk [vmem:[%s4954 + $0xa0] sm:$0xff] %vm264, %v4942
      %4976 = vst.msk [vmem:[%s4954 + $0xa8] sm:$0xff] %vm264, %v4943
      %4977 = vst.msk [vmem:[%s4954 + $0xb0] sm:$0xff] %vm264, %v4944
      %4978 = vst.msk [vmem:[%s4954 + $0xb8] sm:$0xff] %vm264, %v4945
      %4979 = vst.msk [vmem:[%s4954 + $0xc0] sm:$0xff] %vm264, %v4946
      %4980 = vst.msk [vmem:[%s4954 + $0xc8] sm:$0xff] %vm264, %v4947
      %4981 = vst.msk [vmem:[%s4954 + $0xd0] sm:$0xff] %vm264, %v4948
      %4982 = vst.msk [vmem:[%s4954 + $0xd8] sm:$0xff] %vm264, %v4949
      %4983 = vst.msk [vmem:[%s4954 + $0xe0] sm:$0xff] %vm264, %v4950
      %4984 = vst.msk [vmem:[%s4954 + $0xe8] sm:$0xff] %vm264, %v4951
      %4985 = vst.msk [vmem:[%s4954 + $0xf0] sm:$0xff] %vm264, %v4952
      %4986 = vst.msk [vmem:[%s4954 + $0xf8] sm:$0xff] %vm264, %v4953
      %v4987 = vld [vmem:[%s263 + $0x1] sm:$0xff]
      %v4988 = vld [vmem:[%s263 + $0x9] sm:$0xff]
      %v4989 = vld [vmem:[%s263 + $0x19] sm:$0xff]
      %v4990 = vld [vmem:[%s263 + $0x21] sm:$0xff]
      %v4991 = vld [vmem:[%s263 + $0x31] sm:$0xff]
      %v4992 = vld [vmem:[%s263 + $0x39] sm:$0xff]
      %v4993 = vld [vmem:[%s263 + $0x49] sm:$0xff]
      %v4994 = vld [vmem:[%s263 + $0x51] sm:$0xff]
      %v4995 = vld [vmem:[%s263 + $0x61] sm:$0xff]
      %v4996 = vld [vmem:[%s263 + $0x69] sm:$0xff]
      %v4997 = vld [vmem:[%s263 + $0x79] sm:$0xff]
      %v4998 = vld [vmem:[%s263 + $0x81] sm:$0xff]
      %v4999 = vld [vmem:[%s263 + $0x91] sm:$0xff]
      %v5000 = vld [vmem:[%s263 + $0x99] sm:$0xff]
      %v5001 = vld [vmem:[%s263 + $0xa9] sm:$0xff]
      %v5002 = vld [vmem:[%s263 + $0xb1] sm:$0xff]
      %v5003 = vld [vmem:[%s263 + $0xc1] sm:$0xff]
      %v5004 = vld [vmem:[%s263 + $0xc9] sm:$0xff]
      %v5005 = vld [vmem:[%s263 + $0xd9] sm:$0xff]
      %v5006 = vld [vmem:[%s263 + $0xe1] sm:$0xff]
      %v5007 = vld [vmem:[%s263 + $0xf1] sm:$0xff]
      %v5008 = vld [vmem:[%s263 + $0xf9] sm:$0xff]
      %v5009 = vld [vmem:[%s263 + $0x109] sm:$0xff]
      %v5010 = vld [vmem:[%s263 + $0x111] sm:$0xff]
      %v5011 = vld [vmem:[%s263 + $0x121] sm:$0xff]
      %v5012 = vld [vmem:[%s263 + $0x129] sm:$0xff]
      %v5013 = vld [vmem:[%s263 + $0x139] sm:$0xff]
      %v5014 = vld [vmem:[%s263 + $0x141] sm:$0xff]
      %v5015 = vld [vmem:[%s263 + $0x151] sm:$0xff]
      %v5016 = vld [vmem:[%s263 + $0x159] sm:$0xff]
      %v5017 = vld [vmem:[%s263 + $0x169] sm:$0xff]
      %v5018 = vld [vmem:[%s263 + $0x171] sm:$0xff]
      %s5019 = scalar_lea.vmem %s1, 48
      %v5020 = vld [vmem:[%s5019] sm:$0xf]
      %v5021 = vld [vmem:[%s263 + $0x2] sm:$0xff]
      %v5022 = vld [vmem:[%s263 + $0xa] sm:$0xff]
      %v5023 = vld [vmem:[%s263 + $0x1a] sm:$0xff]
      %v5024 = vld [vmem:[%s263 + $0x22] sm:$0xff]
      %v5025 = vld [vmem:[%s263 + $0x32] sm:$0xff]
      %v5026 = vld [vmem:[%s263 + $0x3a] sm:$0xff]
      %v5027 = vld [vmem:[%s263 + $0x4a] sm:$0xff]
      %v5028 = vld [vmem:[%s263 + $0x52] sm:$0xff]
      %v5029 = vld [vmem:[%s263 + $0x62] sm:$0xff]
      %v5030 = vld [vmem:[%s263 + $0x6a] sm:$0xff]
      %v5031 = vld [vmem:[%s263 + $0x7a] sm:$0xff]
      %v5032 = vld [vmem:[%s263 + $0x82] sm:$0xff]
      %v5033 = vld [vmem:[%s263 + $0x92] sm:$0xff]
      %v5034 = vld [vmem:[%s263 + $0x9a] sm:$0xff]
      %v5035 = vld [vmem:[%s263 + $0xaa] sm:$0xff]
      %v5036 = vld [vmem:[%s263 + $0xb2] sm:$0xff]
      %v5037 = vld [vmem:[%s263 + $0xc2] sm:$0xff]
      %v5038 = vld [vmem:[%s263 + $0xca] sm:$0xff]
      %v5039 = vld [vmem:[%s263 + $0xda] sm:$0xff]
      %v5040 = vld [vmem:[%s263 + $0xe2] sm:$0xff]
      %v5041 = vld [vmem:[%s263 + $0xf2] sm:$0xff]
      %v5042 = vld [vmem:[%s263 + $0xfa] sm:$0xff]
      %v5043 = vld [vmem:[%s263 + $0x10a] sm:$0xff]
      %v5044 = vld [vmem:[%s263 + $0x112] sm:$0xff]
      %v5045 = vld [vmem:[%s263 + $0x122] sm:$0xff]
      %v5046 = vld [vmem:[%s263 + $0x12a] sm:$0xff]
      %v5047 = vld [vmem:[%s263 + $0x13a] sm:$0xff]
      %v5048 = vld [vmem:[%s263 + $0x142] sm:$0xff]
      %v5049 = vld [vmem:[%s263 + $0x152] sm:$0xff]
      %v5050 = vld [vmem:[%s263 + $0x15a] sm:$0xff]
      %v5051 = vld [vmem:[%s263 + $0x16a] sm:$0xff]
      %v5052 = vld [vmem:[%s263 + $0x172] sm:$0xff]
      %s5053 = scalar_lea.vmem %s1, 52
      %v5054 = vld [vmem:[%s5053] sm:$0xf]
      %v5056 = vsel %vm264, %v5021, 0
      %v5059 = vsel %vm264, %v5022, 0
      %v5062 = vsel %vm264, %v5023, 0
      %v5065 = vsel %vm264, %v5024, 0
      %v5068 = vsel %vm264, %v5025, 0
      %v5071 = vsel %vm264, %v5026, 0
      %v5074 = vsel %vm264, %v5027, 0
      %v5077 = vsel %vm264, %v5028, 0
      %v5080 = vsel %vm264, %v5029, 0
      %v5083 = vsel %vm264, %v5030, 0
      %v5086 = vsel %vm264, %v5031, 0
      %v5089 = vsel %vm264, %v5032, 0
      %v5092 = vsel %vm264, %v5033, 0
      %v5095 = vsel %vm264, %v5034, 0
      %v5098 = vsel %vm264, %v5035, 0
      %v5101 = vsel %vm264, %v5036, 0
      %v5104 = vsel %vm264, %v5037, 0
      %v5107 = vsel %vm264, %v5038, 0
      %v5110 = vsel %vm264, %v5039, 0
      %v5113 = vsel %vm264, %v5040, 0
      %v5116 = vsel %vm264, %v5041, 0
      %v5119 = vsel %vm264, %v5042, 0
      %v5122 = vsel %vm264, %v5043, 0
      %v5125 = vsel %vm264, %v5044, 0
      %v5128 = vsel %vm264, %v5045, 0
      %v5131 = vsel %vm264, %v5046, 0
      %v5134 = vsel %vm264, %v5047, 0
      %v5137 = vsel %vm264, %v5048, 0
      %v5140 = vsel %vm264, %v5049, 0
      %v5143 = vsel %vm264, %v5050, 0
      %v5146 = vsel %vm264, %v5051, 0
      %v5149 = vsel %vm264, %v5052, 0
      %v5152 = vsel %vm461, %v5054, 0
      %5154 = vmatprep.subr.mxu0 0.0
      %5155 = vmatpush1.msra.mxu0 0.0
      %5156 = vmatprep.subr.mxu0 0.0
      %5157 = vmatpush1.msra.mxu0 0.0
      %5158 = vmatprep.subr.mxu0 0.0
      %5159 = vmatpush1.msra.mxu0 0.0
      %5160 = vmatprep.subr.mxu0 0.0
      %5161 = vmatpush1.msra.mxu0 0.0
      %5162 = vmatprep.subr.mxu0 0.0
      %5163 = vmatpush1.msra.mxu0 0.0
      %5164 = vmatprep.subr.mxu0 0.0
      %5165 = vmatpush1.msra.mxu0 0.0
      %5166 = vmatprep.subr.mxu0 0.0
      %5167 = vmatpush1.msra.mxu0 0.0
      %5168 = vmatprep.subr.mxu0 0.0
      %5169 = vmatpush1.msra.mxu0 0.0
      %5170 = vmatprep.subr.mxu0 0.0
      %5171 = vmatpush1.msra.mxu0 0.0
      %5172 = vmatprep.subr.mxu0 0.0
      %5173 = vmatpush1.msra.mxu0 0.0
      %5174 = vmatprep.subr.mxu0 0.0
      %5175 = vmatpush1.msra.mxu0 0.0
      %5176 = vmatprep.subr.mxu0 0.0
      %5177 = vmatpush1.msra.mxu0 0.0
      %5178 = vmatprep.subr.mxu0 0.0
      %5179 = vmatpush1.msra.mxu0 0.0
      %5180 = vmatprep.subr.mxu0 0.0
      %5181 = vmatpush1.msra.mxu0 0.0
      %5182 = vmatprep.subr.mxu0 0.0
      %5183 = vmatpush1.msra.mxu0 0.0
      %5184 = vmatprep.subr.mxu0 0.0
      %5185 = vmatpush1.msra.mxu0 %v5152
      %5186 = vmatprep.subr.mxu0 0.0
      %5187 = vmatpush2.msra.mxu0 0.0
      %5188 = vmatprep.subr.mxu0 0.0
      %5189 = vmatpush2.msra.mxu0 0.0
      %5190 = vmatprep.subr.mxu0 0.0
      %5191 = vmatpush2.msra.mxu0 0.0
      %5192 = vmatprep.subr.mxu0 0.0
      %5193 = vmatpush2.msra.mxu0 0.0
      %5194 = vmatprep.subr.mxu0 0.0
      %5195 = vmatpush2.msra.mxu0 0.0
      %5196 = vmatprep.subr.mxu0 0.0
      %5197 = vmatpush2.msra.mxu0 0.0
      %5198 = vmatprep.subr.mxu0 0.0
      %5199 = vmatpush2.msra.mxu0 0.0
      %5200 = vmatprep.subr.mxu0 0.0
      %5201 = vmatpush2.msra.mxu0 0.0
      %5202 = vmatprep.subr.mxu0 0.0
      %5203 = vmatpush2.msra.mxu0 0.0
      %5204 = vmatprep.subr.mxu0 0.0
      %5205 = vmatpush2.msra.mxu0 0.0
      %5206 = vmatprep.subr.mxu0 0.0
      %5207 = vmatpush2.msra.mxu0 0.0
      %5208 = vmatprep.subr.mxu0 0.0
      %5209 = vmatpush2.msra.mxu0 0.0
      %5210 = vmatprep.subr.mxu0 0.0
      %5211 = vmatpush2.msra.mxu0 0.0
      %5212 = vmatprep.subr.mxu0 0.0
      %5213 = vmatpush2.msra.mxu0 0.0
      %5214 = vmatprep.subr.mxu0 0.0
      %5215 = vmatpush2.msra.mxu0 0.0
      %5216 = vmatprep.subr.mxu0 0.0
      %5217 = vmatpush2.msra.mxu0 0.0
      %5218 = vmatprep.mubr.f32.mxu0 0.0
      %5219 = vmatmul.mubr.f32.gmra.mxu0 %v5056
      %v5220 = vpop.f32.mrf.mxu0
      %v5221 = vadd.f32 0.0, %v5220
      %v5222 = vpop.f32.mrf.mxu0
      %5223 = vmatprep.mubr.f32.mxu0 0.0
      %5224 = vmatmul.mubr.f32.gmra.mxu0 %v5059
      %v5225 = vpop.f32.mrf.mxu0
      %v5226 = vadd.f32 0.0, %v5225
      %v5227 = vpop.f32.mrf.mxu0
      %5228 = vmatprep.mubr.f32.mxu0 0.0
      %5229 = vmatmul.mubr.f32.gmra.mxu0 %v5062
      %v5230 = vpop.f32.mrf.mxu0
      %v5231 = vadd.f32 0.0, %v5230
      %v5232 = vpop.f32.mrf.mxu0
      %5233 = vmatprep.mubr.f32.mxu0 0.0
      %5234 = vmatmul.mubr.f32.gmra.mxu0 %v5065
      %v5235 = vpop.f32.mrf.mxu0
      %v5236 = vadd.f32 0.0, %v5235
      %v5237 = vpop.f32.mrf.mxu0
      %5238 = vmatprep.mubr.f32.mxu0 0.0
      %5239 = vmatmul.mubr.f32.gmra.mxu0 %v5068
      %v5240 = vpop.f32.mrf.mxu0
      %v5241 = vadd.f32 0.0, %v5240
      %v5242 = vpop.f32.mrf.mxu0
      %5243 = vmatprep.mubr.f32.mxu0 0.0
      %5244 = vmatmul.mubr.f32.gmra.mxu0 %v5071
      %v5245 = vpop.f32.mrf.mxu0
      %v5246 = vadd.f32 0.0, %v5245
      %v5247 = vpop.f32.mrf.mxu0
      %5248 = vmatprep.mubr.f32.mxu0 0.0
      %5249 = vmatmul.mubr.f32.gmra.mxu0 %v5074
      %v5250 = vpop.f32.mrf.mxu0
      %v5251 = vadd.f32 0.0, %v5250
      %v5252 = vpop.f32.mrf.mxu0
      %5253 = vmatprep.mubr.f32.mxu0 0.0
      %5254 = vmatmul.mubr.f32.gmra.mxu0 %v5077
      %v5255 = vpop.f32.mrf.mxu0
      %v5256 = vadd.f32 0.0, %v5255
      %v5257 = vpop.f32.mrf.mxu0
      %5258 = vmatprep.mubr.f32.mxu0 0.0
      %5259 = vmatmul.mubr.f32.gmra.mxu0 %v5080
      %v5260 = vpop.f32.mrf.mxu0
      %v5261 = vadd.f32 0.0, %v5260
      %v5262 = vpop.f32.mrf.mxu0
      %5263 = vmatprep.mubr.f32.mxu0 0.0
      %5264 = vmatmul.mubr.f32.gmra.mxu0 %v5083
      %v5265 = vpop.f32.mrf.mxu0
      %v5266 = vadd.f32 0.0, %v5265
      %v5267 = vpop.f32.mrf.mxu0
      %5268 = vmatprep.mubr.f32.mxu0 0.0
      %5269 = vmatmul.mubr.f32.gmra.mxu0 %v5086
      %v5270 = vpop.f32.mrf.mxu0
      %v5271 = vadd.f32 0.0, %v5270
      %v5272 = vpop.f32.mrf.mxu0
      %5273 = vmatprep.mubr.f32.mxu0 0.0
      %5274 = vmatmul.mubr.f32.gmra.mxu0 %v5089
      %v5275 = vpop.f32.mrf.mxu0
      %v5276 = vadd.f32 0.0, %v5275
      %v5277 = vpop.f32.mrf.mxu0
      %5278 = vmatprep.mubr.f32.mxu0 0.0
      %5279 = vmatmul.mubr.f32.gmra.mxu0 %v5092
      %v5280 = vpop.f32.mrf.mxu0
      %v5281 = vadd.f32 0.0, %v5280
      %v5282 = vpop.f32.mrf.mxu0
      %5283 = vmatprep.mubr.f32.mxu0 0.0
      %5284 = vmatmul.mubr.f32.gmra.mxu0 %v5095
      %v5285 = vpop.f32.mrf.mxu0
      %v5286 = vadd.f32 0.0, %v5285
      %v5287 = vpop.f32.mrf.mxu0
      %5288 = vmatprep.mubr.f32.mxu0 0.0
      %5289 = vmatmul.mubr.f32.gmra.mxu0 %v5098
      %v5290 = vpop.f32.mrf.mxu0
      %v5291 = vadd.f32 0.0, %v5290
      %v5292 = vpop.f32.mrf.mxu0
      %5293 = vmatprep.mubr.f32.mxu0 0.0
      %5294 = vmatmul.mubr.f32.gmra.mxu0 %v5101
      %v5295 = vpop.f32.mrf.mxu0
      %v5296 = vadd.f32 0.0, %v5295
      %v5297 = vpop.f32.mrf.mxu0
      %5298 = vmatprep.mubr.f32.mxu0 0.0
      %5299 = vmatmul.mubr.f32.gmra.mxu0 %v5104
      %v5300 = vpop.f32.mrf.mxu0
      %v5301 = vadd.f32 0.0, %v5300
      %v5302 = vpop.f32.mrf.mxu0
      %5303 = vmatprep.mubr.f32.mxu0 0.0
      %5304 = vmatmul.mubr.f32.gmra.mxu0 %v5107
      %v5305 = vpop.f32.mrf.mxu0
      %v5306 = vadd.f32 0.0, %v5305
      %v5307 = vpop.f32.mrf.mxu0
      %5308 = vmatprep.mubr.f32.mxu0 0.0
      %5309 = vmatmul.mubr.f32.gmra.mxu0 %v5110
      %v5310 = vpop.f32.mrf.mxu0
      %v5311 = vadd.f32 0.0, %v5310
      %v5312 = vpop.f32.mrf.mxu0
      %5313 = vmatprep.mubr.f32.mxu0 0.0
      %5314 = vmatmul.mubr.f32.gmra.mxu0 %v5113
      %v5315 = vpop.f32.mrf.mxu0
      %v5316 = vadd.f32 0.0, %v5315
      %v5317 = vpop.f32.mrf.mxu0
      %5318 = vmatprep.mubr.f32.mxu0 0.0
      %5319 = vmatmul.mubr.f32.gmra.mxu0 %v5116
      %v5320 = vpop.f32.mrf.mxu0
      %v5321 = vadd.f32 0.0, %v5320
      %v5322 = vpop.f32.mrf.mxu0
      %5323 = vmatprep.mubr.f32.mxu0 0.0
      %5324 = vmatmul.mubr.f32.gmra.mxu0 %v5119
      %v5325 = vpop.f32.mrf.mxu0
      %v5326 = vadd.f32 0.0, %v5325
      %v5327 = vpop.f32.mrf.mxu0
      %5328 = vmatprep.mubr.f32.mxu0 0.0
      %5329 = vmatmul.mubr.f32.gmra.mxu0 %v5122
      %v5330 = vpop.f32.mrf.mxu0
      %v5331 = vadd.f32 0.0, %v5330
      %v5332 = vpop.f32.mrf.mxu0
      %5333 = vmatprep.mubr.f32.mxu0 0.0
      %5334 = vmatmul.mubr.f32.gmra.mxu0 %v5125
      %v5335 = vpop.f32.mrf.mxu0
      %v5336 = vadd.f32 0.0, %v5335
      %v5337 = vpop.f32.mrf.mxu0
      %5338 = vmatprep.mubr.f32.mxu0 0.0
      %5339 = vmatmul.mubr.f32.gmra.mxu0 %v5128
      %v5340 = vpop.f32.mrf.mxu0
      %v5341 = vadd.f32 0.0, %v5340
      %v5342 = vpop.f32.mrf.mxu0
      %5343 = vmatprep.mubr.f32.mxu0 0.0
      %5344 = vmatmul.mubr.f32.gmra.mxu0 %v5131
      %v5345 = vpop.f32.mrf.mxu0
      %v5346 = vadd.f32 0.0, %v5345
      %v5347 = vpop.f32.mrf.mxu0
      %5348 = vmatprep.mubr.f32.mxu0 0.0
      %5349 = vmatmul.mubr.f32.gmra.mxu0 %v5134
      %v5350 = vpop.f32.mrf.mxu0
      %v5351 = vadd.f32 0.0, %v5350
      %v5352 = vpop.f32.mrf.mxu0
      %5353 = vmatprep.mubr.f32.mxu0 0.0
      %5354 = vmatmul.mubr.f32.gmra.mxu0 %v5137
      %v5355 = vpop.f32.mrf.mxu0
      %v5356 = vadd.f32 0.0, %v5355
      %v5357 = vpop.f32.mrf.mxu0
      %5358 = vmatprep.mubr.f32.mxu0 0.0
      %5359 = vmatmul.mubr.f32.gmra.mxu0 %v5140
      %v5360 = vpop.f32.mrf.mxu0
      %v5361 = vadd.f32 0.0, %v5360
      %v5362 = vpop.f32.mrf.mxu0
      %5363 = vmatprep.mubr.f32.mxu0 0.0
      %5364 = vmatmul.mubr.f32.gmra.mxu0 %v5143
      %v5365 = vpop.f32.mrf.mxu0
      %v5366 = vadd.f32 0.0, %v5365
      %v5367 = vpop.f32.mrf.mxu0
      %5368 = vmatprep.mubr.f32.mxu0 0.0
      %5369 = vmatmul.mubr.f32.gmra.mxu0 %v5146
      %v5370 = vpop.f32.mrf.mxu0
      %v5371 = vadd.f32 0.0, %v5370
      %v5372 = vpop.f32.mrf.mxu0
      %5373 = vmatprep.mubr.f32.mxu0 0.0
      %5374 = vmatmul.mubr.f32.gmra.mxu0 %v5149
      %v5375 = vpop.f32.mrf.mxu0
      %v5376 = vadd.f32 0.0, %v5375
      %v5377 = vpop.f32.mrf.mxu0
      %5378 = vdwg.mxu0
      %v5380 = vsel %vm264, %v4987, 0
      %v5383 = vsel %vm264, %v4988, 0
      %v5386 = vsel %vm264, %v4989, 0
      %v5389 = vsel %vm264, %v4990, 0
      %v5392 = vsel %vm264, %v4991, 0
      %v5395 = vsel %vm264, %v4992, 0
      %v5398 = vsel %vm264, %v4993, 0
      %v5401 = vsel %vm264, %v4994, 0
      %v5404 = vsel %vm264, %v4995, 0
      %v5407 = vsel %vm264, %v4996, 0
      %v5410 = vsel %vm264, %v4997, 0
      %v5413 = vsel %vm264, %v4998, 0
      %v5416 = vsel %vm264, %v4999, 0
      %v5419 = vsel %vm264, %v5000, 0
      %v5422 = vsel %vm264, %v5001, 0
      %v5425 = vsel %vm264, %v5002, 0
      %v5428 = vsel %vm264, %v5003, 0
      %v5431 = vsel %vm264, %v5004, 0
      %v5434 = vsel %vm264, %v5005, 0
      %v5437 = vsel %vm264, %v5006, 0
      %v5440 = vsel %vm264, %v5007, 0
      %v5443 = vsel %vm264, %v5008, 0
      %v5446 = vsel %vm264, %v5009, 0
      %v5449 = vsel %vm264, %v5010, 0
      %v5452 = vsel %vm264, %v5011, 0
      %v5455 = vsel %vm264, %v5012, 0
      %v5458 = vsel %vm264, %v5013, 0
      %v5461 = vsel %vm264, %v5014, 0
      %v5464 = vsel %vm264, %v5015, 0
      %v5467 = vsel %vm264, %v5016, 0
      %v5470 = vsel %vm264, %v5017, 0
      %v5473 = vsel %vm264, %v5018, 0
      %v5476 = vsel %vm461, %v5020, 0
      %5478 = vmatprep.subr.mxu0 0.0
      %5479 = vmatpush1.msra.mxu0 0.0
      %5480 = vmatprep.subr.mxu0 0.0
      %5481 = vmatpush1.msra.mxu0 0.0
      %5482 = vmatprep.subr.mxu0 0.0
      %5483 = vmatpush1.msra.mxu0 0.0
      %5484 = vmatprep.subr.mxu0 0.0
      %5485 = vmatpush1.msra.mxu0 0.0
      %5486 = vmatprep.subr.mxu0 0.0
      %5487 = vmatpush1.msra.mxu0 0.0
      %5488 = vmatprep.subr.mxu0 0.0
      %5489 = vmatpush1.msra.mxu0 0.0
      %5490 = vmatprep.subr.mxu0 0.0
      %5491 = vmatpush1.msra.mxu0 0.0
      %5492 = vmatprep.subr.mxu0 0.0
      %5493 = vmatpush1.msra.mxu0 0.0
      %5494 = vmatprep.subr.mxu0 0.0
      %5495 = vmatpush1.msra.mxu0 0.0
      %5496 = vmatprep.subr.mxu0 0.0
      %5497 = vmatpush1.msra.mxu0 0.0
      %5498 = vmatprep.subr.mxu0 0.0
      %5499 = vmatpush1.msra.mxu0 0.0
      %5500 = vmatprep.subr.mxu0 0.0
      %5501 = vmatpush1.msra.mxu0 0.0
      %5502 = vmatprep.subr.mxu0 0.0
      %5503 = vmatpush1.msra.mxu0 0.0
      %5504 = vmatprep.subr.mxu0 0.0
      %5505 = vmatpush1.msra.mxu0 0.0
      %5506 = vmatprep.subr.mxu0 0.0
      %5507 = vmatpush1.msra.mxu0 0.0
      %5508 = vmatprep.subr.mxu0 0.0
      %5509 = vmatpush1.msra.mxu0 %v5476
      %5510 = vmatprep.subr.mxu0 0.0
      %5511 = vmatpush2.msra.mxu0 0.0
      %5512 = vmatprep.subr.mxu0 0.0
      %5513 = vmatpush2.msra.mxu0 0.0
      %5514 = vmatprep.subr.mxu0 0.0
      %5515 = vmatpush2.msra.mxu0 0.0
      %5516 = vmatprep.subr.mxu0 0.0
      %5517 = vmatpush2.msra.mxu0 0.0
      %5518 = vmatprep.subr.mxu0 0.0
      %5519 = vmatpush2.msra.mxu0 0.0
      %5520 = vmatprep.subr.mxu0 0.0
      %5521 = vmatpush2.msra.mxu0 0.0
      %5522 = vmatprep.subr.mxu0 0.0
      %5523 = vmatpush2.msra.mxu0 0.0
      %5524 = vmatprep.subr.mxu0 0.0
      %5525 = vmatpush2.msra.mxu0 0.0
      %5526 = vmatprep.subr.mxu0 0.0
      %5527 = vmatpush2.msra.mxu0 0.0
      %5528 = vmatprep.subr.mxu0 0.0
      %5529 = vmatpush2.msra.mxu0 0.0
      %5530 = vmatprep.subr.mxu0 0.0
      %5531 = vmatpush2.msra.mxu0 0.0
      %5532 = vmatprep.subr.mxu0 0.0
      %5533 = vmatpush2.msra.mxu0 0.0
      %5534 = vmatprep.subr.mxu0 0.0
      %5535 = vmatpush2.msra.mxu0 0.0
      %5536 = vmatprep.subr.mxu0 0.0
      %5537 = vmatpush2.msra.mxu0 0.0
      %5538 = vmatprep.subr.mxu0 0.0
      %5539 = vmatpush2.msra.mxu0 0.0
      %5540 = vmatprep.subr.mxu0 0.0
      %5541 = vmatpush2.msra.mxu0 0.0
      %5542 = vmatprep.mubr.f32.mxu0 0.0
      %5543 = vmatmul.mubr.f32.gmra.mxu0 %v5380
      %v5544 = vpop.f32.mrf.mxu0
      %v5545 = vadd.f32 %v5221, %v5544
      %v5546 = vpop.f32.mrf.mxu0
      %5547 = vmatprep.mubr.f32.mxu0 0.0
      %5548 = vmatmul.mubr.f32.gmra.mxu0 %v5383
      %v5549 = vpop.f32.mrf.mxu0
      %v5550 = vadd.f32 %v5226, %v5549
      %v5551 = vpop.f32.mrf.mxu0
      %5552 = vmatprep.mubr.f32.mxu0 0.0
      %5553 = vmatmul.mubr.f32.gmra.mxu0 %v5386
      %v5554 = vpop.f32.mrf.mxu0
      %v5555 = vadd.f32 %v5231, %v5554
      %v5556 = vpop.f32.mrf.mxu0
      %5557 = vmatprep.mubr.f32.mxu0 0.0
      %5558 = vmatmul.mubr.f32.gmra.mxu0 %v5389
      %v5559 = vpop.f32.mrf.mxu0
      %v5560 = vadd.f32 %v5236, %v5559
      %v5561 = vpop.f32.mrf.mxu0
      %5562 = vmatprep.mubr.f32.mxu0 0.0
      %5563 = vmatmul.mubr.f32.gmra.mxu0 %v5392
      %v5564 = vpop.f32.mrf.mxu0
      %v5565 = vadd.f32 %v5241, %v5564
      %v5566 = vpop.f32.mrf.mxu0
      %5567 = vmatprep.mubr.f32.mxu0 0.0
      %5568 = vmatmul.mubr.f32.gmra.mxu0 %v5395
      %v5569 = vpop.f32.mrf.mxu0
      %v5570 = vadd.f32 %v5246, %v5569
      %v5571 = vpop.f32.mrf.mxu0
      %5572 = vmatprep.mubr.f32.mxu0 0.0
      %5573 = vmatmul.mubr.f32.gmra.mxu0 %v5398
      %v5574 = vpop.f32.mrf.mxu0
      %v5575 = vadd.f32 %v5251, %v5574
      %v5576 = vpop.f32.mrf.mxu0
      %5577 = vmatprep.mubr.f32.mxu0 0.0
      %5578 = vmatmul.mubr.f32.gmra.mxu0 %v5401
      %v5579 = vpop.f32.mrf.mxu0
      %v5580 = vadd.f32 %v5256, %v5579
      %v5581 = vpop.f32.mrf.mxu0
      %5582 = vmatprep.mubr.f32.mxu0 0.0
      %5583 = vmatmul.mubr.f32.gmra.mxu0 %v5404
      %v5584 = vpop.f32.mrf.mxu0
      %v5585 = vadd.f32 %v5261, %v5584
      %v5586 = vpop.f32.mrf.mxu0
      %5587 = vmatprep.mubr.f32.mxu0 0.0
      %5588 = vmatmul.mubr.f32.gmra.mxu0 %v5407
      %v5589 = vpop.f32.mrf.mxu0
      %v5590 = vadd.f32 %v5266, %v5589
      %v5591 = vpop.f32.mrf.mxu0
      %5592 = vmatprep.mubr.f32.mxu0 0.0
      %5593 = vmatmul.mubr.f32.gmra.mxu0 %v5410
      %v5594 = vpop.f32.mrf.mxu0
      %v5595 = vadd.f32 %v5271, %v5594
      %v5596 = vpop.f32.mrf.mxu0
      %5597 = vmatprep.mubr.f32.mxu0 0.0
      %5598 = vmatmul.mubr.f32.gmra.mxu0 %v5413
      %v5599 = vpop.f32.mrf.mxu0
      %v5600 = vadd.f32 %v5276, %v5599
      %v5601 = vpop.f32.mrf.mxu0
      %5602 = vmatprep.mubr.f32.mxu0 0.0
      %5603 = vmatmul.mubr.f32.gmra.mxu0 %v5416
      %v5604 = vpop.f32.mrf.mxu0
      %v5605 = vadd.f32 %v5281, %v5604
      %v5606 = vpop.f32.mrf.mxu0
      %5607 = vmatprep.mubr.f32.mxu0 0.0
      %5608 = vmatmul.mubr.f32.gmra.mxu0 %v5419
      %v5609 = vpop.f32.mrf.mxu0
      %v5610 = vadd.f32 %v5286, %v5609
      %v5611 = vpop.f32.mrf.mxu0
      %5612 = vmatprep.mubr.f32.mxu0 0.0
      %5613 = vmatmul.mubr.f32.gmra.mxu0 %v5422
      %v5614 = vpop.f32.mrf.mxu0
      %v5615 = vadd.f32 %v5291, %v5614
      %v5616 = vpop.f32.mrf.mxu0
      %5617 = vmatprep.mubr.f32.mxu0 0.0
      %5618 = vmatmul.mubr.f32.gmra.mxu0 %v5425
      %v5619 = vpop.f32.mrf.mxu0
      %v5620 = vadd.f32 %v5296, %v5619
      %v5621 = vpop.f32.mrf.mxu0
      %5622 = vmatprep.mubr.f32.mxu0 0.0
      %5623 = vmatmul.mubr.f32.gmra.mxu0 %v5428
      %v5624 = vpop.f32.mrf.mxu0
      %v5625 = vadd.f32 %v5301, %v5624
      %v5626 = vpop.f32.mrf.mxu0
      %5627 = vmatprep.mubr.f32.mxu0 0.0
      %5628 = vmatmul.mubr.f32.gmra.mxu0 %v5431
      %v5629 = vpop.f32.mrf.mxu0
      %v5630 = vadd.f32 %v5306, %v5629
      %v5631 = vpop.f32.mrf.mxu0
      %5632 = vmatprep.mubr.f32.mxu0 0.0
      %5633 = vmatmul.mubr.f32.gmra.mxu0 %v5434
      %v5634 = vpop.f32.mrf.mxu0
      %v5635 = vadd.f32 %v5311, %v5634
      %v5636 = vpop.f32.mrf.mxu0
      %5637 = vmatprep.mubr.f32.mxu0 0.0
      %5638 = vmatmul.mubr.f32.gmra.mxu0 %v5437
      %v5639 = vpop.f32.mrf.mxu0
      %v5640 = vadd.f32 %v5316, %v5639
      %v5641 = vpop.f32.mrf.mxu0
      %5642 = vmatprep.mubr.f32.mxu0 0.0
      %5643 = vmatmul.mubr.f32.gmra.mxu0 %v5440
      %v5644 = vpop.f32.mrf.mxu0
      %v5645 = vadd.f32 %v5321, %v5644
      %v5646 = vpop.f32.mrf.mxu0
      %5647 = vmatprep.mubr.f32.mxu0 0.0
      %5648 = vmatmul.mubr.f32.gmra.mxu0 %v5443
      %v5649 = vpop.f32.mrf.mxu0
      %v5650 = vadd.f32 %v5326, %v5649
      %v5651 = vpop.f32.mrf.mxu0
      %5652 = vmatprep.mubr.f32.mxu0 0.0
      %5653 = vmatmul.mubr.f32.gmra.mxu0 %v5446
      %v5654 = vpop.f32.mrf.mxu0
      %v5655 = vadd.f32 %v5331, %v5654
      %v5656 = vpop.f32.mrf.mxu0
      %5657 = vmatprep.mubr.f32.mxu0 0.0
      %5658 = vmatmul.mubr.f32.gmra.mxu0 %v5449
      %v5659 = vpop.f32.mrf.mxu0
      %v5660 = vadd.f32 %v5336, %v5659
      %v5661 = vpop.f32.mrf.mxu0
      %5662 = vmatprep.mubr.f32.mxu0 0.0
      %5663 = vmatmul.mubr.f32.gmra.mxu0 %v5452
      %v5664 = vpop.f32.mrf.mxu0
      %v5665 = vadd.f32 %v5341, %v5664
      %v5666 = vpop.f32.mrf.mxu0
      %5667 = vmatprep.mubr.f32.mxu0 0.0
      %5668 = vmatmul.mubr.f32.gmra.mxu0 %v5455
      %v5669 = vpop.f32.mrf.mxu0
      %v5670 = vadd.f32 %v5346, %v5669
      %v5671 = vpop.f32.mrf.mxu0
      %5672 = vmatprep.mubr.f32.mxu0 0.0
      %5673 = vmatmul.mubr.f32.gmra.mxu0 %v5458
      %v5674 = vpop.f32.mrf.mxu0
      %v5675 = vadd.f32 %v5351, %v5674
      %v5676 = vpop.f32.mrf.mxu0
      %5677 = vmatprep.mubr.f32.mxu0 0.0
      %5678 = vmatmul.mubr.f32.gmra.mxu0 %v5461
      %v5679 = vpop.f32.mrf.mxu0
      %v5680 = vadd.f32 %v5356, %v5679
      %v5681 = vpop.f32.mrf.mxu0
      %5682 = vmatprep.mubr.f32.mxu0 0.0
      %5683 = vmatmul.mubr.f32.gmra.mxu0 %v5464
      %v5684 = vpop.f32.mrf.mxu0
      %v5685 = vadd.f32 %v5361, %v5684
      %v5686 = vpop.f32.mrf.mxu0
      %5687 = vmatprep.mubr.f32.mxu0 0.0
      %5688 = vmatmul.mubr.f32.gmra.mxu0 %v5467
      %v5689 = vpop.f32.mrf.mxu0
      %v5690 = vadd.f32 %v5366, %v5689
      %v5691 = vpop.f32.mrf.mxu0
      %5692 = vmatprep.mubr.f32.mxu0 0.0
      %5693 = vmatmul.mubr.f32.gmra.mxu0 %v5470
      %v5694 = vpop.f32.mrf.mxu0
      %v5695 = vadd.f32 %v5371, %v5694
      %v5696 = vpop.f32.mrf.mxu0
      %5697 = vmatprep.mubr.f32.mxu0 0.0
      %5698 = vmatmul.mubr.f32.gmra.mxu0 %v5473
      %v5699 = vpop.f32.mrf.mxu0
      %v5700 = vadd.f32 %v5376, %v5699
      %v5701 = vpop.f32.mrf.mxu0
      %5702 = vdwg.mxu0
      %v5703 = vld [vmem:[%s4141 + $0x1] sm:$0xff]
      %v5704 = vld [vmem:[%s4141 + $0x9] sm:$0xff]
      %v5705 = vld [vmem:[%s4141 + $0x19] sm:$0xff]
      %v5706 = vld [vmem:[%s4141 + $0x21] sm:$0xff]
      %v5707 = vld [vmem:[%s4141 + $0x31] sm:$0xff]
      %v5708 = vld [vmem:[%s4141 + $0x39] sm:$0xff]
      %v5709 = vld [vmem:[%s4141 + $0x49] sm:$0xff]
      %v5710 = vld [vmem:[%s4141 + $0x51] sm:$0xff]
      %v5711 = vld [vmem:[%s4141 + $0x61] sm:$0xff]
      %v5712 = vld [vmem:[%s4141 + $0x69] sm:$0xff]
      %v5713 = vld [vmem:[%s4141 + $0x79] sm:$0xff]
      %v5714 = vld [vmem:[%s4141 + $0x81] sm:$0xff]
      %v5715 = vld [vmem:[%s4141 + $0x91] sm:$0xff]
      %v5716 = vld [vmem:[%s4141 + $0x99] sm:$0xff]
      %v5717 = vld [vmem:[%s4141 + $0xa9] sm:$0xff]
      %v5718 = vld [vmem:[%s4141 + $0xb1] sm:$0xff]
      %v5719 = vld [vmem:[%s4141 + $0xc1] sm:$0xff]
      %v5720 = vld [vmem:[%s4141 + $0xc9] sm:$0xff]
      %v5721 = vld [vmem:[%s4141 + $0xd9] sm:$0xff]
      %v5722 = vld [vmem:[%s4141 + $0xe1] sm:$0xff]
      %v5723 = vld [vmem:[%s4141 + $0xf1] sm:$0xff]
      %v5724 = vld [vmem:[%s4141 + $0xf9] sm:$0xff]
      %v5725 = vld [vmem:[%s4141 + $0x109] sm:$0xff]
      %v5726 = vld [vmem:[%s4141 + $0x111] sm:$0xff]
      %v5727 = vld [vmem:[%s4141 + $0x121] sm:$0xff]
      %v5728 = vld [vmem:[%s4141 + $0x129] sm:$0xff]
      %v5729 = vld [vmem:[%s4141 + $0x139] sm:$0xff]
      %v5730 = vld [vmem:[%s4141 + $0x141] sm:$0xff]
      %v5731 = vld [vmem:[%s4141 + $0x151] sm:$0xff]
      %v5732 = vld [vmem:[%s4141 + $0x159] sm:$0xff]
      %v5733 = vld [vmem:[%s4141 + $0x169] sm:$0xff]
      %v5734 = vld [vmem:[%s4141 + $0x171] sm:$0xff]
      %s5735 = scalar_lea.vmem %s1, 56
      %v5736 = vld [vmem:[%s5735] sm:$0xf]
      %v5738 = vsel %vm264, %v5703, 0
      %v5741 = vsel %vm264, %v5704, 0
      %v5744 = vsel %vm264, %v5705, 0
      %v5747 = vsel %vm264, %v5706, 0
      %v5750 = vsel %vm264, %v5707, 0
      %v5753 = vsel %vm264, %v5708, 0
      %v5756 = vsel %vm264, %v5709, 0
      %v5759 = vsel %vm264, %v5710, 0
      %v5762 = vsel %vm264, %v5711, 0
      %v5765 = vsel %vm264, %v5712, 0
      %v5768 = vsel %vm264, %v5713, 0
      %v5771 = vsel %vm264, %v5714, 0
      %v5774 = vsel %vm264, %v5715, 0
      %v5777 = vsel %vm264, %v5716, 0
      %v5780 = vsel %vm264, %v5717, 0
      %v5783 = vsel %vm264, %v5718, 0
      %v5786 = vsel %vm264, %v5719, 0
      %v5789 = vsel %vm264, %v5720, 0
      %v5792 = vsel %vm264, %v5721, 0
      %v5795 = vsel %vm264, %v5722, 0
      %v5798 = vsel %vm264, %v5723, 0
      %v5801 = vsel %vm264, %v5724, 0
      %v5804 = vsel %vm264, %v5725, 0
      %v5807 = vsel %vm264, %v5726, 0
      %v5810 = vsel %vm264, %v5727, 0
      %v5813 = vsel %vm264, %v5728, 0
      %v5816 = vsel %vm264, %v5729, 0
      %v5819 = vsel %vm264, %v5730, 0
      %v5822 = vsel %vm264, %v5731, 0
      %v5825 = vsel %vm264, %v5732, 0
      %v5828 = vsel %vm264, %v5733, 0
      %v5831 = vsel %vm264, %v5734, 0
      %v5834 = vsel %vm461, %v5736, 0
      %5836 = vmatprep.subr.mxu0 0.0
      %5837 = vmatpush1.msra.mxu0 0.0
      %5838 = vmatprep.subr.mxu0 0.0
      %5839 = vmatpush1.msra.mxu0 0.0
      %5840 = vmatprep.subr.mxu0 0.0
      %5841 = vmatpush1.msra.mxu0 0.0
      %5842 = vmatprep.subr.mxu0 0.0
      %5843 = vmatpush1.msra.mxu0 0.0
      %5844 = vmatprep.subr.mxu0 0.0
      %5845 = vmatpush1.msra.mxu0 0.0
      %5846 = vmatprep.subr.mxu0 0.0
      %5847 = vmatpush1.msra.mxu0 0.0
      %5848 = vmatprep.subr.mxu0 0.0
      %5849 = vmatpush1.msra.mxu0 0.0
      %5850 = vmatprep.subr.mxu0 0.0
      %5851 = vmatpush1.msra.mxu0 0.0
      %5852 = vmatprep.subr.mxu0 0.0
      %5853 = vmatpush1.msra.mxu0 0.0
      %5854 = vmatprep.subr.mxu0 0.0
      %5855 = vmatpush1.msra.mxu0 0.0
      %5856 = vmatprep.subr.mxu0 0.0
      %5857 = vmatpush1.msra.mxu0 0.0
      %5858 = vmatprep.subr.mxu0 0.0
      %5859 = vmatpush1.msra.mxu0 0.0
      %5860 = vmatprep.subr.mxu0 0.0
      %5861 = vmatpush1.msra.mxu0 0.0
      %5862 = vmatprep.subr.mxu0 0.0
      %5863 = vmatpush1.msra.mxu0 0.0
      %5864 = vmatprep.subr.mxu0 0.0
      %5865 = vmatpush1.msra.mxu0 0.0
      %5866 = vmatprep.subr.mxu0 0.0
      %5867 = vmatpush1.msra.mxu0 %v5834
      %5868 = vmatprep.subr.mxu0 0.0
      %5869 = vmatpush2.msra.mxu0 0.0
      %5870 = vmatprep.subr.mxu0 0.0
      %5871 = vmatpush2.msra.mxu0 0.0
      %5872 = vmatprep.subr.mxu0 0.0
      %5873 = vmatpush2.msra.mxu0 0.0
      %5874 = vmatprep.subr.mxu0 0.0
      %5875 = vmatpush2.msra.mxu0 0.0
      %5876 = vmatprep.subr.mxu0 0.0
      %5877 = vmatpush2.msra.mxu0 0.0
      %5878 = vmatprep.subr.mxu0 0.0
      %5879 = vmatpush2.msra.mxu0 0.0
      %5880 = vmatprep.subr.mxu0 0.0
      %5881 = vmatpush2.msra.mxu0 0.0
      %5882 = vmatprep.subr.mxu0 0.0
      %5883 = vmatpush2.msra.mxu0 0.0
      %5884 = vmatprep.subr.mxu0 0.0
      %5885 = vmatpush2.msra.mxu0 0.0
      %5886 = vmatprep.subr.mxu0 0.0
      %5887 = vmatpush2.msra.mxu0 0.0
      %5888 = vmatprep.subr.mxu0 0.0
      %5889 = vmatpush2.msra.mxu0 0.0
      %5890 = vmatprep.subr.mxu0 0.0
      %5891 = vmatpush2.msra.mxu0 0.0
      %5892 = vmatprep.subr.mxu0 0.0
      %5893 = vmatpush2.msra.mxu0 0.0
      %5894 = vmatprep.subr.mxu0 0.0
      %5895 = vmatpush2.msra.mxu0 0.0
      %5896 = vmatprep.subr.mxu0 0.0
      %5897 = vmatpush2.msra.mxu0 0.0
      %5898 = vmatprep.subr.mxu0 0.0
      %5899 = vmatpush2.msra.mxu0 0.0
      %5900 = vmatprep.mubr.f32.mxu0 0.0
      %5901 = vmatmul.mubr.f32.gmra.mxu0 %v5738
      %v5902 = vpop.f32.mrf.mxu0
      %v5903 = vadd.f32 0.0, %v5902
      %v5904 = vpop.f32.mrf.mxu0
      %5905 = vmatprep.mubr.f32.mxu0 0.0
      %5906 = vmatmul.mubr.f32.gmra.mxu0 %v5741
      %v5907 = vpop.f32.mrf.mxu0
      %v5908 = vadd.f32 0.0, %v5907
      %v5909 = vpop.f32.mrf.mxu0
      %5910 = vmatprep.mubr.f32.mxu0 0.0
      %5911 = vmatmul.mubr.f32.gmra.mxu0 %v5744
      %v5912 = vpop.f32.mrf.mxu0
      %v5913 = vadd.f32 0.0, %v5912
      %v5914 = vpop.f32.mrf.mxu0
      %5915 = vmatprep.mubr.f32.mxu0 0.0
      %5916 = vmatmul.mubr.f32.gmra.mxu0 %v5747
      %v5917 = vpop.f32.mrf.mxu0
      %v5918 = vadd.f32 0.0, %v5917
      %v5919 = vpop.f32.mrf.mxu0
      %5920 = vmatprep.mubr.f32.mxu0 0.0
      %5921 = vmatmul.mubr.f32.gmra.mxu0 %v5750
      %v5922 = vpop.f32.mrf.mxu0
      %v5923 = vadd.f32 0.0, %v5922
      %v5924 = vpop.f32.mrf.mxu0
      %5925 = vmatprep.mubr.f32.mxu0 0.0
      %5926 = vmatmul.mubr.f32.gmra.mxu0 %v5753
      %v5927 = vpop.f32.mrf.mxu0
      %v5928 = vadd.f32 0.0, %v5927
      %v5929 = vpop.f32.mrf.mxu0
      %5930 = vmatprep.mubr.f32.mxu0 0.0
      %5931 = vmatmul.mubr.f32.gmra.mxu0 %v5756
      %v5932 = vpop.f32.mrf.mxu0
      %v5933 = vadd.f32 0.0, %v5932
      %v5934 = vpop.f32.mrf.mxu0
      %5935 = vmatprep.mubr.f32.mxu0 0.0
      %5936 = vmatmul.mubr.f32.gmra.mxu0 %v5759
      %v5937 = vpop.f32.mrf.mxu0
      %v5938 = vadd.f32 0.0, %v5937
      %v5939 = vpop.f32.mrf.mxu0
      %5940 = vmatprep.mubr.f32.mxu0 0.0
      %5941 = vmatmul.mubr.f32.gmra.mxu0 %v5762
      %v5942 = vpop.f32.mrf.mxu0
      %v5943 = vadd.f32 0.0, %v5942
      %v5944 = vpop.f32.mrf.mxu0
      %5945 = vmatprep.mubr.f32.mxu0 0.0
      %5946 = vmatmul.mubr.f32.gmra.mxu0 %v5765
      %v5947 = vpop.f32.mrf.mxu0
      %v5948 = vadd.f32 0.0, %v5947
      %v5949 = vpop.f32.mrf.mxu0
      %5950 = vmatprep.mubr.f32.mxu0 0.0
      %5951 = vmatmul.mubr.f32.gmra.mxu0 %v5768
      %v5952 = vpop.f32.mrf.mxu0
      %v5953 = vadd.f32 0.0, %v5952
      %v5954 = vpop.f32.mrf.mxu0
      %5955 = vmatprep.mubr.f32.mxu0 0.0
      %5956 = vmatmul.mubr.f32.gmra.mxu0 %v5771
      %v5957 = vpop.f32.mrf.mxu0
      %v5958 = vadd.f32 0.0, %v5957
      %v5959 = vpop.f32.mrf.mxu0
      %5960 = vmatprep.mubr.f32.mxu0 0.0
      %5961 = vmatmul.mubr.f32.gmra.mxu0 %v5774
      %v5962 = vpop.f32.mrf.mxu0
      %v5963 = vadd.f32 0.0, %v5962
      %v5964 = vpop.f32.mrf.mxu0
      %5965 = vmatprep.mubr.f32.mxu0 0.0
      %5966 = vmatmul.mubr.f32.gmra.mxu0 %v5777
      %v5967 = vpop.f32.mrf.mxu0
      %v5968 = vadd.f32 0.0, %v5967
      %v5969 = vpop.f32.mrf.mxu0
      %5970 = vmatprep.mubr.f32.mxu0 0.0
      %5971 = vmatmul.mubr.f32.gmra.mxu0 %v5780
      %v5972 = vpop.f32.mrf.mxu0
      %v5973 = vadd.f32 0.0, %v5972
      %v5974 = vpop.f32.mrf.mxu0
      %5975 = vmatprep.mubr.f32.mxu0 0.0
      %5976 = vmatmul.mubr.f32.gmra.mxu0 %v5783
      %v5977 = vpop.f32.mrf.mxu0
      %v5978 = vadd.f32 0.0, %v5977
      %v5979 = vpop.f32.mrf.mxu0
      %5980 = vmatprep.mubr.f32.mxu0 0.0
      %5981 = vmatmul.mubr.f32.gmra.mxu0 %v5786
      %v5982 = vpop.f32.mrf.mxu0
      %v5983 = vadd.f32 0.0, %v5982
      %v5984 = vpop.f32.mrf.mxu0
      %5985 = vmatprep.mubr.f32.mxu0 0.0
      %5986 = vmatmul.mubr.f32.gmra.mxu0 %v5789
      %v5987 = vpop.f32.mrf.mxu0
      %v5988 = vadd.f32 0.0, %v5987
      %v5989 = vpop.f32.mrf.mxu0
      %5990 = vmatprep.mubr.f32.mxu0 0.0
      %5991 = vmatmul.mubr.f32.gmra.mxu0 %v5792
      %v5992 = vpop.f32.mrf.mxu0
      %v5993 = vadd.f32 0.0, %v5992
      %v5994 = vpop.f32.mrf.mxu0
      %5995 = vmatprep.mubr.f32.mxu0 0.0
      %5996 = vmatmul.mubr.f32.gmra.mxu0 %v5795
      %v5997 = vpop.f32.mrf.mxu0
      %v5998 = vadd.f32 0.0, %v5997
      %v5999 = vpop.f32.mrf.mxu0
      %6000 = vmatprep.mubr.f32.mxu0 0.0
      %6001 = vmatmul.mubr.f32.gmra.mxu0 %v5798
      %v6002 = vpop.f32.mrf.mxu0
      %v6003 = vadd.f32 0.0, %v6002
      %v6004 = vpop.f32.mrf.mxu0
      %6005 = vmatprep.mubr.f32.mxu0 0.0
      %6006 = vmatmul.mubr.f32.gmra.mxu0 %v5801
      %v6007 = vpop.f32.mrf.mxu0
      %v6008 = vadd.f32 0.0, %v6007
      %v6009 = vpop.f32.mrf.mxu0
      %6010 = vmatprep.mubr.f32.mxu0 0.0
      %6011 = vmatmul.mubr.f32.gmra.mxu0 %v5804
      %v6012 = vpop.f32.mrf.mxu0
      %v6013 = vadd.f32 0.0, %v6012
      %v6014 = vpop.f32.mrf.mxu0
      %6015 = vmatprep.mubr.f32.mxu0 0.0
      %6016 = vmatmul.mubr.f32.gmra.mxu0 %v5807
      %v6017 = vpop.f32.mrf.mxu0
      %v6018 = vadd.f32 0.0, %v6017
      %v6019 = vpop.f32.mrf.mxu0
      %6020 = vmatprep.mubr.f32.mxu0 0.0
      %6021 = vmatmul.mubr.f32.gmra.mxu0 %v5810
      %v6022 = vpop.f32.mrf.mxu0
      %v6023 = vadd.f32 0.0, %v6022
      %v6024 = vpop.f32.mrf.mxu0
      %6025 = vmatprep.mubr.f32.mxu0 0.0
      %6026 = vmatmul.mubr.f32.gmra.mxu0 %v5813
      %v6027 = vpop.f32.mrf.mxu0
      %v6028 = vadd.f32 0.0, %v6027
      %v6029 = vpop.f32.mrf.mxu0
      %6030 = vmatprep.mubr.f32.mxu0 0.0
      %6031 = vmatmul.mubr.f32.gmra.mxu0 %v5816
      %v6032 = vpop.f32.mrf.mxu0
      %v6033 = vadd.f32 0.0, %v6032
      %v6034 = vpop.f32.mrf.mxu0
      %6035 = vmatprep.mubr.f32.mxu0 0.0
      %6036 = vmatmul.mubr.f32.gmra.mxu0 %v5819
      %v6037 = vpop.f32.mrf.mxu0
      %v6038 = vadd.f32 0.0, %v6037
      %v6039 = vpop.f32.mrf.mxu0
      %6040 = vmatprep.mubr.f32.mxu0 0.0
      %6041 = vmatmul.mubr.f32.gmra.mxu0 %v5822
      %v6042 = vpop.f32.mrf.mxu0
      %v6043 = vadd.f32 0.0, %v6042
      %v6044 = vpop.f32.mrf.mxu0
      %6045 = vmatprep.mubr.f32.mxu0 0.0
      %6046 = vmatmul.mubr.f32.gmra.mxu0 %v5825
      %v6047 = vpop.f32.mrf.mxu0
      %v6048 = vadd.f32 0.0, %v6047
      %v6049 = vpop.f32.mrf.mxu0
      %6050 = vmatprep.mubr.f32.mxu0 0.0
      %6051 = vmatmul.mubr.f32.gmra.mxu0 %v5828
      %v6052 = vpop.f32.mrf.mxu0
      %v6053 = vadd.f32 0.0, %v6052
      %v6054 = vpop.f32.mrf.mxu0
      %6055 = vmatprep.mubr.f32.mxu0 0.0
      %6056 = vmatmul.mubr.f32.gmra.mxu0 %v5831
      %v6057 = vpop.f32.mrf.mxu0
      %v6058 = vadd.f32 0.0, %v6057
      %v6059 = vpop.f32.mrf.mxu0
      %6060 = vdwg.mxu0
      %v6061 = vadd.f32 %v5545, %v5903
      %v6062 = vadd.f32 %v5550, %v5908
      %v6063 = vadd.f32 %v5555, %v5913
      %v6064 = vadd.f32 %v5560, %v5918
      %v6065 = vadd.f32 %v5565, %v5923
      %v6066 = vadd.f32 %v5570, %v5928
      %v6067 = vadd.f32 %v5575, %v5933
      %v6068 = vadd.f32 %v5580, %v5938
      %v6069 = vadd.f32 %v5585, %v5943
      %v6070 = vadd.f32 %v5590, %v5948
      %v6071 = vadd.f32 %v5595, %v5953
      %v6072 = vadd.f32 %v5600, %v5958
      %v6073 = vadd.f32 %v5605, %v5963
      %v6074 = vadd.f32 %v5610, %v5968
      %v6075 = vadd.f32 %v5615, %v5973
      %v6076 = vadd.f32 %v5620, %v5978
      %v6077 = vadd.f32 %v5625, %v5983
      %v6078 = vadd.f32 %v5630, %v5988
      %v6079 = vadd.f32 %v5635, %v5993
      %v6080 = vadd.f32 %v5640, %v5998
      %v6081 = vadd.f32 %v5645, %v6003
      %v6082 = vadd.f32 %v5650, %v6008
      %v6083 = vadd.f32 %v5655, %v6013
      %v6084 = vadd.f32 %v5660, %v6018
      %v6085 = vadd.f32 %v5665, %v6023
      %v6086 = vadd.f32 %v5670, %v6028
      %v6087 = vadd.f32 %v5675, %v6033
      %v6088 = vadd.f32 %v5680, %v6038
      %v6089 = vadd.f32 %v5685, %v6043
      %v6090 = vadd.f32 %v5690, %v6048
      %v6091 = vadd.f32 %v5695, %v6053
      %v6092 = vadd.f32 %v5700, %v6058
      %v6093 = vld [vmem:[%s4141 + $0x2] sm:$0xff]
      %v6094 = vld [vmem:[%s4141 + $0xa] sm:$0xff]
      %v6095 = vld [vmem:[%s4141 + $0x1a] sm:$0xff]
      %v6096 = vld [vmem:[%s4141 + $0x22] sm:$0xff]
      %v6097 = vld [vmem:[%s4141 + $0x32] sm:$0xff]
      %v6098 = vld [vmem:[%s4141 + $0x3a] sm:$0xff]
      %v6099 = vld [vmem:[%s4141 + $0x4a] sm:$0xff]
      %v6100 = vld [vmem:[%s4141 + $0x52] sm:$0xff]
      %v6101 = vld [vmem:[%s4141 + $0x62] sm:$0xff]
      %v6102 = vld [vmem:[%s4141 + $0x6a] sm:$0xff]
      %v6103 = vld [vmem:[%s4141 + $0x7a] sm:$0xff]
      %v6104 = vld [vmem:[%s4141 + $0x82] sm:$0xff]
      %v6105 = vld [vmem:[%s4141 + $0x92] sm:$0xff]
      %v6106 = vld [vmem:[%s4141 + $0x9a] sm:$0xff]
      %v6107 = vld [vmem:[%s4141 + $0xaa] sm:$0xff]
      %v6108 = vld [vmem:[%s4141 + $0xb2] sm:$0xff]
      %v6109 = vld [vmem:[%s4141 + $0xc2] sm:$0xff]
      %v6110 = vld [vmem:[%s4141 + $0xca] sm:$0xff]
      %v6111 = vld [vmem:[%s4141 + $0xda] sm:$0xff]
      %v6112 = vld [vmem:[%s4141 + $0xe2] sm:$0xff]
      %v6113 = vld [vmem:[%s4141 + $0xf2] sm:$0xff]
      %v6114 = vld [vmem:[%s4141 + $0xfa] sm:$0xff]
      %v6115 = vld [vmem:[%s4141 + $0x10a] sm:$0xff]
      %v6116 = vld [vmem:[%s4141 + $0x112] sm:$0xff]
      %v6117 = vld [vmem:[%s4141 + $0x122] sm:$0xff]
      %v6118 = vld [vmem:[%s4141 + $0x12a] sm:$0xff]
      %v6119 = vld [vmem:[%s4141 + $0x13a] sm:$0xff]
      %v6120 = vld [vmem:[%s4141 + $0x142] sm:$0xff]
      %v6121 = vld [vmem:[%s4141 + $0x152] sm:$0xff]
      %v6122 = vld [vmem:[%s4141 + $0x15a] sm:$0xff]
      %v6123 = vld [vmem:[%s4141 + $0x16a] sm:$0xff]
      %v6124 = vld [vmem:[%s4141 + $0x172] sm:$0xff]
      %s6125 = scalar_lea.vmem %s1, 60
      %v6126 = vld [vmem:[%s6125] sm:$0xf]
      %v6128 = vsel %vm264, %v6093, 0
      %v6131 = vsel %vm264, %v6094, 0
      %v6134 = vsel %vm264, %v6095, 0
      %v6137 = vsel %vm264, %v6096, 0
      %v6140 = vsel %vm264, %v6097, 0
      %v6143 = vsel %vm264, %v6098, 0
      %v6146 = vsel %vm264, %v6099, 0
      %v6149 = vsel %vm264, %v6100, 0
      %v6152 = vsel %vm264, %v6101, 0
      %v6155 = vsel %vm264, %v6102, 0
      %v6158 = vsel %vm264, %v6103, 0
      %v6161 = vsel %vm264, %v6104, 0
      %v6164 = vsel %vm264, %v6105, 0
      %v6167 = vsel %vm264, %v6106, 0
      %v6170 = vsel %vm264, %v6107, 0
      %v6173 = vsel %vm264, %v6108, 0
      %v6176 = vsel %vm264, %v6109, 0
      %v6179 = vsel %vm264, %v6110, 0
      %v6182 = vsel %vm264, %v6111, 0
      %v6185 = vsel %vm264, %v6112, 0
      %v6188 = vsel %vm264, %v6113, 0
      %v6191 = vsel %vm264, %v6114, 0
      %v6194 = vsel %vm264, %v6115, 0
      %v6197 = vsel %vm264, %v6116, 0
      %v6200 = vsel %vm264, %v6117, 0
      %v6203 = vsel %vm264, %v6118, 0
      %v6206 = vsel %vm264, %v6119, 0
      %v6209 = vsel %vm264, %v6120, 0
      %v6212 = vsel %vm264, %v6121, 0
      %v6215 = vsel %vm264, %v6122, 0
      %v6218 = vsel %vm264, %v6123, 0
      %v6221 = vsel %vm264, %v6124, 0
      %v6224 = vsel %vm461, %v6126, 0
      %6226 = vmatprep.subr.mxu0 0.0
      %6227 = vmatpush1.msra.mxu0 0.0
      %6228 = vmatprep.subr.mxu0 0.0
      %6229 = vmatpush1.msra.mxu0 0.0
      %6230 = vmatprep.subr.mxu0 0.0
      %6231 = vmatpush1.msra.mxu0 0.0
      %6232 = vmatprep.subr.mxu0 0.0
      %6233 = vmatpush1.msra.mxu0 0.0
      %6234 = vmatprep.subr.mxu0 0.0
      %6235 = vmatpush1.msra.mxu0 0.0
      %6236 = vmatprep.subr.mxu0 0.0
      %6237 = vmatpush1.msra.mxu0 0.0
      %6238 = vmatprep.subr.mxu0 0.0
      %6239 = vmatpush1.msra.mxu0 0.0
      %6240 = vmatprep.subr.mxu0 0.0
      %6241 = vmatpush1.msra.mxu0 0.0
      %6242 = vmatprep.subr.mxu0 0.0
      %6243 = vmatpush1.msra.mxu0 0.0
      %6244 = vmatprep.subr.mxu0 0.0
      %6245 = vmatpush1.msra.mxu0 0.0
      %6246 = vmatprep.subr.mxu0 0.0
      %6247 = vmatpush1.msra.mxu0 0.0
      %6248 = vmatprep.subr.mxu0 0.0
      %6249 = vmatpush1.msra.mxu0 0.0
      %6250 = vmatprep.subr.mxu0 0.0
      %6251 = vmatpush1.msra.mxu0 0.0
      %6252 = vmatprep.subr.mxu0 0.0
      %6253 = vmatpush1.msra.mxu0 0.0
      %6254 = vmatprep.subr.mxu0 0.0
      %6255 = vmatpush1.msra.mxu0 0.0
      %6256 = vmatprep.subr.mxu0 0.0
      %6257 = vmatpush1.msra.mxu0 %v6224
      %6258 = vmatprep.subr.mxu0 0.0
      %6259 = vmatpush2.msra.mxu0 0.0
      %6260 = vmatprep.subr.mxu0 0.0
      %6261 = vmatpush2.msra.mxu0 0.0
      %6262 = vmatprep.subr.mxu0 0.0
      %6263 = vmatpush2.msra.mxu0 0.0
      %6264 = vmatprep.subr.mxu0 0.0
      %6265 = vmatpush2.msra.mxu0 0.0
      %6266 = vmatprep.subr.mxu0 0.0
      %6267 = vmatpush2.msra.mxu0 0.0
      %6268 = vmatprep.subr.mxu0 0.0
      %6269 = vmatpush2.msra.mxu0 0.0
      %6270 = vmatprep.subr.mxu0 0.0
      %6271 = vmatpush2.msra.mxu0 0.0
      %6272 = vmatprep.subr.mxu0 0.0
      %6273 = vmatpush2.msra.mxu0 0.0
      %6274 = vmatprep.subr.mxu0 0.0
      %6275 = vmatpush2.msra.mxu0 0.0
      %6276 = vmatprep.subr.mxu0 0.0
      %6277 = vmatpush2.msra.mxu0 0.0
      %6278 = vmatprep.subr.mxu0 0.0
      %6279 = vmatpush2.msra.mxu0 0.0
      %6280 = vmatprep.subr.mxu0 0.0
      %6281 = vmatpush2.msra.mxu0 0.0
      %6282 = vmatprep.subr.mxu0 0.0
      %6283 = vmatpush2.msra.mxu0 0.0
      %6284 = vmatprep.subr.mxu0 0.0
      %6285 = vmatpush2.msra.mxu0 0.0
      %6286 = vmatprep.subr.mxu0 0.0
      %6287 = vmatpush2.msra.mxu0 0.0
      %6288 = vmatprep.subr.mxu0 0.0
      %6289 = vmatpush2.msra.mxu0 0.0
      %6290 = vmatprep.mubr.f32.mxu0 0.0
      %6291 = vmatmul.mubr.f32.gmra.mxu0 %v6128
      %v6292 = vpop.f32.mrf.mxu0
      %v6293 = vadd.f32 0.0, %v6292
      %v6294 = vpop.f32.mrf.mxu0
      %6295 = vmatprep.mubr.f32.mxu0 0.0
      %6296 = vmatmul.mubr.f32.gmra.mxu0 %v6131
      %v6297 = vpop.f32.mrf.mxu0
      %v6298 = vadd.f32 0.0, %v6297
      %v6299 = vpop.f32.mrf.mxu0
      %6300 = vmatprep.mubr.f32.mxu0 0.0
      %6301 = vmatmul.mubr.f32.gmra.mxu0 %v6134
      %v6302 = vpop.f32.mrf.mxu0
      %v6303 = vadd.f32 0.0, %v6302
      %v6304 = vpop.f32.mrf.mxu0
      %6305 = vmatprep.mubr.f32.mxu0 0.0
      %6306 = vmatmul.mubr.f32.gmra.mxu0 %v6137
      %v6307 = vpop.f32.mrf.mxu0
      %v6308 = vadd.f32 0.0, %v6307
      %v6309 = vpop.f32.mrf.mxu0
      %6310 = vmatprep.mubr.f32.mxu0 0.0
      %6311 = vmatmul.mubr.f32.gmra.mxu0 %v6140
      %v6312 = vpop.f32.mrf.mxu0
      %v6313 = vadd.f32 0.0, %v6312
      %v6314 = vpop.f32.mrf.mxu0
      %6315 = vmatprep.mubr.f32.mxu0 0.0
      %6316 = vmatmul.mubr.f32.gmra.mxu0 %v6143
      %v6317 = vpop.f32.mrf.mxu0
      %v6318 = vadd.f32 0.0, %v6317
      %v6319 = vpop.f32.mrf.mxu0
      %6320 = vmatprep.mubr.f32.mxu0 0.0
      %6321 = vmatmul.mubr.f32.gmra.mxu0 %v6146
      %v6322 = vpop.f32.mrf.mxu0
      %v6323 = vadd.f32 0.0, %v6322
      %v6324 = vpop.f32.mrf.mxu0
      %6325 = vmatprep.mubr.f32.mxu0 0.0
      %6326 = vmatmul.mubr.f32.gmra.mxu0 %v6149
      %v6327 = vpop.f32.mrf.mxu0
      %v6328 = vadd.f32 0.0, %v6327
      %v6329 = vpop.f32.mrf.mxu0
      %6330 = vmatprep.mubr.f32.mxu0 0.0
      %6331 = vmatmul.mubr.f32.gmra.mxu0 %v6152
      %v6332 = vpop.f32.mrf.mxu0
      %v6333 = vadd.f32 0.0, %v6332
      %v6334 = vpop.f32.mrf.mxu0
      %6335 = vmatprep.mubr.f32.mxu0 0.0
      %6336 = vmatmul.mubr.f32.gmra.mxu0 %v6155
      %v6337 = vpop.f32.mrf.mxu0
      %v6338 = vadd.f32 0.0, %v6337
      %v6339 = vpop.f32.mrf.mxu0
      %6340 = vmatprep.mubr.f32.mxu0 0.0
      %6341 = vmatmul.mubr.f32.gmra.mxu0 %v6158
      %v6342 = vpop.f32.mrf.mxu0
      %v6343 = vadd.f32 0.0, %v6342
      %v6344 = vpop.f32.mrf.mxu0
      %6345 = vmatprep.mubr.f32.mxu0 0.0
      %6346 = vmatmul.mubr.f32.gmra.mxu0 %v6161
      %v6347 = vpop.f32.mrf.mxu0
      %v6348 = vadd.f32 0.0, %v6347
      %v6349 = vpop.f32.mrf.mxu0
      %6350 = vmatprep.mubr.f32.mxu0 0.0
      %6351 = vmatmul.mubr.f32.gmra.mxu0 %v6164
      %v6352 = vpop.f32.mrf.mxu0
      %v6353 = vadd.f32 0.0, %v6352
      %v6354 = vpop.f32.mrf.mxu0
      %6355 = vmatprep.mubr.f32.mxu0 0.0
      %6356 = vmatmul.mubr.f32.gmra.mxu0 %v6167
      %v6357 = vpop.f32.mrf.mxu0
      %v6358 = vadd.f32 0.0, %v6357
      %v6359 = vpop.f32.mrf.mxu0
      %6360 = vmatprep.mubr.f32.mxu0 0.0
      %6361 = vmatmul.mubr.f32.gmra.mxu0 %v6170
      %v6362 = vpop.f32.mrf.mxu0
      %v6363 = vadd.f32 0.0, %v6362
      %v6364 = vpop.f32.mrf.mxu0
      %6365 = vmatprep.mubr.f32.mxu0 0.0
      %6366 = vmatmul.mubr.f32.gmra.mxu0 %v6173
      %v6367 = vpop.f32.mrf.mxu0
      %v6368 = vadd.f32 0.0, %v6367
      %v6369 = vpop.f32.mrf.mxu0
      %6370 = vmatprep.mubr.f32.mxu0 0.0
      %6371 = vmatmul.mubr.f32.gmra.mxu0 %v6176
      %v6372 = vpop.f32.mrf.mxu0
      %v6373 = vadd.f32 0.0, %v6372
      %v6374 = vpop.f32.mrf.mxu0
      %6375 = vmatprep.mubr.f32.mxu0 0.0
      %6376 = vmatmul.mubr.f32.gmra.mxu0 %v6179
      %v6377 = vpop.f32.mrf.mxu0
      %v6378 = vadd.f32 0.0, %v6377
      %v6379 = vpop.f32.mrf.mxu0
      %6380 = vmatprep.mubr.f32.mxu0 0.0
      %6381 = vmatmul.mubr.f32.gmra.mxu0 %v6182
      %v6382 = vpop.f32.mrf.mxu0
      %v6383 = vadd.f32 0.0, %v6382
      %v6384 = vpop.f32.mrf.mxu0
      %6385 = vmatprep.mubr.f32.mxu0 0.0
      %6386 = vmatmul.mubr.f32.gmra.mxu0 %v6185
      %v6387 = vpop.f32.mrf.mxu0
      %v6388 = vadd.f32 0.0, %v6387
      %v6389 = vpop.f32.mrf.mxu0
      %6390 = vmatprep.mubr.f32.mxu0 0.0
      %6391 = vmatmul.mubr.f32.gmra.mxu0 %v6188
      %v6392 = vpop.f32.mrf.mxu0
      %v6393 = vadd.f32 0.0, %v6392
      %v6394 = vpop.f32.mrf.mxu0
      %6395 = vmatprep.mubr.f32.mxu0 0.0
      %6396 = vmatmul.mubr.f32.gmra.mxu0 %v6191
      %v6397 = vpop.f32.mrf.mxu0
      %v6398 = vadd.f32 0.0, %v6397
      %v6399 = vpop.f32.mrf.mxu0
      %6400 = vmatprep.mubr.f32.mxu0 0.0
      %6401 = vmatmul.mubr.f32.gmra.mxu0 %v6194
      %v6402 = vpop.f32.mrf.mxu0
      %v6403 = vadd.f32 0.0, %v6402
      %v6404 = vpop.f32.mrf.mxu0
      %6405 = vmatprep.mubr.f32.mxu0 0.0
      %6406 = vmatmul.mubr.f32.gmra.mxu0 %v6197
      %v6407 = vpop.f32.mrf.mxu0
      %v6408 = vadd.f32 0.0, %v6407
      %v6409 = vpop.f32.mrf.mxu0
      %6410 = vmatprep.mubr.f32.mxu0 0.0
      %6411 = vmatmul.mubr.f32.gmra.mxu0 %v6200
      %v6412 = vpop.f32.mrf.mxu0
      %v6413 = vadd.f32 0.0, %v6412
      %v6414 = vpop.f32.mrf.mxu0
      %6415 = vmatprep.mubr.f32.mxu0 0.0
      %6416 = vmatmul.mubr.f32.gmra.mxu0 %v6203
      %v6417 = vpop.f32.mrf.mxu0
      %v6418 = vadd.f32 0.0, %v6417
      %v6419 = vpop.f32.mrf.mxu0
      %6420 = vmatprep.mubr.f32.mxu0 0.0
      %6421 = vmatmul.mubr.f32.gmra.mxu0 %v6206
      %v6422 = vpop.f32.mrf.mxu0
      %v6423 = vadd.f32 0.0, %v6422
      %v6424 = vpop.f32.mrf.mxu0
      %6425 = vmatprep.mubr.f32.mxu0 0.0
      %6426 = vmatmul.mubr.f32.gmra.mxu0 %v6209
      %v6427 = vpop.f32.mrf.mxu0
      %v6428 = vadd.f32 0.0, %v6427
      %v6429 = vpop.f32.mrf.mxu0
      %6430 = vmatprep.mubr.f32.mxu0 0.0
      %6431 = vmatmul.mubr.f32.gmra.mxu0 %v6212
      %v6432 = vpop.f32.mrf.mxu0
      %v6433 = vadd.f32 0.0, %v6432
      %v6434 = vpop.f32.mrf.mxu0
      %6435 = vmatprep.mubr.f32.mxu0 0.0
      %6436 = vmatmul.mubr.f32.gmra.mxu0 %v6215
      %v6437 = vpop.f32.mrf.mxu0
      %v6438 = vadd.f32 0.0, %v6437
      %v6439 = vpop.f32.mrf.mxu0
      %6440 = vmatprep.mubr.f32.mxu0 0.0
      %6441 = vmatmul.mubr.f32.gmra.mxu0 %v6218
      %v6442 = vpop.f32.mrf.mxu0
      %v6443 = vadd.f32 0.0, %v6442
      %v6444 = vpop.f32.mrf.mxu0
      %6445 = vmatprep.mubr.f32.mxu0 0.0
      %6446 = vmatmul.mubr.f32.gmra.mxu0 %v6221
      %v6447 = vpop.f32.mrf.mxu0
      %v6448 = vadd.f32 0.0, %v6447
      %v6449 = vpop.f32.mrf.mxu0
      %6450 = vdwg.mxu0
      %v6451 = vadd.f32 %v6061, %v6293
      %v6452 = vadd.f32 %v6062, %v6298
      %v6453 = vadd.f32 %v6063, %v6303
      %v6454 = vadd.f32 %v6064, %v6308
      %v6455 = vadd.f32 %v6065, %v6313
      %v6456 = vadd.f32 %v6066, %v6318
      %v6457 = vadd.f32 %v6067, %v6323
      %v6458 = vadd.f32 %v6068, %v6328
      %v6459 = vadd.f32 %v6069, %v6333
      %v6460 = vadd.f32 %v6070, %v6338
      %v6461 = vadd.f32 %v6071, %v6343
      %v6462 = vadd.f32 %v6072, %v6348
      %v6463 = vadd.f32 %v6073, %v6353
      %v6464 = vadd.f32 %v6074, %v6358
      %v6465 = vadd.f32 %v6075, %v6363
      %v6466 = vadd.f32 %v6076, %v6368
      %v6467 = vadd.f32 %v6077, %v6373
      %v6468 = vadd.f32 %v6078, %v6378
      %v6469 = vadd.f32 %v6079, %v6383
      %v6470 = vadd.f32 %v6080, %v6388
      %v6471 = vadd.f32 %v6081, %v6393
      %v6472 = vadd.f32 %v6082, %v6398
      %v6473 = vadd.f32 %v6083, %v6403
      %v6474 = vadd.f32 %v6084, %v6408
      %v6475 = vadd.f32 %v6085, %v6413
      %v6476 = vadd.f32 %v6086, %v6418
      %v6477 = vadd.f32 %v6087, %v6423
      %v6478 = vadd.f32 %v6088, %v6428
      %v6479 = vadd.f32 %v6089, %v6433
      %v6480 = vadd.f32 %v6090, %v6438
      %v6481 = vadd.f32 %v6091, %v6443
      %v6482 = vadd.f32 %v6092, %v6448
      %v6483 = vadd.f32 %v6451, %v1798
      %v6484 = vadd.f32 %v6452, %v1798
      %v6485 = vadd.f32 %v6453, %v1798
      %v6486 = vadd.f32 %v6454, %v1798
      %v6487 = vadd.f32 %v6455, %v1798
      %v6488 = vadd.f32 %v6456, %v1798
      %v6489 = vadd.f32 %v6457, %v1798
      %v6490 = vadd.f32 %v6458, %v1798
      %v6491 = vadd.f32 %v6459, %v1798
      %v6492 = vadd.f32 %v6460, %v1798
      %v6493 = vadd.f32 %v6461, %v1798
      %v6494 = vadd.f32 %v6462, %v1798
      %v6495 = vadd.f32 %v6463, %v1798
      %v6496 = vadd.f32 %v6464, %v1798
      %v6497 = vadd.f32 %v6465, %v1798
      %v6498 = vadd.f32 %v6466, %v1798
      %v6499 = vadd.f32 %v6467, %v1798
      %v6500 = vadd.f32 %v6468, %v1798
      %v6501 = vadd.f32 %v6469, %v1798
      %v6502 = vadd.f32 %v6470, %v1798
      %v6503 = vadd.f32 %v6471, %v1798
      %v6504 = vadd.f32 %v6472, %v1798
      %v6505 = vadd.f32 %v6473, %v1798
      %v6506 = vadd.f32 %v6474, %v1798
      %v6507 = vadd.f32 %v6475, %v1798
      %v6508 = vadd.f32 %v6476, %v1798
      %v6509 = vadd.f32 %v6477, %v1798
      %v6510 = vadd.f32 %v6478, %v1798
      %v6511 = vadd.f32 %v6479, %v1798
      %v6512 = vadd.f32 %v6480, %v1798
      %v6513 = vadd.f32 %v6481, %v1798
      %v6514 = vadd.f32 %v6482, %v1798
      %s6515 = scalar_lea.vmem %s170, 768
      %6516 = vst.msk [vmem:[%s6515] sm:$0xff] %vm264, %v6483
      %6517 = vst.msk [vmem:[%s6515 + $0x8] sm:$0xff] %vm264, %v6484
      %6518 = vst.msk [vmem:[%s6515 + $0x10] sm:$0xff] %vm264, %v6485
      %6519 = vst.msk [vmem:[%s6515 + $0x18] sm:$0xff] %vm264, %v6486
      %6520 = vst.msk [vmem:[%s6515 + $0x20] sm:$0xff] %vm264, %v6487
      %6521 = vst.msk [vmem:[%s6515 + $0x28] sm:$0xff] %vm264, %v6488
      %6522 = vst.msk [vmem:[%s6515 + $0x30] sm:$0xff] %vm264, %v6489
      %6523 = vst.msk [vmem:[%s6515 + $0x38] sm:$0xff] %vm264, %v6490
      %6524 = vst.msk [vmem:[%s6515 + $0x40] sm:$0xff] %vm264, %v6491
      %6525 = vst.msk [vmem:[%s6515 + $0x48] sm:$0xff] %vm264, %v6492
      %6526 = vst.msk [vmem:[%s6515 + $0x50] sm:$0xff] %vm264, %v6493
      %6527 = vst.msk [vmem:[%s6515 + $0x58] sm:$0xff] %vm264, %v6494
      %6528 = vst.msk [vmem:[%s6515 + $0x60] sm:$0xff] %vm264, %v6495
      %6529 = vst.msk [vmem:[%s6515 + $0x68] sm:$0xff] %vm264, %v6496
      %6530 = vst.msk [vmem:[%s6515 + $0x70] sm:$0xff] %vm264, %v6497
      %6531 = vst.msk [vmem:[%s6515 + $0x78] sm:$0xff] %vm264, %v6498
      %6532 = vst.msk [vmem:[%s6515 + $0x80] sm:$0xff] %vm264, %v6499
      %6533 = vst.msk [vmem:[%s6515 + $0x88] sm:$0xff] %vm264, %v6500
      %6534 = vst.msk [vmem:[%s6515 + $0x90] sm:$0xff] %vm264, %v6501
      %6535 = vst.msk [vmem:[%s6515 + $0x98] sm:$0xff] %vm264, %v6502
      %6536 = vst.msk [vmem:[%s6515 + $0xa0] sm:$0xff] %vm264, %v6503
      %6537 = vst.msk [vmem:[%s6515 + $0xa8] sm:$0xff] %vm264, %v6504
      %6538 = vst.msk [vmem:[%s6515 + $0xb0] sm:$0xff] %vm264, %v6505
      %6539 = vst.msk [vmem:[%s6515 + $0xb8] sm:$0xff] %vm264, %v6506
      %6540 = vst.msk [vmem:[%s6515 + $0xc0] sm:$0xff] %vm264, %v6507
      %6541 = vst.msk [vmem:[%s6515 + $0xc8] sm:$0xff] %vm264, %v6508
      %6542 = vst.msk [vmem:[%s6515 + $0xd0] sm:$0xff] %vm264, %v6509
      %6543 = vst.msk [vmem:[%s6515 + $0xd8] sm:$0xff] %vm264, %v6510
      %6544 = vst.msk [vmem:[%s6515 + $0xe0] sm:$0xff] %vm264, %v6511
      %6545 = vst.msk [vmem:[%s6515 + $0xe8] sm:$0xff] %vm264, %v6512
      %6546 = vst.msk [vmem:[%s6515 + $0xf0] sm:$0xff] %vm264, %v6513
      %6547 = vst.msk [vmem:[%s6515 + $0xf8] sm:$0xff] %vm264, %v6514
      %p6548 = scmp.lt.s32.totalorder %s14, 1
      %s6549 = scalar_select %p6548, %s14, 1
      %s6550 = smul.addr %s6549, 128
      %s6551 = smul.addr %s6550, 8
      %s6552 = scalar_lea.vmem %s3, %s6551
      // Predicated region
      $region37: #{tpu_custom_call.1} parent=31 // pred_check
        %p6553 = pneg %p100
      $region38: #{tpu_custom_call.1} parent=31 // pred_check_branch
        %6555 = sbr.rel (%p6553) target = $region40
      $region39: #{tpu_custom_call.1} parent=31 // pred_region
        _
      $region40: #{tpu_custom_call.1} parent=31 // pred_fallthru
        _
    $region32: #{tpu_custom_call.1} parent=5 // pred_fallthru
      _
    %p6556 = scmp.le.s32.totalorder 2, %s9
    // Predicated region
    $region41: #{tpu_custom_call.1} parent=5 // pred_check
      %p6557 = pneg %p6556
    $region42: #{tpu_custom_call.1} parent=5 // pred_check_branch
      %6559 = sbr.rel (%p6557) target = $region44
    $region43: #{tpu_custom_call.1} parent=5 // pred_region
      %s6560 = ssub.s32 %s9, 2
      // Predicated region
      $region45: #{tpu_custom_call.1} parent=43 // pred_check
        %p6561 = pneg %p106
      $region46: #{tpu_custom_call.1} parent=43 // pred_check_branch
        %6563 = sbr.rel (%p6561) target = $region48
      $region47: #{tpu_custom_call.1} parent=43 // pred_region
        %p6564 = scmp.lt.s32.totalorder %s15, 1
        %s6565 = scalar_select %p6564, %s15, 1
        %s6566 = smul.addr %s6565, 128
        %s6567 = smul.addr %s6566, 8
        %s6568 = scalar_lea.vmem %s3, %s6567
      $region48: #{tpu_custom_call.1} parent=43 // pred_fallthru
        _
    $region44: #{tpu_custom_call.1} parent=5 // pred_fallthru
      _
  $region6: #{tpu_custom_call.1} parent=0 // loop_footer
    %s13 = sadd.s32 1, %s9
  $region7: #{tpu_custom_call.1} parent=0 // loop_footer_branch
    %8 = sbr.rel target = $region3
  $region8: #{tpu_custom_call.1} parent=0 // loop_exit
    _

</llo_original>
